<compile_context>
chip_gen: v7x
topology: tpu7x:2x2x1
jax: 0.10.0
libtpu: 0.0.40
codegen_flags: <defaults>
</compile_context>

<pallas_src>
import inspect

import jax
import jax.numpy as jnp
from jax.experimental import pallas as pl
from jax.experimental.pallas import tpu as pltpu

IN_DIM = 32 * 32 * 3  # 3072

# (in_features, out_features) for each of the 8 Linear layers,
# encoder (4 layers) then decoder (4 layers).
LAYER_DIMS = [
    (IN_DIM, 128), (128, 64), (64, 12), (12, 3),      # encoder
    (3, 12), (12, 64), (64, 128), (128, IN_DIM),      # decoder
]

RELU_LAYERS = (0, 1, 2, 4, 5, 6)   # nn.ReLU(True) follows these Linear layers
TANH_LAYER = 7                     # final nn.Tanh

# Pack the 8 bias vectors into one (1, BIAS_TOTAL) operand; each bias segment
# starts at a 128-aligned lane offset so in-kernel slices stay lane-aligned.
BIAS_OFFSETS = []
_off = 0
for (_fi, _fo) in LAYER_DIMS:
    BIAS_OFFSETS.append(_off)
    _off += ((_fo + 127) // 128) * 128
BIAS_TOTAL = _off  # 3968

LAYER7_CHUNK = 768  # 3072 / 4, multiple of 128 -> lane-dense unmasked stores


def _supports_single_buffering():
    """Explicit feature check for BlockSpec(pipeline_mode=pl.Buffered(1))."""
    if not hasattr(pl, "Buffered"):
        return False
    try:
        return "pipeline_mode" in inspect.signature(pl.BlockSpec).parameters
    except (TypeError, ValueError):
        return True


_HAS_BUFFERED = _supports_single_buffering()


def _vmem_capacity_bytes():
    """Physical per-core VMEM; conservative 64 MiB (v7x) if the query fails."""
    try:
        return int(pltpu.get_tpu_info().vmem_capacity_bytes)
    except Exception:  # hardware-info query only; never hides kernel bugs
        return 64 << 20


def autoencoder_kernel(x_ref, *refs):
    """refs = (w0, ..., w7, bias_packed, out_ref)."""
    out_ref = refs[-1]
    bias_ref = refs[-2]
    w_refs = refs[:8]

    h = x_ref[...].astype(jnp.float32)

    # Layers 0..6. (Layers 3/4 are 12->3 / 3->12; they under-fill the MXU but
    # sit well under the HBM bound, so no VPU special-casing is needed.)
    for li in range(7):
        w = w_refs[li][...]                                  # (in, out)
        out_dim = LAYER_DIMS[li][1]
        b = bias_ref[:, BIAS_OFFSETS[li]:BIAS_OFFSETS[li] + out_dim]  # (1, out)
        # bf16-weight path (v5e MXU): feed the matmul in bf16, accumulate f32.
        lhs = h if w.dtype == jnp.float32 else h.astype(w.dtype)
        h = jnp.dot(lhs, w, preferred_element_type=jnp.float32) + b
        if li in RELU_LAYERS:
            h = jnp.maximum(h, 0.0)
        # li == 3 (encoder output 12->3): no activation

    # Layer 7: 128 -> 3072, chunked along N so the live f32 temporary is
    # (tile_b, 768) instead of (tile_b, 3072); bias + tanh + cast + store per
    # chunk, directly into the 128-aligned output columns.
    w7 = w_refs[7]
    lhs7 = h if w7.dtype == jnp.float32 else h.astype(w7.dtype)
    b7_off = BIAS_OFFSETS[7]
    for c in range(0, LAYER_DIMS[7][1], LAYER7_CHUNK):
        wc = w7[:, c:c + LAYER7_CHUNK]
        bc = bias_ref[:, b7_off + c:b7_off + c + LAYER7_CHUNK]
        yc = jnp.dot(lhs7, wc, preferred_element_type=jnp.float32) + bc
        yc = jnp.tanh(yc)
        out_ref[:, c:c + LAYER7_CHUNK] = yc.astype(out_ref.dtype)


def init_params(key):
    """Deterministic PyTorch-style init: U(-1/sqrt(fan_in), 1/sqrt(fan_in))."""
    params = []
    for (fan_in, fan_out) in LAYER_DIMS:
        key, kw, kb = jax.random.split(key, 3)
        bound = 1.0 / jnp.sqrt(jnp.float32(fan_in))
        w = jax.random.uniform(kw, (fan_in, fan_out), jnp.float32, -bound, bound)
        b = jax.random.uniform(kb, (fan_out,), jnp.float32, -bound, bound)
        params.append((w, b))
    return params


def _weight_spec(shape):
    """Grid-invariant operand: single VMEM buffer when supported."""
    if _HAS_BUFFERED:
        return pl.BlockSpec(shape, lambda i: (0, 0), pipeline_mode=pl.Buffered(1))
    return pl.BlockSpec(shape, lambda i: (0, 0))


def fcn_autoencoder_forward(x, params, *, tile_b=None, io_dtype=None,
                            use_bf16_matmul=False, vmem_limit_bytes=None):
    """Forward pass of fcn_autoencoder. x: (B, 3072). Returns (B, 3072) in io_dtype."""
    B, D = x.shape
    assert D == IN_DIM

    io_dtype = jnp.dtype(x.dtype if io_dtype is None else io_dtype)
    x = x.astype(io_dtype)
    # bf16 packs 16 rows per sublane group; f32 packs 8.
    sub = 16 if io_dtype == jnp.dtype(jnp.bfloat16) else 8

    vmem_cap = _vmem_capacity_bytes()

    # tile_b default: bigger tiles on 128 MiB parts (v5e/v6e), 512 on v7x.
    if tile_b is None:
        tile_b = 1024 if vmem_cap >= (96 << 20) else 512
    tile_b = max(sub, (int(tile_b) + sub - 1) // sub * sub)
    tile_b = min(tile_b, max(sub, pl.cdiv(B, sub) * sub))
    # Keep >= 4 grid steps when the batch allows it: >= 2 per TensorCore on
    # v7x megacore, so input/output DMAs overlap compute instead of
    # degenerating into pure prologue/epilogue.
    while tile_b > sub and pl.cdiv(B, tile_b) < 4:
        tile_b = max(sub, ((tile_b // 2) + sub - 1) // sub * sub)

    B_pad = pl.cdiv(B, tile_b) * tile_b
    if B_pad != B:
        x = jnp.pad(x, ((0, B_pad - B), (0, 0)))

    # Weights (optionally bf16 for v5e's bf16-only MXU; accumulation stays f32
    # inside the kernel) and the packed bias operand.
    flat_weights = []
    for (w, _b) in params:
        flat_weights.append(w.astype(jnp.bfloat16) if use_bf16_matmul else w)
    bias_packed = jnp.zeros((1, BIAS_TOTAL), jnp.float32)
    for li, (_w, b) in enumerate(params):
        off = BIAS_OFFSETS[li]
        bias_packed = bias_packed.at[0, off:off + b.shape[0]].set(
            b.astype(jnp.float32))

    if vmem_limit_bytes is None:
        io_bytes = tile_b * D * io_dtype.itemsize            # one x / out tile
        w_bytes = sum(int(w.size) * w.dtype.itemsize for w in flat_weights)
        w_bytes += BIAS_TOTAL * 4
        weight_bufs = 1 if _HAS_BUFFERED else 2
        # Kernel-internal temporaries: f32 copy of the input tile, the live
        # layer-7 output chunk, small hidden activations.
        temp_bytes = (tile_b * D * 4
                      + tile_b * LAYER7_CHUNK * 4
                      + tile_b * 256 * 4)
        budget = 2 * 2 * io_bytes + weight_bufs * w_bytes + temp_bytes + (4 << 20)
        # Never request more than ~80% of physical per-core VMEM.
        vmem_limit_bytes = int(min(budget, (vmem_cap * 4) // 5))
        vmem_limit_bytes = max(vmem_limit_bytes, 16 << 20)

    in_specs = [pl.BlockSpec((tile_b, D), lambda i: (i, 0))]
    in_specs += [_weight_spec(w.shape) for w in flat_weights]
    in_specs.append(_weight_spec((1, BIAS_TOTAL)))

    out = pl.pallas_call(
        autoencoder_kernel,
        out_shape=jax.ShapeDtypeStruct((B_pad, D), io_dtype),
        grid=(B_pad // tile_b,),
        in_specs=in_specs,
        out_specs=pl.BlockSpec((tile_b, D), lambda i: (i, 0)),
        compiler_params=pltpu.CompilerParams(
            dimension_semantics=("parallel",),
            vmem_limit_bytes=vmem_limit_bytes),
    )(x, *flat_weights, bias_packed)

    return out[:B]


def reference_forward(x, params):
    """Pure-JAX reference of the PyTorch forward pass."""
    h = x
    for li, (w, b) in enumerate(params):
        h = h @ w + b
        if li in RELU_LAYERS:
            h = jnp.maximum(h, 0.0)
        elif li == TANH_LAYER:
            h = jnp.tanh(h)
    return h


if __name__ == "__main__":
    key = jax.random.PRNGKey(0)
    kx, kp = jax.random.split(key)

    B = 2
    x = jax.random.normal(kx, (B, IN_DIM), dtype=jnp.float32)
    params = init_params(kp)

    # f32 activation I/O path (matches the PyTorch module bit-for-bit math-wise).
    y = fcn_autoencoder_forward(x, params)   # tile_b auto-clamps to 8 for B=2
    y = jax.block_until_ready(y)

    y_ref = reference_forward(x, params)
    assert y.shape == (B, IN_DIM)
    assert y.dtype == x.dtype
    assert jnp.allclose(y, y_ref, atol=1e-4, rtol=1e-4)

    # bf16 activation I/O path: halves the dominant HBM traffic (x/out tiles);
    # compute stays f32 inside the kernel. Loose check only (bf16 rounding).
    y_bf16 = fcn_autoencoder_forward(x, params, io_dtype=jnp.bfloat16)
    y_bf16 = jax.block_until_ready(y_bf16)
    assert y_bf16.shape == (B, IN_DIM)
    assert float(jnp.max(jnp.abs(y_bf16.astype(jnp.float32) - y_ref))) < 0.1

    print("KERNEL_OK")
</pallas_src>

<mosaic_0001>
module attributes {stable_mosaic.version = 11 : i64} {
  func.func @autoencoder_kernel(%arg0: i32, %arg1: memref<8x3072xf32, #tpu.memory_space<vmem>>, %arg2: memref<3072x128xf32, #tpu.memory_space<vmem>>, %arg3: memref<128x64xf32, #tpu.memory_space<vmem>>, %arg4: memref<64x12xf32, #tpu.memory_space<vmem>>, %arg5: memref<12x3xf32, #tpu.memory_space<vmem>>, %arg6: memref<3x12xf32, #tpu.memory_space<vmem>>, %arg7: memref<12x64xf32, #tpu.memory_space<vmem>>, %arg8: memref<64x128xf32, #tpu.memory_space<vmem>>, %arg9: memref<128x3072xf32, #tpu.memory_space<vmem>>, %arg10: memref<1x3968xf32, #tpu.memory_space<vmem>>, %arg11: memref<8x3072xf32, #tpu.memory_space<vmem>>) attributes {dimension_semantics = [#tpu.dimension_semantics<parallel>], iteration_bounds = array<i64: 1>, scalar_prefetch = 0 : i64, scratch_operands = 0 : i64, tpu.core_type = #tpu.core_type<tc>, window_params = [{transform_indices = @transform_0, window_bounds = array<i64: 8, 3072>}, {pipeline_mode = #tpu.pipeline_mode<synchronous>, transform_indices = @transform_1, window_bounds = array<i64: 3072, 128>}, {pipeline_mode = #tpu.pipeline_mode<synchronous>, transform_indices = @transform_2, window_bounds = array<i64: 128, 64>}, {pipeline_mode = #tpu.pipeline_mode<synchronous>, transform_indices = @transform_3, window_bounds = array<i64: 64, 12>}, {pipeline_mode = #tpu.pipeline_mode<synchronous>, transform_indices = @transform_4, window_bounds = array<i64: 12, 3>}, {pipeline_mode = #tpu.pipeline_mode<synchronous>, transform_indices = @transform_5, window_bounds = array<i64: 3, 12>}, {pipeline_mode = #tpu.pipeline_mode<synchronous>, transform_indices = @transform_6, window_bounds = array<i64: 12, 64>}, {pipeline_mode = #tpu.pipeline_mode<synchronous>, transform_indices = @transform_7, window_bounds = array<i64: 64, 128>}, {pipeline_mode = #tpu.pipeline_mode<synchronous>, transform_indices = @transform_8, window_bounds = array<i64: 128, 3072>}, {pipeline_mode = #tpu.pipeline_mode<synchronous>, transform_indices = @transform_9, window_bounds = array<i64: 1, 3968>}, {transform_indices = @transform_10, window_bounds = array<i64: 8, 3072>}]} {
    %c0 = arith.constant 0 : index
    %c0_0 = arith.constant 0 : index
    %0 = vector.load %arg1[%c0, %c0_0] : memref<8x3072xf32, #tpu.memory_space<vmem>>, vector<8x3072xf32>
    %c0_1 = arith.constant 0 : index
    %c0_2 = arith.constant 0 : index
    %1 = vector.load %arg2[%c0_1, %c0_2] : memref<3072x128xf32, #tpu.memory_space<vmem>>, vector<3072x128xf32>
    %c0_3 = arith.constant 0 : index
    %c0_4 = arith.constant 0 : index
    %2 = vector.load %arg10[%c0_3, %c0_4] : memref<1x3968xf32, #tpu.memory_space<vmem>>, vector<1x128xf32>
    %cst = arith.constant dense<0.000000e+00> : vector<8x128xf32>
    %3 = tpu.matmul %0, %1, %cst {dimension_numbers = #tpu.dot_dimension_numbers<[1], [0], [0], [1], [0, 0, 1, 1], [], []>} : vector<8x3072xf32>, vector<3072x128xf32>, vector<8x128xf32> -> vector<8x128xf32>
    %4 = vector.broadcast %2 : vector<1x128xf32> to vector<8x128xf32>
    %5 = arith.addf %3, %4 : vector<8x128xf32>
    %cst_5 = arith.constant 0.000000e+00 : f32
    %6 = vector.broadcast %cst_5 : f32 to vector<8x128xf32>
    %7 = arith.maximumf %5, %6 : vector<8x128xf32>
    %c0_6 = arith.constant 0 : index
    %c0_7 = arith.constant 0 : index
    %8 = vector.load %arg3[%c0_6, %c0_7] : memref<128x64xf32, #tpu.memory_space<vmem>>, vector<128x64xf32>
    %c0_8 = arith.constant 0 : index
    %c128 = arith.constant 128 : index
    %9 = vector.load %arg10[%c0_8, %c128] : memref<1x3968xf32, #tpu.memory_space<vmem>>, vector<1x64xf32>
    %cst_9 = arith.constant dense<0.000000e+00> : vector<8x64xf32>
    %10 = tpu.matmul %7, %8, %cst_9 {dimension_numbers = #tpu.dot_dimension_numbers<[1], [0], [0], [1], [0, 0, 1, 1], [], []>} : vector<8x128xf32>, vector<128x64xf32>, vector<8x64xf32> -> vector<8x64xf32>
    %11 = vector.broadcast %9 : vector<1x64xf32> to vector<8x64xf32>
    %12 = arith.addf %10, %11 : vector<8x64xf32>
    %cst_10 = arith.constant 0.000000e+00 : f32
    %13 = vector.broadcast %cst_10 : f32 to vector<8x64xf32>
    %14 = arith.maximumf %12, %13 : vector<8x64xf32>
    %c0_11 = arith.constant 0 : index
    %c0_12 = arith.constant 0 : index
    %15 = vector.load %arg4[%c0_11, %c0_12] : memref<64x12xf32, #tpu.memory_space<vmem>>, vector<64x12xf32>
    %c0_13 = arith.constant 0 : index
    %c256 = arith.constant 256 : index
    %16 = vector.load %arg10[%c0_13, %c256] : memref<1x3968xf32, #tpu.memory_space<vmem>>, vector<1x12xf32>
    %cst_14 = arith.constant dense<0.000000e+00> : vector<8x12xf32>
    %17 = tpu.matmul %14, %15, %cst_14 {dimension_numbers = #tpu.dot_dimension_numbers<[1], [0], [0], [1], [0, 0, 1, 1], [], []>} : vector<8x64xf32>, vector<64x12xf32>, vector<8x12xf32> -> vector<8x12xf32>
    %18 = vector.broadcast %16 : vector<1x12xf32> to vector<8x12xf32>
    %19 = arith.addf %17, %18 : vector<8x12xf32>
    %cst_15 = arith.constant 0.000000e+00 : f32
    %20 = vector.broadcast %cst_15 : f32 to vector<8x12xf32>
    %21 = arith.maximumf %19, %20 : vector<8x12xf32>
    %c0_16 = arith.constant 0 : index
    %c0_17 = arith.constant 0 : index
    %22 = vector.load %arg5[%c0_16, %c0_17] : memref<12x3xf32, #tpu.memory_space<vmem>>, vector<12x3xf32>
    %c0_18 = arith.constant 0 : index
    %c384 = arith.constant 384 : index
    %23 = vector.load %arg10[%c0_18, %c384] : memref<1x3968xf32, #tpu.memory_space<vmem>>, vector<1x3xf32>
    %cst_19 = arith.constant dense<0.000000e+00> : vector<8x3xf32>
    %24 = tpu.matmul %21, %22, %cst_19 {dimension_numbers = #tpu.dot_dimension_numbers<[1], [0], [0], [1], [0, 0, 1, 1], [], []>} : vector<8x12xf32>, vector<12x3xf32>, vector<8x3xf32> -> vector<8x3xf32>
    %25 = vector.broadcast %23 : vector<1x3xf32> to vector<8x3xf32>
    %26 = arith.addf %24, %25 : vector<8x3xf32>
    %c0_20 = arith.constant 0 : index
    %c0_21 = arith.constant 0 : index
    %27 = vector.load %arg6[%c0_20, %c0_21] : memref<3x12xf32, #tpu.memory_space<vmem>>, vector<3x12xf32>
    %c0_22 = arith.constant 0 : index
    %c512 = arith.constant 512 : index
    %28 = vector.load %arg10[%c0_22, %c512] : memref<1x3968xf32, #tpu.memory_space<vmem>>, vector<1x12xf32>
    %cst_23 = arith.constant dense<0.000000e+00> : vector<8x12xf32>
    %29 = tpu.matmul %26, %27, %cst_23 {dimension_numbers = #tpu.dot_dimension_numbers<[1], [0], [0], [1], [0, 0, 1, 1], [], []>} : vector<8x3xf32>, vector<3x12xf32>, vector<8x12xf32> -> vector<8x12xf32>
    %30 = vector.broadcast %28 : vector<1x12xf32> to vector<8x12xf32>
    %31 = arith.addf %29, %30 : vector<8x12xf32>
    %cst_24 = arith.constant 0.000000e+00 : f32
    %32 = vector.broadcast %cst_24 : f32 to vector<8x12xf32>
    %33 = arith.maximumf %31, %32 : vector<8x12xf32>
    %c0_25 = arith.constant 0 : index
    %c0_26 = arith.constant 0 : index
    %34 = vector.load %arg7[%c0_25, %c0_26] : memref<12x64xf32, #tpu.memory_space<vmem>>, vector<12x64xf32>
    %c0_27 = arith.constant 0 : index
    %c640 = arith.constant 640 : index
    %35 = vector.load %arg10[%c0_27, %c640] : memref<1x3968xf32, #tpu.memory_space<vmem>>, vector<1x64xf32>
    %cst_28 = arith.constant dense<0.000000e+00> : vector<8x64xf32>
    %36 = tpu.matmul %33, %34, %cst_28 {dimension_numbers = #tpu.dot_dimension_numbers<[1], [0], [0], [1], [0, 0, 1, 1], [], []>} : vector<8x12xf32>, vector<12x64xf32>, vector<8x64xf32> -> vector<8x64xf32>
    %37 = vector.broadcast %35 : vector<1x64xf32> to vector<8x64xf32>
    %38 = arith.addf %36, %37 : vector<8x64xf32>
    %cst_29 = arith.constant 0.000000e+00 : f32
    %39 = vector.broadcast %cst_29 : f32 to vector<8x64xf32>
    %40 = arith.maximumf %38, %39 : vector<8x64xf32>
    %c0_30 = arith.constant 0 : index
    %c0_31 = arith.constant 0 : index
    %41 = vector.load %arg8[%c0_30, %c0_31] : memref<64x128xf32, #tpu.memory_space<vmem>>, vector<64x128xf32>
    %c0_32 = arith.constant 0 : index
    %c768 = arith.constant 768 : index
    %42 = vector.load %arg10[%c0_32, %c768] : memref<1x3968xf32, #tpu.memory_space<vmem>>, vector<1x128xf32>
    %cst_33 = arith.constant dense<0.000000e+00> : vector<8x128xf32>
    %43 = tpu.matmul %40, %41, %cst_33 {dimension_numbers = #tpu.dot_dimension_numbers<[1], [0], [0], [1], [0, 0, 1, 1], [], []>} : vector<8x64xf32>, vector<64x128xf32>, vector<8x128xf32> -> vector<8x128xf32>
    %44 = vector.broadcast %42 : vector<1x128xf32> to vector<8x128xf32>
    %45 = arith.addf %43, %44 : vector<8x128xf32>
    %cst_34 = arith.constant 0.000000e+00 : f32
    %46 = vector.broadcast %cst_34 : f32 to vector<8x128xf32>
    %47 = arith.maximumf %45, %46 : vector<8x128xf32>
    %c0_35 = arith.constant 0 : index
    %c0_36 = arith.constant 0 : index
    %48 = vector.load %arg9[%c0_35, %c0_36] : memref<128x3072xf32, #tpu.memory_space<vmem>>, vector<128x768xf32>
    %c0_37 = arith.constant 0 : index
    %c896 = arith.constant 896 : index
    %49 = vector.load %arg10[%c0_37, %c896] : memref<1x3968xf32, #tpu.memory_space<vmem>>, vector<1x768xf32>
    %cst_38 = arith.constant dense<0.000000e+00> : vector<8x768xf32>
    %50 = tpu.matmul %47, %48, %cst_38 {dimension_numbers = #tpu.dot_dimension_numbers<[1], [0], [0], [1], [0, 0, 1, 1], [], []>} : vector<8x128xf32>, vector<128x768xf32>, vector<8x768xf32> -> vector<8x768xf32>
    %51 = vector.broadcast %49 : vector<1x768xf32> to vector<8x768xf32>
    %52 = arith.addf %50, %51 : vector<8x768xf32>
    %53 = math.tanh %52 : vector<8x768xf32>
    %c0_39 = arith.constant 0 : index
    %c0_40 = arith.constant 0 : index
    %54 = vector.load %arg11[%c0_39, %c0_40] : memref<8x3072xf32, #tpu.memory_space<vmem>>, vector<8x768xf32>
    tpu.vector_store %arg11[%c0_39, %c0_40], %53 {strides = array<i32>} : memref<8x3072xf32, #tpu.memory_space<vmem>>, vector<8x768xf32>,
    %c0_41 = arith.constant 0 : index
    %c768_42 = arith.constant 768 : index
    %55 = vector.load %arg9[%c0_41, %c768_42] : memref<128x3072xf32, #tpu.memory_space<vmem>>, vector<128x768xf32>
    %c0_43 = arith.constant 0 : index
    %c1664 = arith.constant 1664 : index
    %56 = vector.load %arg10[%c0_43, %c1664] : memref<1x3968xf32, #tpu.memory_space<vmem>>, vector<1x768xf32>
    %cst_44 = arith.constant dense<0.000000e+00> : vector<8x768xf32>
    %57 = tpu.matmul %47, %55, %cst_44 {dimension_numbers = #tpu.dot_dimension_numbers<[1], [0], [0], [1], [0, 0, 1, 1], [], []>} : vector<8x128xf32>, vector<128x768xf32>, vector<8x768xf32> -> vector<8x768xf32>
    %58 = vector.broadcast %56 : vector<1x768xf32> to vector<8x768xf32>
    %59 = arith.addf %57, %58 : vector<8x768xf32>
    %60 = math.tanh %59 : vector<8x768xf32>
    %c0_45 = arith.constant 0 : index
    %c768_46 = arith.constant 768 : index
    %61 = vector.load %arg11[%c0_45, %c768_46] : memref<8x3072xf32, #tpu.memory_space<vmem>>, vector<8x768xf32>
    tpu.vector_store %arg11[%c0_45, %c768_46], %60 {strides = array<i32>} : memref<8x3072xf32, #tpu.memory_space<vmem>>, vector<8x768xf32>,
    %c0_47 = arith.constant 0 : index
    %c1536 = arith.constant 1536 : index
    %62 = vector.load %arg9[%c0_47, %c1536] : memref<128x3072xf32, #tpu.memory_space<vmem>>, vector<128x768xf32>
    %c0_48 = arith.constant 0 : index
    %c2432 = arith.constant 2432 : index
    %63 = vector.load %arg10[%c0_48, %c2432] : memref<1x3968xf32, #tpu.memory_space<vmem>>, vector<1x768xf32>
    %cst_49 = arith.constant dense<0.000000e+00> : vector<8x768xf32>
    %64 = tpu.matmul %47, %62, %cst_49 {dimension_numbers = #tpu.dot_dimension_numbers<[1], [0], [0], [1], [0, 0, 1, 1], [], []>} : vector<8x128xf32>, vector<128x768xf32>, vector<8x768xf32> -> vector<8x768xf32>
    %65 = vector.broadcast %63 : vector<1x768xf32> to vector<8x768xf32>
    %66 = arith.addf %64, %65 : vector<8x768xf32>
    %67 = math.tanh %66 : vector<8x768xf32>
    %c0_50 = arith.constant 0 : index
    %c1536_51 = arith.constant 1536 : index
    %68 = vector.load %arg11[%c0_50, %c1536_51] : memref<8x3072xf32, #tpu.memory_space<vmem>>, vector<8x768xf32>
    tpu.vector_store %arg11[%c0_50, %c1536_51], %67 {strides = array<i32>} : memref<8x3072xf32, #tpu.memory_space<vmem>>, vector<8x768xf32>,
    %c0_52 = arith.constant 0 : index
    %c2304 = arith.constant 2304 : index
    %69 = vector.load %arg9[%c0_52, %c2304] : memref<128x3072xf32, #tpu.memory_space<vmem>>, vector<128x768xf32>
    %c0_53 = arith.constant 0 : index
    %c3200 = arith.constant 3200 : index
    %70 = vector.load %arg10[%c0_53, %c3200] : memref<1x3968xf32, #tpu.memory_space<vmem>>, vector<1x768xf32>
    %cst_54 = arith.constant dense<0.000000e+00> : vector<8x768xf32>
    %71 = tpu.matmul %47, %69, %cst_54 {dimension_numbers = #tpu.dot_dimension_numbers<[1], [0], [0], [1], [0, 0, 1, 1], [], []>} : vector<8x128xf32>, vector<128x768xf32>, vector<8x768xf32> -> vector<8x768xf32>
    %72 = vector.broadcast %70 : vector<1x768xf32> to vector<8x768xf32>
    %73 = arith.addf %71, %72 : vector<8x768xf32>
    %74 = math.tanh %73 : vector<8x768xf32>
    %c0_55 = arith.constant 0 : index
    %c2304_56 = arith.constant 2304 : index
    %75 = vector.load %arg11[%c0_55, %c2304_56] : memref<8x3072xf32, #tpu.memory_space<vmem>>, vector<8x768xf32>
    tpu.vector_store %arg11[%c0_55, %c2304_56], %74 {strides = array<i32>} : memref<8x3072xf32, #tpu.memory_space<vmem>>, vector<8x768xf32>,
    return
  }
  func.func @transform_0(%arg0: i32) -> (i32, i32) {
    %c0_i32 = arith.constant 0 : i32
    %c0_i32_0 = arith.constant 0 : i32
    return %arg0, %c0_i32 : i32, i32
  }
  func.func @transform_1(%arg0: i32) -> (i32, i32) {
    %c0_i32 = arith.constant 0 : i32
    %c0_i32_0 = arith.constant 0 : i32
    %c0_i32_1 = arith.constant 0 : i32
    return %c0_i32, %c0_i32_0 : i32, i32
  }
  func.func @transform_2(%arg0: i32) -> (i32, i32) {
    %c0_i32 = arith.constant 0 : i32
    %c0_i32_0 = arith.constant 0 : i32
    %c0_i32_1 = arith.constant 0 : i32
    return %c0_i32, %c0_i32_0 : i32, i32
  }
  func.func @transform_3(%arg0: i32) -> (i32, i32) {
    %c0_i32 = arith.constant 0 : i32
    %c0_i32_0 = arith.constant 0 : i32
    %c0_i32_1 = arith.constant 0 : i32
    return %c0_i32, %c0_i32_0 : i32, i32
  }
  func.func @transform_4(%arg0: i32) -> (i32, i32) {
    %c0_i32 = arith.constant 0 : i32
    %c0_i32_0 = arith.constant 0 : i32
    %c0_i32_1 = arith.constant 0 : i32
    return %c0_i32, %c0_i32_0 : i32, i32
  }
  func.func @transform_5(%arg0: i32) -> (i32, i32) {
    %c0_i32 = arith.constant 0 : i32
    %c0_i32_0 = arith.constant 0 : i32
    %c0_i32_1 = arith.constant 0 : i32
    return %c0_i32, %c0_i32_0 : i32, i32
  }
  func.func @transform_6(%arg0: i32) -> (i32, i32) {
    %c0_i32 = arith.constant 0 : i32
    %c0_i32_0 = arith.constant 0 : i32
    %c0_i32_1 = arith.constant 0 : i32
    return %c0_i32, %c0_i32_0 : i32, i32
  }
  func.func @transform_7(%arg0: i32) -> (i32, i32) {
    %c0_i32 = arith.constant 0 : i32
    %c0_i32_0 = arith.constant 0 : i32
    %c0_i32_1 = arith.constant 0 : i32
    return %c0_i32, %c0_i32_0 : i32, i32
  }
  func.func @transform_8(%arg0: i32) -> (i32, i32) {
    %c0_i32 = arith.constant 0 : i32
    %c0_i32_0 = arith.constant 0 : i32
    %c0_i32_1 = arith.constant 0 : i32
    return %c0_i32, %c0_i32_0 : i32, i32
  }
  func.func @transform_9(%arg0: i32) -> (i32, i32) {
    %c0_i32 = arith.constant 0 : i32
    %c0_i32_0 = arith.constant 0 : i32
    %c0_i32_1 = arith.constant 0 : i32
    return %c0_i32, %c0_i32_0 : i32, i32
  }
  func.func @transform_10(%arg0: i32) -> (i32, i32) {
    %c0_i32 = arith.constant 0 : i32
    %c0_i32_0 = arith.constant 0 : i32
    return %arg0, %c0_i32 : i32, i32
  }
}

</mosaic_0001>

<llo_original>
// kernel: tpu_custom_call.1
$region0: #{tpu_custom_call.1}
  #allocation0 [shape = 'u32[]', space=smem, size = 0x4, offset = 0x4, fixed_abs, tag = 'smem constant byte address 0x4 - core index']
  #allocation1 [shape = 'u32[144,128]{1,0:T(1,128)}', space=vmem, size = 0x12000, scoped, tag = 'internal scratch']
  %s0 = inlined_call_operand.hbm [shape: f32[8,3072], index: 0, kind: input, shape index: {}]
  %s1 = inlined_call_operand.hbm [shape: f32[3072,128], index: 1, kind: input, shape index: {}]
  %s2 = inlined_call_operand.vmem [shape: f32[128,64], index: 2, kind: input, shape index: {}]
  %s3 = inlined_call_operand.vmem [shape: f32[64,12], index: 3, kind: input, shape index: {}]
  %s4 = inlined_call_operand.vmem [shape: f32[12,3], index: 4, kind: input, shape index: {}]
  %s5 = inlined_call_operand.hbm [shape: f32[3,12], index: 5, kind: input, shape index: {}]
  %s6 = inlined_call_operand.hbm [shape: f32[12,64], index: 6, kind: input, shape index: {}]
  %s7 = inlined_call_operand.hbm [shape: f32[64,128], index: 7, kind: input, shape index: {}]
  %s8 = inlined_call_operand.hbm [shape: f32[128,3072], index: 8, kind: input, shape index: {}]
  %s9 = inlined_call_operand.hbm [shape: f32[1,3968], index: 9, kind: input, shape index: {}]
  %s10 = inlined_call_operand.hbm [shape: f32[8,3072], index: 10, kind: output, shape index: {}]
  %s11 = sld [smem:[#allocation0]]
  $region78: #{tpu_custom_call.1} parent=0
    _
  %s13 = ssub.s32 1, %s11
  %s14 = scalar_select 0, %s13, %s11
  $region1: #{tpu_custom_call.1} parent=0
    #allocation2 [shape = 'u8[98304]{0}', space=vmem, size = 0x18000, scoped, tag = 'input window, operand 0, single buffered']
    #allocation3 [shape = 's32[1]{0}', space=sflag, size = 0x4, scoped, tag = 'scoped memory for tpu_custom_call.1']
    #allocation4 [shape = 's32[1]{0}', space=sflag, size = 0x4, scoped, tag = 'scoped memory for tpu_custom_call.1']
    #allocation5 [shape = 'u8[1572864]{0}', space=vmem, size = 0x180000, scoped, tag = 'input window, operand 1, single buffered']
    #allocation6 [shape = 's32[1]{0}', space=sflag, size = 0x4, scoped, tag = 'scoped memory for tpu_custom_call.1']
    #allocation7 [shape = 'u8[2048]{0}', space=vmem, size = 0x800, scoped, tag = 'input window, operand 5, single buffered']
    #allocation8 [shape = 'u8[8192]{0}', space=vmem, size = 0x2000, scoped, tag = 'input window, operand 6, single buffered']
    #allocation9 [shape = 's32[1]{0}', space=sflag, size = 0x4, scoped, tag = 'scoped memory for tpu_custom_call.1']
    #allocation10 [shape = 'u8[32768]{0}', space=vmem, size = 0x8000, scoped, tag = 'input window, operand 7, single buffered']
    #allocation11 [shape = 'u8[1572864]{0}', space=vmem, size = 0x180000, scoped, tag = 'input window, operand 8, single buffered']
    #allocation12 [shape = 's32[1]{0}', space=sflag, size = 0x4, scoped, tag = 'scoped memory for tpu_custom_call.1']
    #allocation13 [shape = 'u8[15872]{0}', space=vmem, size = 0x4000, scoped, tag = 'input window, operand 9, single buffered']
    #allocation14 [shape = 'u8[98304]{0}', space=vmem, size = 0x18000, scoped, tag = 'output window, operand 0, single buffered']
    %15 = vsyncpa [#allocation3], 0
    %16 = vsyncpa [#allocation6], 0
    %17 = vsyncpa [#allocation9], 0
    %18 = vsyncpa [#allocation12], 0
    %19 = vsyncpa [#allocation4], 0
    // Predicated region
    $region2: #{tpu_custom_call.1} parent=1 // pred_check
      _
    $region3: #{tpu_custom_call.1} parent=1 // pred_check_branch
      %21 = sbr.rel (0) target = $region5
    $region4: #{tpu_custom_call.1} parent=1 // pred_region
      %s23 = ssub.s32 3072, 3072
      %24 = vsyncadd [#allocation3], %s23
      %s26 = sshll.u32 [#allocation2], 4
      %s27 = int_to_ptr.vmem [resolvable:$true] %s26
      %29 = dma.hbm_to_vmem [thread:$0]  %s0, 3072, %s27, [#allocation3]
    $region5: #{tpu_custom_call.1} parent=1 // pred_fallthru
      _
    // Predicated region
    $region6: #{tpu_custom_call.1} parent=1 // pred_check
      _
    $region7: #{tpu_custom_call.1} parent=1 // pred_check_branch
      %31 = sbr.rel (0) target = $region9
    $region8: #{tpu_custom_call.1} parent=1 // pred_region
      %s33 = ssub.s32 49152, 49152
      %34 = vsyncadd [#allocation6], %s33
      %s35 = sshll.u32 [#allocation5], 4
      %s36 = int_to_ptr.vmem [resolvable:$true] %s35
      %41 = dma.hbm_to_vmem [thread:$0]  %s1, 49152, %s36, [#allocation6], 128, 128, 8
    $region9: #{tpu_custom_call.1} parent=1 // pred_fallthru
      _
    // Predicated region
    $region10: #{tpu_custom_call.1} parent=1 // pred_check
      _
    $region11: #{tpu_custom_call.1} parent=1 // pred_check_branch
      %43 = sbr.rel (0) target = $region13
    $region12: #{tpu_custom_call.1} parent=1 // pred_region
      _
    $region13: #{tpu_custom_call.1} parent=1 // pred_fallthru
      _
    // Predicated region
    $region14: #{tpu_custom_call.1} parent=1 // pred_check
      _
    $region15: #{tpu_custom_call.1} parent=1 // pred_check_branch
      %45 = sbr.rel (0) target = $region17
    $region16: #{tpu_custom_call.1} parent=1 // pred_region
      _
    $region17: #{tpu_custom_call.1} parent=1 // pred_fallthru
      _
    // Predicated region
    $region18: #{tpu_custom_call.1} parent=1 // pred_check
      _
    $region19: #{tpu_custom_call.1} parent=1 // pred_check_branch
      %47 = sbr.rel (0) target = $region21
    $region20: #{tpu_custom_call.1} parent=1 // pred_region
      _
    $region21: #{tpu_custom_call.1} parent=1 // pred_fallthru
      _
    // Predicated region
    $region22: #{tpu_custom_call.1} parent=1 // pred_check
      _
    $region23: #{tpu_custom_call.1} parent=1 // pred_check_branch
      %49 = sbr.rel (0) target = $region25
    $region24: #{tpu_custom_call.1} parent=1 // pred_region
      %s51 = ssub.s32 64, 64
      %52 = vsyncadd [#allocation6], %s51
      %s54 = sshll.u32 [#allocation7], 4
      %s55 = int_to_ptr.vmem [resolvable:$true] %s54
      %57 = dma.hbm_to_vmem [thread:$0]  %s5, 64, %s55, [#allocation6]
    $region25: #{tpu_custom_call.1} parent=1 // pred_fallthru
      _
    // Predicated region
    $region26: #{tpu_custom_call.1} parent=1 // pred_check
      _
    $region27: #{tpu_custom_call.1} parent=1 // pred_check_branch
      %59 = sbr.rel (0) target = $region29
    $region28: #{tpu_custom_call.1} parent=1 // pred_region
      %s61 = ssub.s32 256, 256
      %62 = vsyncadd [#allocation9], %s61
      %s63 = sshll.u32 [#allocation8], 4
      %s64 = int_to_ptr.vmem [resolvable:$true] %s63
      %69 = dma.hbm_to_vmem [thread:$0]  %s6, 256, %s64, [#allocation9], 128, 128, 8
    $region29: #{tpu_custom_call.1} parent=1 // pred_fallthru
      _
    // Predicated region
    $region30: #{tpu_custom_call.1} parent=1 // pred_check
      _
    $region31: #{tpu_custom_call.1} parent=1 // pred_check_branch
      %71 = sbr.rel (0) target = $region33
    $region32: #{tpu_custom_call.1} parent=1 // pred_region
      %s73 = ssub.s32 1024, 1024
      %74 = vsyncadd [#allocation9], %s73
      %s75 = sshll.u32 [#allocation10], 4
      %s76 = int_to_ptr.vmem [resolvable:$true] %s75
      %81 = dma.hbm_to_vmem [thread:$0]  %s7, 1024, %s76, [#allocation9], 128, 128, 8
    $region33: #{tpu_custom_call.1} parent=1 // pred_fallthru
      _
    // Predicated region
    $region34: #{tpu_custom_call.1} parent=1 // pred_check
      _
    $region35: #{tpu_custom_call.1} parent=1 // pred_check_branch
      %83 = sbr.rel (0) target = $region37
    $region36: #{tpu_custom_call.1} parent=1 // pred_region
      %s85 = ssub.s32 49152, 49152
      %86 = vsyncadd [#allocation12], %s85
      %s87 = sshll.u32 [#allocation11], 4
      %s88 = int_to_ptr.vmem [resolvable:$true] %s87
      %93 = dma.hbm_to_vmem [thread:$0]  %s8, 49152, %s88, [#allocation12], 3072, 3072, 192
    $region37: #{tpu_custom_call.1} parent=1 // pred_fallthru
      _
    // Predicated region
    $region38: #{tpu_custom_call.1} parent=1 // pred_check
      _
    $region39: #{tpu_custom_call.1} parent=1 // pred_check_branch
      %95 = sbr.rel (0) target = $region41
    $region40: #{tpu_custom_call.1} parent=1 // pred_region
      %s97 = ssub.s32 496, 496
      %98 = vsyncadd [#allocation12], %s97
      %s100 = sshll.u32 [#allocation13], 4
      %s101 = int_to_ptr.vmem [resolvable:$true] %s100
      %103 = dma.hbm_to_vmem [thread:$0]  %s9, 496, %s101, [#allocation12]
    $region41: #{tpu_custom_call.1} parent=1 // pred_fallthru
      _
    // Predicated region
    $region42: #{tpu_custom_call.1} parent=1 // pred_check
      _
    $region43: #{tpu_custom_call.1} parent=1 // pred_check_branch
      %105 = sbr.rel (0) target = $region45
    $region44: #{tpu_custom_call.1} parent=1 // pred_region
      %106 = dma.done [#allocation3], 3072
    $region45: #{tpu_custom_call.1} parent=1 // pred_fallthru
      _
    // Predicated region
    $region46: #{tpu_custom_call.1} parent=1 // pred_check
      _
    $region47: #{tpu_custom_call.1} parent=1 // pred_check_branch
      %108 = sbr.rel (0) target = $region49
    $region48: #{tpu_custom_call.1} parent=1 // pred_region
      %109 = dma.done [#allocation6], 49152
    $region49: #{tpu_custom_call.1} parent=1 // pred_fallthru
      _
    // Predicated region
    $region50: #{tpu_custom_call.1} parent=1 // pred_check
      _
    $region51: #{tpu_custom_call.1} parent=1 // pred_check_branch
      %111 = sbr.rel (0) target = $region53
    $region52: #{tpu_custom_call.1} parent=1 // pred_region
      %112 = dma.done [#allocation6], 64
    $region53: #{tpu_custom_call.1} parent=1 // pred_fallthru
      _
    // Predicated region
    $region54: #{tpu_custom_call.1} parent=1 // pred_check
      _
    $region55: #{tpu_custom_call.1} parent=1 // pred_check_branch
      %114 = sbr.rel (0) target = $region57
    $region56: #{tpu_custom_call.1} parent=1 // pred_region
      %115 = dma.done [#allocation9], 256
    $region57: #{tpu_custom_call.1} parent=1 // pred_fallthru
      _
    // Predicated region
    $region58: #{tpu_custom_call.1} parent=1 // pred_check
      _
    $region59: #{tpu_custom_call.1} parent=1 // pred_check_branch
      %117 = sbr.rel (0) target = $region61
    $region60: #{tpu_custom_call.1} parent=1 // pred_region
      %118 = dma.done [#allocation9], 1024
    $region61: #{tpu_custom_call.1} parent=1 // pred_fallthru
      _
    // Predicated region
    $region62: #{tpu_custom_call.1} parent=1 // pred_check
      _
    $region63: #{tpu_custom_call.1} parent=1 // pred_check_branch
      %120 = sbr.rel (0) target = $region65
    $region64: #{tpu_custom_call.1} parent=1 // pred_region
      %121 = dma.done [#allocation12], 49152
    $region65: #{tpu_custom_call.1} parent=1 // pred_fallthru
      _
    // Predicated region
    $region66: #{tpu_custom_call.1} parent=1 // pred_check
      _
    $region67: #{tpu_custom_call.1} parent=1 // pred_check_branch
      %123 = sbr.rel (0) target = $region69
    $region68: #{tpu_custom_call.1} parent=1 // pred_region
      %124 = dma.done [#allocation12], 496
    $region69: #{tpu_custom_call.1} parent=1 // pred_fallthru
      _
    %v125 = vld [vmem:[#allocation2] sm:$0xff]
    %v126 = vld [vmem:[#allocation2 + $0x8] sm:$0xff]
    %v127 = vld [vmem:[#allocation2 + $0x10] sm:$0xff]
    %v128 = vld [vmem:[#allocation2 + $0x18] sm:$0xff]
    %v129 = vld [vmem:[#allocation2 + $0x20] sm:$0xff]
    %v130 = vld [vmem:[#allocation2 + $0x28] sm:$0xff]
    %v131 = vld [vmem:[#allocation2 + $0x30] sm:$0xff]
    %v132 = vld [vmem:[#allocation2 + $0x38] sm:$0xff]
    %v133 = vld [vmem:[#allocation2 + $0x40] sm:$0xff]
    %v134 = vld [vmem:[#allocation2 + $0x48] sm:$0xff]
    %v135 = vld [vmem:[#allocation2 + $0x50] sm:$0xff]
    %v136 = vld [vmem:[#allocation2 + $0x58] sm:$0xff]
    %v137 = vld [vmem:[#allocation2 + $0x60] sm:$0xff]
    %v138 = vld [vmem:[#allocation2 + $0x68] sm:$0xff]
    %v139 = vld [vmem:[#allocation2 + $0x70] sm:$0xff]
    %v140 = vld [vmem:[#allocation2 + $0x78] sm:$0xff]
    %v141 = vld [vmem:[#allocation2 + $0x80] sm:$0xff]
    %v142 = vld [vmem:[#allocation2 + $0x88] sm:$0xff]
    %v143 = vld [vmem:[#allocation2 + $0x90] sm:$0xff]
    %v144 = vld [vmem:[#allocation2 + $0x98] sm:$0xff]
    %v145 = vld [vmem:[#allocation2 + $0xa0] sm:$0xff]
    %v146 = vld [vmem:[#allocation2 + $0xa8] sm:$0xff]
    %v147 = vld [vmem:[#allocation2 + $0xb0] sm:$0xff]
    %v148 = vld [vmem:[#allocation2 + $0xb8] sm:$0xff]
    %v149 = vld [vmem:[#allocation5] sm:$0xff]
    %v150 = vld [vmem:[#allocation5 + $0x8] sm:$0xff]
    %v151 = vld [vmem:[#allocation5 + $0x10] sm:$0xff]
    %v152 = vld [vmem:[#allocation5 + $0x18] sm:$0xff]
    %v153 = vld [vmem:[#allocation5 + $0x20] sm:$0xff]
    %v154 = vld [vmem:[#allocation5 + $0x28] sm:$0xff]
    %v155 = vld [vmem:[#allocation5 + $0x30] sm:$0xff]
    %v156 = vld [vmem:[#allocation5 + $0x38] sm:$0xff]
    %v157 = vld [vmem:[#allocation5 + $0x40] sm:$0xff]
    %v158 = vld [vmem:[#allocation5 + $0x48] sm:$0xff]
    %v159 = vld [vmem:[#allocation5 + $0x50] sm:$0xff]
    %v160 = vld [vmem:[#allocation5 + $0x58] sm:$0xff]
    %v161 = vld [vmem:[#allocation5 + $0x60] sm:$0xff]
    %v162 = vld [vmem:[#allocation5 + $0x68] sm:$0xff]
    %v163 = vld [vmem:[#allocation5 + $0x70] sm:$0xff]
    %v164 = vld [vmem:[#allocation5 + $0x78] sm:$0xff]
    %v165 = vld [vmem:[#allocation5 + $0x80] sm:$0xff]
    %v166 = vld [vmem:[#allocation5 + $0x88] sm:$0xff]
    %v167 = vld [vmem:[#allocation5 + $0x90] sm:$0xff]
    %v168 = vld [vmem:[#allocation5 + $0x98] sm:$0xff]
    %v169 = vld [vmem:[#allocation5 + $0xa0] sm:$0xff]
    %v170 = vld [vmem:[#allocation5 + $0xa8] sm:$0xff]
    %v171 = vld [vmem:[#allocation5 + $0xb0] sm:$0xff]
    %v172 = vld [vmem:[#allocation5 + $0xb8] sm:$0xff]
    %v173 = vld [vmem:[#allocation5 + $0xc0] sm:$0xff]
    %v174 = vld [vmem:[#allocation5 + $0xc8] sm:$0xff]
    %v175 = vld [vmem:[#allocation5 + $0xd0] sm:$0xff]
    %v176 = vld [vmem:[#allocation5 + $0xd8] sm:$0xff]
    %v177 = vld [vmem:[#allocation5 + $0xe0] sm:$0xff]
    %v178 = vld [vmem:[#allocation5 + $0xe8] sm:$0xff]
    %v179 = vld [vmem:[#allocation5 + $0xf0] sm:$0xff]
    %v180 = vld [vmem:[#allocation5 + $0xf8] sm:$0xff]
    %v181 = vld [vmem:[#allocation5 + $0x100] sm:$0xff]
    %v182 = vld [vmem:[#allocation5 + $0x108] sm:$0xff]
    %v183 = vld [vmem:[#allocation5 + $0x110] sm:$0xff]
    %v184 = vld [vmem:[#allocation5 + $0x118] sm:$0xff]
    %v185 = vld [vmem:[#allocation5 + $0x120] sm:$0xff]
    %v186 = vld [vmem:[#allocation5 + $0x128] sm:$0xff]
    %v187 = vld [vmem:[#allocation5 + $0x130] sm:$0xff]
    %v188 = vld [vmem:[#allocation5 + $0x138] sm:$0xff]
    %v189 = vld [vmem:[#allocation5 + $0x140] sm:$0xff]
    %v190 = vld [vmem:[#allocation5 + $0x148] sm:$0xff]
    %v191 = vld [vmem:[#allocation5 + $0x150] sm:$0xff]
    %v192 = vld [vmem:[#allocation5 + $0x158] sm:$0xff]
    %v193 = vld [vmem:[#allocation5 + $0x160] sm:$0xff]
    %v194 = vld [vmem:[#allocation5 + $0x168] sm:$0xff]
    %v195 = vld [vmem:[#allocation5 + $0x170] sm:$0xff]
    %v196 = vld [vmem:[#allocation5 + $0x178] sm:$0xff]
    %v197 = vld [vmem:[#allocation5 + $0x180] sm:$0xff]
    %v198 = vld [vmem:[#allocation5 + $0x188] sm:$0xff]
    %v199 = vld [vmem:[#allocation5 + $0x190] sm:$0xff]
    %v200 = vld [vmem:[#allocation5 + $0x198] sm:$0xff]
    %v201 = vld [vmem:[#allocation5 + $0x1a0] sm:$0xff]
    %v202 = vld [vmem:[#allocation5 + $0x1a8] sm:$0xff]
    %v203 = vld [vmem:[#allocation5 + $0x1b0] sm:$0xff]
    %v204 = vld [vmem:[#allocation5 + $0x1b8] sm:$0xff]
    %v205 = vld [vmem:[#allocation5 + $0x1c0] sm:$0xff]
    %v206 = vld [vmem:[#allocation5 + $0x1c8] sm:$0xff]
    %v207 = vld [vmem:[#allocation5 + $0x1d0] sm:$0xff]
    %v208 = vld [vmem:[#allocation5 + $0x1d8] sm:$0xff]
    %v209 = vld [vmem:[#allocation5 + $0x1e0] sm:$0xff]
    %v210 = vld [vmem:[#allocation5 + $0x1e8] sm:$0xff]
    %v211 = vld [vmem:[#allocation5 + $0x1f0] sm:$0xff]
    %v212 = vld [vmem:[#allocation5 + $0x1f8] sm:$0xff]
    %v213 = vld [vmem:[#allocation5 + $0x200] sm:$0xff]
    %v214 = vld [vmem:[#allocation5 + $0x208] sm:$0xff]
    %v215 = vld [vmem:[#allocation5 + $0x210] sm:$0xff]
    %v216 = vld [vmem:[#allocation5 + $0x218] sm:$0xff]
    %v217 = vld [vmem:[#allocation5 + $0x220] sm:$0xff]
    %v218 = vld [vmem:[#allocation5 + $0x228] sm:$0xff]
    %v219 = vld [vmem:[#allocation5 + $0x230] sm:$0xff]
    %v220 = vld [vmem:[#allocation5 + $0x238] sm:$0xff]
    %v221 = vld [vmem:[#allocation5 + $0x240] sm:$0xff]
    %v222 = vld [vmem:[#allocation5 + $0x248] sm:$0xff]
    %v223 = vld [vmem:[#allocation5 + $0x250] sm:$0xff]
    %v224 = vld [vmem:[#allocation5 + $0x258] sm:$0xff]
    %v225 = vld [vmem:[#allocation5 + $0x260] sm:$0xff]
    %v226 = vld [vmem:[#allocation5 + $0x268] sm:$0xff]
    %v227 = vld [vmem:[#allocation5 + $0x270] sm:$0xff]
    %v228 = vld [vmem:[#allocation5 + $0x278] sm:$0xff]
    %v229 = vld [vmem:[#allocation5 + $0x280] sm:$0xff]
    %v230 = vld [vmem:[#allocation5 + $0x288] sm:$0xff]
    %v231 = vld [vmem:[#allocation5 + $0x290] sm:$0xff]
    %v232 = vld [vmem:[#allocation5 + $0x298] sm:$0xff]
    %v233 = vld [vmem:[#allocation5 + $0x2a0] sm:$0xff]
    %v234 = vld [vmem:[#allocation5 + $0x2a8] sm:$0xff]
    %v235 = vld [vmem:[#allocation5 + $0x2b0] sm:$0xff]
    %v236 = vld [vmem:[#allocation5 + $0x2b8] sm:$0xff]
    %v237 = vld [vmem:[#allocation5 + $0x2c0] sm:$0xff]
    %v238 = vld [vmem:[#allocation5 + $0x2c8] sm:$0xff]
    %v239 = vld [vmem:[#allocation5 + $0x2d0] sm:$0xff]
    %v240 = vld [vmem:[#allocation5 + $0x2d8] sm:$0xff]
    %v241 = vld [vmem:[#allocation5 + $0x2e0] sm:$0xff]
    %v242 = vld [vmem:[#allocation5 + $0x2e8] sm:$0xff]
    %v243 = vld [vmem:[#allocation5 + $0x2f0] sm:$0xff]
    %v244 = vld [vmem:[#allocation5 + $0x2f8] sm:$0xff]
    %v245 = vld [vmem:[#allocation5 + $0x300] sm:$0xff]
    %v246 = vld [vmem:[#allocation5 + $0x308] sm:$0xff]
    %v247 = vld [vmem:[#allocation5 + $0x310] sm:$0xff]
    %v248 = vld [vmem:[#allocation5 + $0x318] sm:$0xff]
    %v249 = vld [vmem:[#allocation5 + $0x320] sm:$0xff]
    %v250 = vld [vmem:[#allocation5 + $0x328] sm:$0xff]
    %v251 = vld [vmem:[#allocation5 + $0x330] sm:$0xff]
    %v252 = vld [vmem:[#allocation5 + $0x338] sm:$0xff]
    %v253 = vld [vmem:[#allocation5 + $0x340] sm:$0xff]
    %v254 = vld [vmem:[#allocation5 + $0x348] sm:$0xff]
    %v255 = vld [vmem:[#allocation5 + $0x350] sm:$0xff]
    %v256 = vld [vmem:[#allocation5 + $0x358] sm:$0xff]
    %v257 = vld [vmem:[#allocation5 + $0x360] sm:$0xff]
    %v258 = vld [vmem:[#allocation5 + $0x368] sm:$0xff]
    %v259 = vld [vmem:[#allocation5 + $0x370] sm:$0xff]
    %v260 = vld [vmem:[#allocation5 + $0x378] sm:$0xff]
    %v261 = vld [vmem:[#allocation5 + $0x380] sm:$0xff]
    %v262 = vld [vmem:[#allocation5 + $0x388] sm:$0xff]
    %v263 = vld [vmem:[#allocation5 + $0x390] sm:$0xff]
    %v264 = vld [vmem:[#allocation5 + $0x398] sm:$0xff]
    %v265 = vld [vmem:[#allocation5 + $0x3a0] sm:$0xff]
    %v266 = vld [vmem:[#allocation5 + $0x3a8] sm:$0xff]
    %v267 = vld [vmem:[#allocation5 + $0x3b0] sm:$0xff]
    %v268 = vld [vmem:[#allocation5 + $0x3b8] sm:$0xff]
    %v269 = vld [vmem:[#allocation5 + $0x3c0] sm:$0xff]
    %v270 = vld [vmem:[#allocation5 + $0x3c8] sm:$0xff]
    %v271 = vld [vmem:[#allocation5 + $0x3d0] sm:$0xff]
    %v272 = vld [vmem:[#allocation5 + $0x3d8] sm:$0xff]
    %v273 = vld [vmem:[#allocation5 + $0x3e0] sm:$0xff]
    %v274 = vld [vmem:[#allocation5 + $0x3e8] sm:$0xff]
    %v275 = vld [vmem:[#allocation5 + $0x3f0] sm:$0xff]
    %v276 = vld [vmem:[#allocation5 + $0x3f8] sm:$0xff]
    %v277 = vld [vmem:[#allocation5 + $0x400] sm:$0xff]
    %v278 = vld [vmem:[#allocation5 + $0x408] sm:$0xff]
    %v279 = vld [vmem:[#allocation5 + $0x410] sm:$0xff]
    %v280 = vld [vmem:[#allocation5 + $0x418] sm:$0xff]
    %v281 = vld [vmem:[#allocation5 + $0x420] sm:$0xff]
    %v282 = vld [vmem:[#allocation5 + $0x428] sm:$0xff]
    %v283 = vld [vmem:[#allocation5 + $0x430] sm:$0xff]
    %v284 = vld [vmem:[#allocation5 + $0x438] sm:$0xff]
    %v285 = vld [vmem:[#allocation5 + $0x440] sm:$0xff]
    %v286 = vld [vmem:[#allocation5 + $0x448] sm:$0xff]
    %v287 = vld [vmem:[#allocation5 + $0x450] sm:$0xff]
    %v288 = vld [vmem:[#allocation5 + $0x458] sm:$0xff]
    %v289 = vld [vmem:[#allocation5 + $0x460] sm:$0xff]
    %v290 = vld [vmem:[#allocation5 + $0x468] sm:$0xff]
    %v291 = vld [vmem:[#allocation5 + $0x470] sm:$0xff]
    %v292 = vld [vmem:[#allocation5 + $0x478] sm:$0xff]
    %v293 = vld [vmem:[#allocation5 + $0x480] sm:$0xff]
    %v294 = vld [vmem:[#allocation5 + $0x488] sm:$0xff]
    %v295 = vld [vmem:[#allocation5 + $0x490] sm:$0xff]
    %v296 = vld [vmem:[#allocation5 + $0x498] sm:$0xff]
    %v297 = vld [vmem:[#allocation5 + $0x4a0] sm:$0xff]
    %v298 = vld [vmem:[#allocation5 + $0x4a8] sm:$0xff]
    %v299 = vld [vmem:[#allocation5 + $0x4b0] sm:$0xff]
    %v300 = vld [vmem:[#allocation5 + $0x4b8] sm:$0xff]
    %v301 = vld [vmem:[#allocation5 + $0x4c0] sm:$0xff]
    %v302 = vld [vmem:[#allocation5 + $0x4c8] sm:$0xff]
    %v303 = vld [vmem:[#allocation5 + $0x4d0] sm:$0xff]
    %v304 = vld [vmem:[#allocation5 + $0x4d8] sm:$0xff]
    %v305 = vld [vmem:[#allocation5 + $0x4e0] sm:$0xff]
    %v306 = vld [vmem:[#allocation5 + $0x4e8] sm:$0xff]
    %v307 = vld [vmem:[#allocation5 + $0x4f0] sm:$0xff]
    %v308 = vld [vmem:[#allocation5 + $0x4f8] sm:$0xff]
    %v309 = vld [vmem:[#allocation5 + $0x500] sm:$0xff]
    %v310 = vld [vmem:[#allocation5 + $0x508] sm:$0xff]
    %v311 = vld [vmem:[#allocation5 + $0x510] sm:$0xff]
    %v312 = vld [vmem:[#allocation5 + $0x518] sm:$0xff]
    %v313 = vld [vmem:[#allocation5 + $0x520] sm:$0xff]
    %v314 = vld [vmem:[#allocation5 + $0x528] sm:$0xff]
    %v315 = vld [vmem:[#allocation5 + $0x530] sm:$0xff]
    %v316 = vld [vmem:[#allocation5 + $0x538] sm:$0xff]
    %v317 = vld [vmem:[#allocation5 + $0x540] sm:$0xff]
    %v318 = vld [vmem:[#allocation5 + $0x548] sm:$0xff]
    %v319 = vld [vmem:[#allocation5 + $0x550] sm:$0xff]
    %v320 = vld [vmem:[#allocation5 + $0x558] sm:$0xff]
    %v321 = vld [vmem:[#allocation5 + $0x560] sm:$0xff]
    %v322 = vld [vmem:[#allocation5 + $0x568] sm:$0xff]
    %v323 = vld [vmem:[#allocation5 + $0x570] sm:$0xff]
    %v324 = vld [vmem:[#allocation5 + $0x578] sm:$0xff]
    %v325 = vld [vmem:[#allocation5 + $0x580] sm:$0xff]
    %v326 = vld [vmem:[#allocation5 + $0x588] sm:$0xff]
    %v327 = vld [vmem:[#allocation5 + $0x590] sm:$0xff]
    %v328 = vld [vmem:[#allocation5 + $0x598] sm:$0xff]
    %v329 = vld [vmem:[#allocation5 + $0x5a0] sm:$0xff]
    %v330 = vld [vmem:[#allocation5 + $0x5a8] sm:$0xff]
    %v331 = vld [vmem:[#allocation5 + $0x5b0] sm:$0xff]
    %v332 = vld [vmem:[#allocation5 + $0x5b8] sm:$0xff]
    %v333 = vld [vmem:[#allocation5 + $0x5c0] sm:$0xff]
    %v334 = vld [vmem:[#allocation5 + $0x5c8] sm:$0xff]
    %v335 = vld [vmem:[#allocation5 + $0x5d0] sm:$0xff]
    %v336 = vld [vmem:[#allocation5 + $0x5d8] sm:$0xff]
    %v337 = vld [vmem:[#allocation5 + $0x5e0] sm:$0xff]
    %v338 = vld [vmem:[#allocation5 + $0x5e8] sm:$0xff]
    %v339 = vld [vmem:[#allocation5 + $0x5f0] sm:$0xff]
    %v340 = vld [vmem:[#allocation5 + $0x5f8] sm:$0xff]
    %v341 = vld [vmem:[#allocation5 + $0x600] sm:$0xff]
    %v342 = vld [vmem:[#allocation5 + $0x608] sm:$0xff]
    %v343 = vld [vmem:[#allocation5 + $0x610] sm:$0xff]
    %v344 = vld [vmem:[#allocation5 + $0x618] sm:$0xff]
    %v345 = vld [vmem:[#allocation5 + $0x620] sm:$0xff]
    %v346 = vld [vmem:[#allocation5 + $0x628] sm:$0xff]
    %v347 = vld [vmem:[#allocation5 + $0x630] sm:$0xff]
    %v348 = vld [vmem:[#allocation5 + $0x638] sm:$0xff]
    %v349 = vld [vmem:[#allocation5 + $0x640] sm:$0xff]
    %v350 = vld [vmem:[#allocation5 + $0x648] sm:$0xff]
    %v351 = vld [vmem:[#allocation5 + $0x650] sm:$0xff]
    %v352 = vld [vmem:[#allocation5 + $0x658] sm:$0xff]
    %v353 = vld [vmem:[#allocation5 + $0x660] sm:$0xff]
    %v354 = vld [vmem:[#allocation5 + $0x668] sm:$0xff]
    %v355 = vld [vmem:[#allocation5 + $0x670] sm:$0xff]
    %v356 = vld [vmem:[#allocation5 + $0x678] sm:$0xff]
    %v357 = vld [vmem:[#allocation5 + $0x680] sm:$0xff]
    %v358 = vld [vmem:[#allocation5 + $0x688] sm:$0xff]
    %v359 = vld [vmem:[#allocation5 + $0x690] sm:$0xff]
    %v360 = vld [vmem:[#allocation5 + $0x698] sm:$0xff]
    %v361 = vld [vmem:[#allocation5 + $0x6a0] sm:$0xff]
    %v362 = vld [vmem:[#allocation5 + $0x6a8] sm:$0xff]
    %v363 = vld [vmem:[#allocation5 + $0x6b0] sm:$0xff]
    %v364 = vld [vmem:[#allocation5 + $0x6b8] sm:$0xff]
    %v365 = vld [vmem:[#allocation5 + $0x6c0] sm:$0xff]
    %v366 = vld [vmem:[#allocation5 + $0x6c8] sm:$0xff]
    %v367 = vld [vmem:[#allocation5 + $0x6d0] sm:$0xff]
    %v368 = vld [vmem:[#allocation5 + $0x6d8] sm:$0xff]
    %v369 = vld [vmem:[#allocation5 + $0x6e0] sm:$0xff]
    %v370 = vld [vmem:[#allocation5 + $0x6e8] sm:$0xff]
    %v371 = vld [vmem:[#allocation5 + $0x6f0] sm:$0xff]
    %v372 = vld [vmem:[#allocation5 + $0x6f8] sm:$0xff]
    %v373 = vld [vmem:[#allocation5 + $0x700] sm:$0xff]
    %v374 = vld [vmem:[#allocation5 + $0x708] sm:$0xff]
    %v375 = vld [vmem:[#allocation5 + $0x710] sm:$0xff]
    %v376 = vld [vmem:[#allocation5 + $0x718] sm:$0xff]
    %v377 = vld [vmem:[#allocation5 + $0x720] sm:$0xff]
    %v378 = vld [vmem:[#allocation5 + $0x728] sm:$0xff]
    %v379 = vld [vmem:[#allocation5 + $0x730] sm:$0xff]
    %v380 = vld [vmem:[#allocation5 + $0x738] sm:$0xff]
    %v381 = vld [vmem:[#allocation5 + $0x740] sm:$0xff]
    %v382 = vld [vmem:[#allocation5 + $0x748] sm:$0xff]
    %v383 = vld [vmem:[#allocation5 + $0x750] sm:$0xff]
    %v384 = vld [vmem:[#allocation5 + $0x758] sm:$0xff]
    %v385 = vld [vmem:[#allocation5 + $0x760] sm:$0xff]
    %v386 = vld [vmem:[#allocation5 + $0x768] sm:$0xff]
    %v387 = vld [vmem:[#allocation5 + $0x770] sm:$0xff]
    %v388 = vld [vmem:[#allocation5 + $0x778] sm:$0xff]
    %v389 = vld [vmem:[#allocation5 + $0x780] sm:$0xff]
    %v390 = vld [vmem:[#allocation5 + $0x788] sm:$0xff]
    %v391 = vld [vmem:[#allocation5 + $0x790] sm:$0xff]
    %v392 = vld [vmem:[#allocation5 + $0x798] sm:$0xff]
    %v393 = vld [vmem:[#allocation5 + $0x7a0] sm:$0xff]
    %v394 = vld [vmem:[#allocation5 + $0x7a8] sm:$0xff]
    %v395 = vld [vmem:[#allocation5 + $0x7b0] sm:$0xff]
    %v396 = vld [vmem:[#allocation5 + $0x7b8] sm:$0xff]
    %v397 = vld [vmem:[#allocation5 + $0x7c0] sm:$0xff]
    %v398 = vld [vmem:[#allocation5 + $0x7c8] sm:$0xff]
    %v399 = vld [vmem:[#allocation5 + $0x7d0] sm:$0xff]
    %v400 = vld [vmem:[#allocation5 + $0x7d8] sm:$0xff]
    %v401 = vld [vmem:[#allocation5 + $0x7e0] sm:$0xff]
    %v402 = vld [vmem:[#allocation5 + $0x7e8] sm:$0xff]
    %v403 = vld [vmem:[#allocation5 + $0x7f0] sm:$0xff]
    %v404 = vld [vmem:[#allocation5 + $0x7f8] sm:$0xff]
    %v405 = vld [vmem:[#allocation5 + $0x800] sm:$0xff]
    %v406 = vld [vmem:[#allocation5 + $0x808] sm:$0xff]
    %v407 = vld [vmem:[#allocation5 + $0x810] sm:$0xff]
    %v408 = vld [vmem:[#allocation5 + $0x818] sm:$0xff]
    %v409 = vld [vmem:[#allocation5 + $0x820] sm:$0xff]
    %v410 = vld [vmem:[#allocation5 + $0x828] sm:$0xff]
    %v411 = vld [vmem:[#allocation5 + $0x830] sm:$0xff]
    %v412 = vld [vmem:[#allocation5 + $0x838] sm:$0xff]
    %v413 = vld [vmem:[#allocation5 + $0x840] sm:$0xff]
    %v414 = vld [vmem:[#allocation5 + $0x848] sm:$0xff]
    %v415 = vld [vmem:[#allocation5 + $0x850] sm:$0xff]
    %v416 = vld [vmem:[#allocation5 + $0x858] sm:$0xff]
    %v417 = vld [vmem:[#allocation5 + $0x860] sm:$0xff]
    %v418 = vld [vmem:[#allocation5 + $0x868] sm:$0xff]
    %v419 = vld [vmem:[#allocation5 + $0x870] sm:$0xff]
    %v420 = vld [vmem:[#allocation5 + $0x878] sm:$0xff]
    %v421 = vld [vmem:[#allocation5 + $0x880] sm:$0xff]
    %v422 = vld [vmem:[#allocation5 + $0x888] sm:$0xff]
    %v423 = vld [vmem:[#allocation5 + $0x890] sm:$0xff]
    %v424 = vld [vmem:[#allocation5 + $0x898] sm:$0xff]
    %v425 = vld [vmem:[#allocation5 + $0x8a0] sm:$0xff]
    %v426 = vld [vmem:[#allocation5 + $0x8a8] sm:$0xff]
    %v427 = vld [vmem:[#allocation5 + $0x8b0] sm:$0xff]
    %v428 = vld [vmem:[#allocation5 + $0x8b8] sm:$0xff]
    %v429 = vld [vmem:[#allocation5 + $0x8c0] sm:$0xff]
    %v430 = vld [vmem:[#allocation5 + $0x8c8] sm:$0xff]
    %v431 = vld [vmem:[#allocation5 + $0x8d0] sm:$0xff]
    %v432 = vld [vmem:[#allocation5 + $0x8d8] sm:$0xff]
    %v433 = vld [vmem:[#allocation5 + $0x8e0] sm:$0xff]
    %v434 = vld [vmem:[#allocation5 + $0x8e8] sm:$0xff]
    %v435 = vld [vmem:[#allocation5 + $0x8f0] sm:$0xff]
    %v436 = vld [vmem:[#allocation5 + $0x8f8] sm:$0xff]
    %v437 = vld [vmem:[#allocation5 + $0x900] sm:$0xff]
    %v438 = vld [vmem:[#allocation5 + $0x908] sm:$0xff]
    %v439 = vld [vmem:[#allocation5 + $0x910] sm:$0xff]
    %v440 = vld [vmem:[#allocation5 + $0x918] sm:$0xff]
    %v441 = vld [vmem:[#allocation5 + $0x920] sm:$0xff]
    %v442 = vld [vmem:[#allocation5 + $0x928] sm:$0xff]
    %v443 = vld [vmem:[#allocation5 + $0x930] sm:$0xff]
    %v444 = vld [vmem:[#allocation5 + $0x938] sm:$0xff]
    %v445 = vld [vmem:[#allocation5 + $0x940] sm:$0xff]
    %v446 = vld [vmem:[#allocation5 + $0x948] sm:$0xff]
    %v447 = vld [vmem:[#allocation5 + $0x950] sm:$0xff]
    %v448 = vld [vmem:[#allocation5 + $0x958] sm:$0xff]
    %v449 = vld [vmem:[#allocation5 + $0x960] sm:$0xff]
    %v450 = vld [vmem:[#allocation5 + $0x968] sm:$0xff]
    %v451 = vld [vmem:[#allocation5 + $0x970] sm:$0xff]
    %v452 = vld [vmem:[#allocation5 + $0x978] sm:$0xff]
    %v453 = vld [vmem:[#allocation5 + $0x980] sm:$0xff]
    %v454 = vld [vmem:[#allocation5 + $0x988] sm:$0xff]
    %v455 = vld [vmem:[#allocation5 + $0x990] sm:$0xff]
    %v456 = vld [vmem:[#allocation5 + $0x998] sm:$0xff]
    %v457 = vld [vmem:[#allocation5 + $0x9a0] sm:$0xff]
    %v458 = vld [vmem:[#allocation5 + $0x9a8] sm:$0xff]
    %v459 = vld [vmem:[#allocation5 + $0x9b0] sm:$0xff]
    %v460 = vld [vmem:[#allocation5 + $0x9b8] sm:$0xff]
    %v461 = vld [vmem:[#allocation5 + $0x9c0] sm:$0xff]
    %v462 = vld [vmem:[#allocation5 + $0x9c8] sm:$0xff]
    %v463 = vld [vmem:[#allocation5 + $0x9d0] sm:$0xff]
    %v464 = vld [vmem:[#allocation5 + $0x9d8] sm:$0xff]
    %v465 = vld [vmem:[#allocation5 + $0x9e0] sm:$0xff]
    %v466 = vld [vmem:[#allocation5 + $0x9e8] sm:$0xff]
    %v467 = vld [vmem:[#allocation5 + $0x9f0] sm:$0xff]
    %v468 = vld [vmem:[#allocation5 + $0x9f8] sm:$0xff]
    %v469 = vld [vmem:[#allocation5 + $0xa00] sm:$0xff]
    %v470 = vld [vmem:[#allocation5 + $0xa08] sm:$0xff]
    %v471 = vld [vmem:[#allocation5 + $0xa10] sm:$0xff]
    %v472 = vld [vmem:[#allocation5 + $0xa18] sm:$0xff]
    %v473 = vld [vmem:[#allocation5 + $0xa20] sm:$0xff]
    %v474 = vld [vmem:[#allocation5 + $0xa28] sm:$0xff]
    %v475 = vld [vmem:[#allocation5 + $0xa30] sm:$0xff]
    %v476 = vld [vmem:[#allocation5 + $0xa38] sm:$0xff]
    %v477 = vld [vmem:[#allocation5 + $0xa40] sm:$0xff]
    %v478 = vld [vmem:[#allocation5 + $0xa48] sm:$0xff]
    %v479 = vld [vmem:[#allocation5 + $0xa50] sm:$0xff]
    %v480 = vld [vmem:[#allocation5 + $0xa58] sm:$0xff]
    %v481 = vld [vmem:[#allocation5 + $0xa60] sm:$0xff]
    %v482 = vld [vmem:[#allocation5 + $0xa68] sm:$0xff]
    %v483 = vld [vmem:[#allocation5 + $0xa70] sm:$0xff]
    %v484 = vld [vmem:[#allocation5 + $0xa78] sm:$0xff]
    %v485 = vld [vmem:[#allocation5 + $0xa80] sm:$0xff]
    %v486 = vld [vmem:[#allocation5 + $0xa88] sm:$0xff]
    %v487 = vld [vmem:[#allocation5 + $0xa90] sm:$0xff]
    %v488 = vld [vmem:[#allocation5 + $0xa98] sm:$0xff]
    %v489 = vld [vmem:[#allocation5 + $0xaa0] sm:$0xff]
    %v490 = vld [vmem:[#allocation5 + $0xaa8] sm:$0xff]
    %v491 = vld [vmem:[#allocation5 + $0xab0] sm:$0xff]
    %v492 = vld [vmem:[#allocation5 + $0xab8] sm:$0xff]
    %v493 = vld [vmem:[#allocation5 + $0xac0] sm:$0xff]
    %v494 = vld [vmem:[#allocation5 + $0xac8] sm:$0xff]
    %v495 = vld [vmem:[#allocation5 + $0xad0] sm:$0xff]
    %v496 = vld [vmem:[#allocation5 + $0xad8] sm:$0xff]
    %v497 = vld [vmem:[#allocation5 + $0xae0] sm:$0xff]
    %v498 = vld [vmem:[#allocation5 + $0xae8] sm:$0xff]
    %v499 = vld [vmem:[#allocation5 + $0xaf0] sm:$0xff]
    %v500 = vld [vmem:[#allocation5 + $0xaf8] sm:$0xff]
    %v501 = vld [vmem:[#allocation5 + $0xb00] sm:$0xff]
    %v502 = vld [vmem:[#allocation5 + $0xb08] sm:$0xff]
    %v503 = vld [vmem:[#allocation5 + $0xb10] sm:$0xff]
    %v504 = vld [vmem:[#allocation5 + $0xb18] sm:$0xff]
    %v505 = vld [vmem:[#allocation5 + $0xb20] sm:$0xff]
    %v506 = vld [vmem:[#allocation5 + $0xb28] sm:$0xff]
    %v507 = vld [vmem:[#allocation5 + $0xb30] sm:$0xff]
    %v508 = vld [vmem:[#allocation5 + $0xb38] sm:$0xff]
    %v509 = vld [vmem:[#allocation5 + $0xb40] sm:$0xff]
    %v510 = vld [vmem:[#allocation5 + $0xb48] sm:$0xff]
    %v511 = vld [vmem:[#allocation5 + $0xb50] sm:$0xff]
    %v512 = vld [vmem:[#allocation5 + $0xb58] sm:$0xff]
    %v513 = vld [vmem:[#allocation5 + $0xb60] sm:$0xff]
    %v514 = vld [vmem:[#allocation5 + $0xb68] sm:$0xff]
    %v515 = vld [vmem:[#allocation5 + $0xb70] sm:$0xff]
    %v516 = vld [vmem:[#allocation5 + $0xb78] sm:$0xff]
    %v517 = vld [vmem:[#allocation5 + $0xb80] sm:$0xff]
    %v518 = vld [vmem:[#allocation5 + $0xb88] sm:$0xff]
    %v519 = vld [vmem:[#allocation5 + $0xb90] sm:$0xff]
    %v520 = vld [vmem:[#allocation5 + $0xb98] sm:$0xff]
    %v521 = vld [vmem:[#allocation5 + $0xba0] sm:$0xff]
    %v522 = vld [vmem:[#allocation5 + $0xba8] sm:$0xff]
    %v523 = vld [vmem:[#allocation5 + $0xbb0] sm:$0xff]
    %v524 = vld [vmem:[#allocation5 + $0xbb8] sm:$0xff]
    %v525 = vld [vmem:[#allocation5 + $0xbc0] sm:$0xff]
    %v526 = vld [vmem:[#allocation5 + $0xbc8] sm:$0xff]
    %v527 = vld [vmem:[#allocation5 + $0xbd0] sm:$0xff]
    %v528 = vld [vmem:[#allocation5 + $0xbd8] sm:$0xff]
    %v529 = vld [vmem:[#allocation5 + $0xbe0] sm:$0xff]
    %v530 = vld [vmem:[#allocation5 + $0xbe8] sm:$0xff]
    %v531 = vld [vmem:[#allocation5 + $0xbf0] sm:$0xff]
    %v532 = vld [vmem:[#allocation5 + $0xbf8] sm:$0xff]
    %v533 = vld [vmem:[#allocation13] sm:$0x1]
    %v535 = vlaneseq
    %v536 = vshrl.u32 %v535, 7
    %v537 = vsub.s32 0, %v536
    %v538 = vrot.slane %v533, %v537
    %540 = vmatprep.subr.mxu0 0.0
    %541 = vmatpush1.msra.mxu0 %v149
    %542 = vmatprep.subr.mxu0 0.0
    %543 = vmatpush1.msra.mxu0 %v150
    %544 = vmatprep.subr.mxu0 0.0
    %545 = vmatpush1.msra.mxu0 %v151
    %546 = vmatprep.subr.mxu0 0.0
    %547 = vmatpush1.msra.mxu0 %v152
    %548 = vmatprep.subr.mxu0 0.0
    %549 = vmatpush1.msra.mxu0 %v153
    %550 = vmatprep.subr.mxu0 0.0
    %551 = vmatpush1.msra.mxu0 %v154
    %552 = vmatprep.subr.mxu0 0.0
    %553 = vmatpush1.msra.mxu0 %v155
    %554 = vmatprep.subr.mxu0 0.0
    %555 = vmatpush1.msra.mxu0 %v156
    %556 = vmatprep.subr.mxu0 0.0
    %557 = vmatpush1.msra.mxu0 %v157
    %558 = vmatprep.subr.mxu0 0.0
    %559 = vmatpush1.msra.mxu0 %v158
    %560 = vmatprep.subr.mxu0 0.0
    %561 = vmatpush1.msra.mxu0 %v159
    %562 = vmatprep.subr.mxu0 0.0
    %563 = vmatpush1.msra.mxu0 %v160
    %564 = vmatprep.subr.mxu0 0.0
    %565 = vmatpush1.msra.mxu0 %v161
    %566 = vmatprep.subr.mxu0 0.0
    %567 = vmatpush1.msra.mxu0 %v162
    %568 = vmatprep.subr.mxu0 0.0
    %569 = vmatpush1.msra.mxu0 %v163
    %570 = vmatprep.subr.mxu0 0.0
    %571 = vmatpush1.msra.mxu0 %v164
    %572 = vmatprep.subr.mxu0 0.0
    %573 = vmatpush1.msra.mxu0 %v165
    %574 = vmatprep.subr.mxu0 0.0
    %575 = vmatpush1.msra.mxu0 %v166
    %576 = vmatprep.subr.mxu0 0.0
    %577 = vmatpush1.msra.mxu0 %v167
    %578 = vmatprep.subr.mxu0 0.0
    %579 = vmatpush1.msra.mxu0 %v168
    %580 = vmatprep.subr.mxu0 0.0
    %581 = vmatpush1.msra.mxu0 %v169
    %582 = vmatprep.subr.mxu0 0.0
    %583 = vmatpush1.msra.mxu0 %v170
    %584 = vmatprep.subr.mxu0 0.0
    %585 = vmatpush1.msra.mxu0 %v171
    %586 = vmatprep.subr.mxu0 0.0
    %587 = vmatpush1.msra.mxu0 %v172
    %588 = vmatprep.subr.mxu0 0.0
    %589 = vmatpush1.msra.mxu0 %v173
    %590 = vmatprep.subr.mxu0 0.0
    %591 = vmatpush1.msra.mxu0 %v174
    %592 = vmatprep.subr.mxu0 0.0
    %593 = vmatpush1.msra.mxu0 %v175
    %594 = vmatprep.subr.mxu0 0.0
    %595 = vmatpush1.msra.mxu0 %v176
    %596 = vmatprep.subr.mxu0 0.0
    %597 = vmatpush1.msra.mxu0 %v177
    %598 = vmatprep.subr.mxu0 0.0
    %599 = vmatpush1.msra.mxu0 %v178
    %600 = vmatprep.subr.mxu0 0.0
    %601 = vmatpush1.msra.mxu0 %v179
    %602 = vmatprep.subr.mxu0 0.0
    %603 = vmatpush1.msra.mxu0 %v180
    %604 = vmatprep.mubr.f32.mxu0 %v126
    %605 = vmatmul.mubr.f32.gmra.mrb[0].mxu0 %v125
    %v606 = vpop.f32.mrb[0].mxu0
    %v607 = vadd.f32 %v538, %v606
    %v608 = vpop.f32.mrb[0].mxu0
    %609 = vdwg.mxu0
    %610 = vmatprep.subr.mxu0 0.0
    %611 = vmatpush1.msra.mxu0 %v181
    %612 = vmatprep.subr.mxu0 0.0
    %613 = vmatpush1.msra.mxu0 %v182
    %614 = vmatprep.subr.mxu0 0.0
    %615 = vmatpush1.msra.mxu0 %v183
    %616 = vmatprep.subr.mxu0 0.0
    %617 = vmatpush1.msra.mxu0 %v184
    %618 = vmatprep.subr.mxu0 0.0
    %619 = vmatpush1.msra.mxu0 %v185
    %620 = vmatprep.subr.mxu0 0.0
    %621 = vmatpush1.msra.mxu0 %v186
    %622 = vmatprep.subr.mxu0 0.0
    %623 = vmatpush1.msra.mxu0 %v187
    %624 = vmatprep.subr.mxu0 0.0
    %625 = vmatpush1.msra.mxu0 %v188
    %626 = vmatprep.subr.mxu0 0.0
    %627 = vmatpush1.msra.mxu0 %v189
    %628 = vmatprep.subr.mxu0 0.0
    %629 = vmatpush1.msra.mxu0 %v190
    %630 = vmatprep.subr.mxu0 0.0
    %631 = vmatpush1.msra.mxu0 %v191
    %632 = vmatprep.subr.mxu0 0.0
    %633 = vmatpush1.msra.mxu0 %v192
    %634 = vmatprep.subr.mxu0 0.0
    %635 = vmatpush1.msra.mxu0 %v193
    %636 = vmatprep.subr.mxu0 0.0
    %637 = vmatpush1.msra.mxu0 %v194
    %638 = vmatprep.subr.mxu0 0.0
    %639 = vmatpush1.msra.mxu0 %v195
    %640 = vmatprep.subr.mxu0 0.0
    %641 = vmatpush1.msra.mxu0 %v196
    %642 = vmatprep.subr.mxu0 0.0
    %643 = vmatpush1.msra.mxu0 %v197
    %644 = vmatprep.subr.mxu0 0.0
    %645 = vmatpush1.msra.mxu0 %v198
    %646 = vmatprep.subr.mxu0 0.0
    %647 = vmatpush1.msra.mxu0 %v199
    %648 = vmatprep.subr.mxu0 0.0
    %649 = vmatpush1.msra.mxu0 %v200
    %650 = vmatprep.subr.mxu0 0.0
    %651 = vmatpush1.msra.mxu0 %v201
    %652 = vmatprep.subr.mxu0 0.0
    %653 = vmatpush1.msra.mxu0 %v202
    %654 = vmatprep.subr.mxu0 0.0
    %655 = vmatpush1.msra.mxu0 %v203
    %656 = vmatprep.subr.mxu0 0.0
    %657 = vmatpush1.msra.mxu0 %v204
    %658 = vmatprep.subr.mxu0 0.0
    %659 = vmatpush1.msra.mxu0 %v205
    %660 = vmatprep.subr.mxu0 0.0
    %661 = vmatpush1.msra.mxu0 %v206
    %662 = vmatprep.subr.mxu0 0.0
    %663 = vmatpush1.msra.mxu0 %v207
    %664 = vmatprep.subr.mxu0 0.0
    %665 = vmatpush1.msra.mxu0 %v208
    %666 = vmatprep.subr.mxu0 0.0
    %667 = vmatpush1.msra.mxu0 %v209
    %668 = vmatprep.subr.mxu0 0.0
    %669 = vmatpush1.msra.mxu0 %v210
    %670 = vmatprep.subr.mxu0 0.0
    %671 = vmatpush1.msra.mxu0 %v211
    %672 = vmatprep.subr.mxu0 0.0
    %673 = vmatpush1.msra.mxu0 %v212
    %674 = vmatprep.mubr.f32.mxu0 %v128
    %675 = vmatmul.mubr.f32.gmra.mrb[0].mxu0 %v127
    %v676 = vpop.f32.mrb[0].mxu0
    %v677 = vadd.f32 %v607, %v676
    %v678 = vpop.f32.mrb[0].mxu0
    %679 = vdwg.mxu0
    %680 = vmatprep.subr.mxu0 0.0
    %681 = vmatpush1.msra.mxu0 %v213
    %682 = vmatprep.subr.mxu0 0.0
    %683 = vmatpush1.msra.mxu0 %v214
    %684 = vmatprep.subr.mxu0 0.0
    %685 = vmatpush1.msra.mxu0 %v215
    %686 = vmatprep.subr.mxu0 0.0
    %687 = vmatpush1.msra.mxu0 %v216
    %688 = vmatprep.subr.mxu0 0.0
    %689 = vmatpush1.msra.mxu0 %v217
    %690 = vmatprep.subr.mxu0 0.0
    %691 = vmatpush1.msra.mxu0 %v218
    %692 = vmatprep.subr.mxu0 0.0
    %693 = vmatpush1.msra.mxu0 %v219
    %694 = vmatprep.subr.mxu0 0.0
    %695 = vmatpush1.msra.mxu0 %v220
    %696 = vmatprep.subr.mxu0 0.0
    %697 = vmatpush1.msra.mxu0 %v221
    %698 = vmatprep.subr.mxu0 0.0
    %699 = vmatpush1.msra.mxu0 %v222
    %700 = vmatprep.subr.mxu0 0.0
    %701 = vmatpush1.msra.mxu0 %v223
    %702 = vmatprep.subr.mxu0 0.0
    %703 = vmatpush1.msra.mxu0 %v224
    %704 = vmatprep.subr.mxu0 0.0
    %705 = vmatpush1.msra.mxu0 %v225
    %706 = vmatprep.subr.mxu0 0.0
    %707 = vmatpush1.msra.mxu0 %v226
    %708 = vmatprep.subr.mxu0 0.0
    %709 = vmatpush1.msra.mxu0 %v227
    %710 = vmatprep.subr.mxu0 0.0
    %711 = vmatpush1.msra.mxu0 %v228
    %712 = vmatprep.subr.mxu0 0.0
    %713 = vmatpush1.msra.mxu0 %v229
    %714 = vmatprep.subr.mxu0 0.0
    %715 = vmatpush1.msra.mxu0 %v230
    %716 = vmatprep.subr.mxu0 0.0
    %717 = vmatpush1.msra.mxu0 %v231
    %718 = vmatprep.subr.mxu0 0.0
    %719 = vmatpush1.msra.mxu0 %v232
    %720 = vmatprep.subr.mxu0 0.0
    %721 = vmatpush1.msra.mxu0 %v233
    %722 = vmatprep.subr.mxu0 0.0
    %723 = vmatpush1.msra.mxu0 %v234
    %724 = vmatprep.subr.mxu0 0.0
    %725 = vmatpush1.msra.mxu0 %v235
    %726 = vmatprep.subr.mxu0 0.0
    %727 = vmatpush1.msra.mxu0 %v236
    %728 = vmatprep.subr.mxu0 0.0
    %729 = vmatpush1.msra.mxu0 %v237
    %730 = vmatprep.subr.mxu0 0.0
    %731 = vmatpush1.msra.mxu0 %v238
    %732 = vmatprep.subr.mxu0 0.0
    %733 = vmatpush1.msra.mxu0 %v239
    %734 = vmatprep.subr.mxu0 0.0
    %735 = vmatpush1.msra.mxu0 %v240
    %736 = vmatprep.subr.mxu0 0.0
    %737 = vmatpush1.msra.mxu0 %v241
    %738 = vmatprep.subr.mxu0 0.0
    %739 = vmatpush1.msra.mxu0 %v242
    %740 = vmatprep.subr.mxu0 0.0
    %741 = vmatpush1.msra.mxu0 %v243
    %742 = vmatprep.subr.mxu0 0.0
    %743 = vmatpush1.msra.mxu0 %v244
    %744 = vmatprep.mubr.f32.mxu0 %v130
    %745 = vmatmul.mubr.f32.gmra.mrb[0].mxu0 %v129
    %v746 = vpop.f32.mrb[0].mxu0
    %v747 = vadd.f32 %v677, %v746
    %v748 = vpop.f32.mrb[0].mxu0
    %749 = vdwg.mxu0
    %750 = vmatprep.subr.mxu0 0.0
    %751 = vmatpush1.msra.mxu0 %v245
    %752 = vmatprep.subr.mxu0 0.0
    %753 = vmatpush1.msra.mxu0 %v246
    %754 = vmatprep.subr.mxu0 0.0
    %755 = vmatpush1.msra.mxu0 %v247
    %756 = vmatprep.subr.mxu0 0.0
    %757 = vmatpush1.msra.mxu0 %v248
    %758 = vmatprep.subr.mxu0 0.0
    %759 = vmatpush1.msra.mxu0 %v249
    %760 = vmatprep.subr.mxu0 0.0
    %761 = vmatpush1.msra.mxu0 %v250
    %762 = vmatprep.subr.mxu0 0.0
    %763 = vmatpush1.msra.mxu0 %v251
    %764 = vmatprep.subr.mxu0 0.0
    %765 = vmatpush1.msra.mxu0 %v252
    %766 = vmatprep.subr.mxu0 0.0
    %767 = vmatpush1.msra.mxu0 %v253
    %768 = vmatprep.subr.mxu0 0.0
    %769 = vmatpush1.msra.mxu0 %v254
    %770 = vmatprep.subr.mxu0 0.0
    %771 = vmatpush1.msra.mxu0 %v255
    %772 = vmatprep.subr.mxu0 0.0
    %773 = vmatpush1.msra.mxu0 %v256
    %774 = vmatprep.subr.mxu0 0.0
    %775 = vmatpush1.msra.mxu0 %v257
    %776 = vmatprep.subr.mxu0 0.0
    %777 = vmatpush1.msra.mxu0 %v258
    %778 = vmatprep.subr.mxu0 0.0
    %779 = vmatpush1.msra.mxu0 %v259
    %780 = vmatprep.subr.mxu0 0.0
    %781 = vmatpush1.msra.mxu0 %v260
    %782 = vmatprep.subr.mxu0 0.0
    %783 = vmatpush1.msra.mxu0 %v261
    %784 = vmatprep.subr.mxu0 0.0
    %785 = vmatpush1.msra.mxu0 %v262
    %786 = vmatprep.subr.mxu0 0.0
    %787 = vmatpush1.msra.mxu0 %v263
    %788 = vmatprep.subr.mxu0 0.0
    %789 = vmatpush1.msra.mxu0 %v264
    %790 = vmatprep.subr.mxu0 0.0
    %791 = vmatpush1.msra.mxu0 %v265
    %792 = vmatprep.subr.mxu0 0.0
    %793 = vmatpush1.msra.mxu0 %v266
    %794 = vmatprep.subr.mxu0 0.0
    %795 = vmatpush1.msra.mxu0 %v267
    %796 = vmatprep.subr.mxu0 0.0
    %797 = vmatpush1.msra.mxu0 %v268
    %798 = vmatprep.subr.mxu0 0.0
    %799 = vmatpush1.msra.mxu0 %v269
    %800 = vmatprep.subr.mxu0 0.0
    %801 = vmatpush1.msra.mxu0 %v270
    %802 = vmatprep.subr.mxu0 0.0
    %803 = vmatpush1.msra.mxu0 %v271
    %804 = vmatprep.subr.mxu0 0.0
    %805 = vmatpush1.msra.mxu0 %v272
    %806 = vmatprep.subr.mxu0 0.0
    %807 = vmatpush1.msra.mxu0 %v273
    %808 = vmatprep.subr.mxu0 0.0
    %809 = vmatpush1.msra.mxu0 %v274
    %810 = vmatprep.subr.mxu0 0.0
    %811 = vmatpush1.msra.mxu0 %v275
    %812 = vmatprep.subr.mxu0 0.0
    %813 = vmatpush1.msra.mxu0 %v276
    %814 = vmatprep.mubr.f32.mxu0 %v132
    %815 = vmatmul.mubr.f32.gmra.mrb[0].mxu0 %v131
    %v816 = vpop.f32.mrb[0].mxu0
    %v817 = vadd.f32 %v747, %v816
    %v818 = vpop.f32.mrb[0].mxu0
    %819 = vdwg.mxu0
    %820 = vmatprep.subr.mxu0 0.0
    %821 = vmatpush1.msra.mxu0 %v277
    %822 = vmatprep.subr.mxu0 0.0
    %823 = vmatpush1.msra.mxu0 %v278
    %824 = vmatprep.subr.mxu0 0.0
    %825 = vmatpush1.msra.mxu0 %v279
    %826 = vmatprep.subr.mxu0 0.0
    %827 = vmatpush1.msra.mxu0 %v280
    %828 = vmatprep.subr.mxu0 0.0
    %829 = vmatpush1.msra.mxu0 %v281
    %830 = vmatprep.subr.mxu0 0.0
    %831 = vmatpush1.msra.mxu0 %v282
    %832 = vmatprep.subr.mxu0 0.0
    %833 = vmatpush1.msra.mxu0 %v283
    %834 = vmatprep.subr.mxu0 0.0
    %835 = vmatpush1.msra.mxu0 %v284
    %836 = vmatprep.subr.mxu0 0.0
    %837 = vmatpush1.msra.mxu0 %v285
    %838 = vmatprep.subr.mxu0 0.0
    %839 = vmatpush1.msra.mxu0 %v286
    %840 = vmatprep.subr.mxu0 0.0
    %841 = vmatpush1.msra.mxu0 %v287
    %842 = vmatprep.subr.mxu0 0.0
    %843 = vmatpush1.msra.mxu0 %v288
    %844 = vmatprep.subr.mxu0 0.0
    %845 = vmatpush1.msra.mxu0 %v289
    %846 = vmatprep.subr.mxu0 0.0
    %847 = vmatpush1.msra.mxu0 %v290
    %848 = vmatprep.subr.mxu0 0.0
    %849 = vmatpush1.msra.mxu0 %v291
    %850 = vmatprep.subr.mxu0 0.0
    %851 = vmatpush1.msra.mxu0 %v292
    %852 = vmatprep.subr.mxu0 0.0
    %853 = vmatpush1.msra.mxu0 %v293
    %854 = vmatprep.subr.mxu0 0.0
    %855 = vmatpush1.msra.mxu0 %v294
    %856 = vmatprep.subr.mxu0 0.0
    %857 = vmatpush1.msra.mxu0 %v295
    %858 = vmatprep.subr.mxu0 0.0
    %859 = vmatpush1.msra.mxu0 %v296
    %860 = vmatprep.subr.mxu0 0.0
    %861 = vmatpush1.msra.mxu0 %v297
    %862 = vmatprep.subr.mxu0 0.0
    %863 = vmatpush1.msra.mxu0 %v298
    %864 = vmatprep.subr.mxu0 0.0
    %865 = vmatpush1.msra.mxu0 %v299
    %866 = vmatprep.subr.mxu0 0.0
    %867 = vmatpush1.msra.mxu0 %v300
    %868 = vmatprep.subr.mxu0 0.0
    %869 = vmatpush1.msra.mxu0 %v301
    %870 = vmatprep.subr.mxu0 0.0
    %871 = vmatpush1.msra.mxu0 %v302
    %872 = vmatprep.subr.mxu0 0.0
    %873 = vmatpush1.msra.mxu0 %v303
    %874 = vmatprep.subr.mxu0 0.0
    %875 = vmatpush1.msra.mxu0 %v304
    %876 = vmatprep.subr.mxu0 0.0
    %877 = vmatpush1.msra.mxu0 %v305
    %878 = vmatprep.subr.mxu0 0.0
    %879 = vmatpush1.msra.mxu0 %v306
    %880 = vmatprep.subr.mxu0 0.0
    %881 = vmatpush1.msra.mxu0 %v307
    %882 = vmatprep.subr.mxu0 0.0
    %883 = vmatpush1.msra.mxu0 %v308
    %884 = vmatprep.mubr.f32.mxu0 %v134
    %885 = vmatmul.mubr.f32.gmra.mrb[0].mxu0 %v133
    %v886 = vpop.f32.mrb[0].mxu0
    %v887 = vadd.f32 %v817, %v886
    %v888 = vpop.f32.mrb[0].mxu0
    %889 = vdwg.mxu0
    %890 = vmatprep.subr.mxu0 0.0
    %891 = vmatpush1.msra.mxu0 %v309
    %892 = vmatprep.subr.mxu0 0.0
    %893 = vmatpush1.msra.mxu0 %v310
    %894 = vmatprep.subr.mxu0 0.0
    %895 = vmatpush1.msra.mxu0 %v311
    %896 = vmatprep.subr.mxu0 0.0
    %897 = vmatpush1.msra.mxu0 %v312
    %898 = vmatprep.subr.mxu0 0.0
    %899 = vmatpush1.msra.mxu0 %v313
    %900 = vmatprep.subr.mxu0 0.0
    %901 = vmatpush1.msra.mxu0 %v314
    %902 = vmatprep.subr.mxu0 0.0
    %903 = vmatpush1.msra.mxu0 %v315
    %904 = vmatprep.subr.mxu0 0.0
    %905 = vmatpush1.msra.mxu0 %v316
    %906 = vmatprep.subr.mxu0 0.0
    %907 = vmatpush1.msra.mxu0 %v317
    %908 = vmatprep.subr.mxu0 0.0
    %909 = vmatpush1.msra.mxu0 %v318
    %910 = vmatprep.subr.mxu0 0.0
    %911 = vmatpush1.msra.mxu0 %v319
    %912 = vmatprep.subr.mxu0 0.0
    %913 = vmatpush1.msra.mxu0 %v320
    %914 = vmatprep.subr.mxu0 0.0
    %915 = vmatpush1.msra.mxu0 %v321
    %916 = vmatprep.subr.mxu0 0.0
    %917 = vmatpush1.msra.mxu0 %v322
    %918 = vmatprep.subr.mxu0 0.0
    %919 = vmatpush1.msra.mxu0 %v323
    %920 = vmatprep.subr.mxu0 0.0
    %921 = vmatpush1.msra.mxu0 %v324
    %922 = vmatprep.subr.mxu0 0.0
    %923 = vmatpush1.msra.mxu0 %v325
    %924 = vmatprep.subr.mxu0 0.0
    %925 = vmatpush1.msra.mxu0 %v326
    %926 = vmatprep.subr.mxu0 0.0
    %927 = vmatpush1.msra.mxu0 %v327
    %928 = vmatprep.subr.mxu0 0.0
    %929 = vmatpush1.msra.mxu0 %v328
    %930 = vmatprep.subr.mxu0 0.0
    %931 = vmatpush1.msra.mxu0 %v329
    %932 = vmatprep.subr.mxu0 0.0
    %933 = vmatpush1.msra.mxu0 %v330
    %934 = vmatprep.subr.mxu0 0.0
    %935 = vmatpush1.msra.mxu0 %v331
    %936 = vmatprep.subr.mxu0 0.0
    %937 = vmatpush1.msra.mxu0 %v332
    %938 = vmatprep.subr.mxu0 0.0
    %939 = vmatpush1.msra.mxu0 %v333
    %940 = vmatprep.subr.mxu0 0.0
    %941 = vmatpush1.msra.mxu0 %v334
    %942 = vmatprep.subr.mxu0 0.0
    %943 = vmatpush1.msra.mxu0 %v335
    %944 = vmatprep.subr.mxu0 0.0
    %945 = vmatpush1.msra.mxu0 %v336
    %946 = vmatprep.subr.mxu0 0.0
    %947 = vmatpush1.msra.mxu0 %v337
    %948 = vmatprep.subr.mxu0 0.0
    %949 = vmatpush1.msra.mxu0 %v338
    %950 = vmatprep.subr.mxu0 0.0
    %951 = vmatpush1.msra.mxu0 %v339
    %952 = vmatprep.subr.mxu0 0.0
    %953 = vmatpush1.msra.mxu0 %v340
    %954 = vmatprep.mubr.f32.mxu0 %v136
    %955 = vmatmul.mubr.f32.gmra.mrb[0].mxu0 %v135
    %v956 = vpop.f32.mrb[0].mxu0
    %v957 = vadd.f32 %v887, %v956
    %v958 = vpop.f32.mrb[0].mxu0
    %959 = vdwg.mxu0
    %960 = vmatprep.subr.mxu0 0.0
    %961 = vmatpush1.msra.mxu0 %v341
    %962 = vmatprep.subr.mxu0 0.0
    %963 = vmatpush1.msra.mxu0 %v342
    %964 = vmatprep.subr.mxu0 0.0
    %965 = vmatpush1.msra.mxu0 %v343
    %966 = vmatprep.subr.mxu0 0.0
    %967 = vmatpush1.msra.mxu0 %v344
    %968 = vmatprep.subr.mxu0 0.0
    %969 = vmatpush1.msra.mxu0 %v345
    %970 = vmatprep.subr.mxu0 0.0
    %971 = vmatpush1.msra.mxu0 %v346
    %972 = vmatprep.subr.mxu0 0.0
    %973 = vmatpush1.msra.mxu0 %v347
    %974 = vmatprep.subr.mxu0 0.0
    %975 = vmatpush1.msra.mxu0 %v348
    %976 = vmatprep.subr.mxu0 0.0
    %977 = vmatpush1.msra.mxu0 %v349
    %978 = vmatprep.subr.mxu0 0.0
    %979 = vmatpush1.msra.mxu0 %v350
    %980 = vmatprep.subr.mxu0 0.0
    %981 = vmatpush1.msra.mxu0 %v351
    %982 = vmatprep.subr.mxu0 0.0
    %983 = vmatpush1.msra.mxu0 %v352
    %984 = vmatprep.subr.mxu0 0.0
    %985 = vmatpush1.msra.mxu0 %v353
    %986 = vmatprep.subr.mxu0 0.0
    %987 = vmatpush1.msra.mxu0 %v354
    %988 = vmatprep.subr.mxu0 0.0
    %989 = vmatpush1.msra.mxu0 %v355
    %990 = vmatprep.subr.mxu0 0.0
    %991 = vmatpush1.msra.mxu0 %v356
    %992 = vmatprep.subr.mxu0 0.0
    %993 = vmatpush1.msra.mxu0 %v357
    %994 = vmatprep.subr.mxu0 0.0
    %995 = vmatpush1.msra.mxu0 %v358
    %996 = vmatprep.subr.mxu0 0.0
    %997 = vmatpush1.msra.mxu0 %v359
    %998 = vmatprep.subr.mxu0 0.0
    %999 = vmatpush1.msra.mxu0 %v360
    %1000 = vmatprep.subr.mxu0 0.0
    %1001 = vmatpush1.msra.mxu0 %v361
    %1002 = vmatprep.subr.mxu0 0.0
    %1003 = vmatpush1.msra.mxu0 %v362
    %1004 = vmatprep.subr.mxu0 0.0
    %1005 = vmatpush1.msra.mxu0 %v363
    %1006 = vmatprep.subr.mxu0 0.0
    %1007 = vmatpush1.msra.mxu0 %v364
    %1008 = vmatprep.subr.mxu0 0.0
    %1009 = vmatpush1.msra.mxu0 %v365
    %1010 = vmatprep.subr.mxu0 0.0
    %1011 = vmatpush1.msra.mxu0 %v366
    %1012 = vmatprep.subr.mxu0 0.0
    %1013 = vmatpush1.msra.mxu0 %v367
    %1014 = vmatprep.subr.mxu0 0.0
    %1015 = vmatpush1.msra.mxu0 %v368
    %1016 = vmatprep.subr.mxu0 0.0
    %1017 = vmatpush1.msra.mxu0 %v369
    %1018 = vmatprep.subr.mxu0 0.0
    %1019 = vmatpush1.msra.mxu0 %v370
    %1020 = vmatprep.subr.mxu0 0.0
    %1021 = vmatpush1.msra.mxu0 %v371
    %1022 = vmatprep.subr.mxu0 0.0
    %1023 = vmatpush1.msra.mxu0 %v372
    %1024 = vmatprep.mubr.f32.mxu0 %v138
    %1025 = vmatmul.mubr.f32.gmra.mrb[0].mxu0 %v137
    %v1026 = vpop.f32.mrb[0].mxu0
    %v1027 = vadd.f32 %v957, %v1026
    %v1028 = vpop.f32.mrb[0].mxu0
    %1029 = vdwg.mxu0
    %1030 = vmatprep.subr.mxu0 0.0
    %1031 = vmatpush1.msra.mxu0 %v373
    %1032 = vmatprep.subr.mxu0 0.0
    %1033 = vmatpush1.msra.mxu0 %v374
    %1034 = vmatprep.subr.mxu0 0.0
    %1035 = vmatpush1.msra.mxu0 %v375
    %1036 = vmatprep.subr.mxu0 0.0
    %1037 = vmatpush1.msra.mxu0 %v376
    %1038 = vmatprep.subr.mxu0 0.0
    %1039 = vmatpush1.msra.mxu0 %v377
    %1040 = vmatprep.subr.mxu0 0.0
    %1041 = vmatpush1.msra.mxu0 %v378
    %1042 = vmatprep.subr.mxu0 0.0
    %1043 = vmatpush1.msra.mxu0 %v379
    %1044 = vmatprep.subr.mxu0 0.0
    %1045 = vmatpush1.msra.mxu0 %v380
    %1046 = vmatprep.subr.mxu0 0.0
    %1047 = vmatpush1.msra.mxu0 %v381
    %1048 = vmatprep.subr.mxu0 0.0
    %1049 = vmatpush1.msra.mxu0 %v382
    %1050 = vmatprep.subr.mxu0 0.0
    %1051 = vmatpush1.msra.mxu0 %v383
    %1052 = vmatprep.subr.mxu0 0.0
    %1053 = vmatpush1.msra.mxu0 %v384
    %1054 = vmatprep.subr.mxu0 0.0
    %1055 = vmatpush1.msra.mxu0 %v385
    %1056 = vmatprep.subr.mxu0 0.0
    %1057 = vmatpush1.msra.mxu0 %v386
    %1058 = vmatprep.subr.mxu0 0.0
    %1059 = vmatpush1.msra.mxu0 %v387
    %1060 = vmatprep.subr.mxu0 0.0
    %1061 = vmatpush1.msra.mxu0 %v388
    %1062 = vmatprep.subr.mxu0 0.0
    %1063 = vmatpush1.msra.mxu0 %v389
    %1064 = vmatprep.subr.mxu0 0.0
    %1065 = vmatpush1.msra.mxu0 %v390
    %1066 = vmatprep.subr.mxu0 0.0
    %1067 = vmatpush1.msra.mxu0 %v391
    %1068 = vmatprep.subr.mxu0 0.0
    %1069 = vmatpush1.msra.mxu0 %v392
    %1070 = vmatprep.subr.mxu0 0.0
    %1071 = vmatpush1.msra.mxu0 %v393
    %1072 = vmatprep.subr.mxu0 0.0
    %1073 = vmatpush1.msra.mxu0 %v394
    %1074 = vmatprep.subr.mxu0 0.0
    %1075 = vmatpush1.msra.mxu0 %v395
    %1076 = vmatprep.subr.mxu0 0.0
    %1077 = vmatpush1.msra.mxu0 %v396
    %1078 = vmatprep.subr.mxu0 0.0
    %1079 = vmatpush1.msra.mxu0 %v397
    %1080 = vmatprep.subr.mxu0 0.0
    %1081 = vmatpush1.msra.mxu0 %v398
    %1082 = vmatprep.subr.mxu0 0.0
    %1083 = vmatpush1.msra.mxu0 %v399
    %1084 = vmatprep.subr.mxu0 0.0
    %1085 = vmatpush1.msra.mxu0 %v400
    %1086 = vmatprep.subr.mxu0 0.0
    %1087 = vmatpush1.msra.mxu0 %v401
    %1088 = vmatprep.subr.mxu0 0.0
    %1089 = vmatpush1.msra.mxu0 %v402
    %1090 = vmatprep.subr.mxu0 0.0
    %1091 = vmatpush1.msra.mxu0 %v403
    %1092 = vmatprep.subr.mxu0 0.0
    %1093 = vmatpush1.msra.mxu0 %v404
    %1094 = vmatprep.mubr.f32.mxu0 %v140
    %1095 = vmatmul.mubr.f32.gmra.mrb[0].mxu0 %v139
    %v1096 = vpop.f32.mrb[0].mxu0
    %v1097 = vadd.f32 %v1027, %v1096
    %v1098 = vpop.f32.mrb[0].mxu0
    %1099 = vdwg.mxu0
    %1100 = vmatprep.subr.mxu0 0.0
    %1101 = vmatpush1.msra.mxu0 %v405
    %1102 = vmatprep.subr.mxu0 0.0
    %1103 = vmatpush1.msra.mxu0 %v406
    %1104 = vmatprep.subr.mxu0 0.0
    %1105 = vmatpush1.msra.mxu0 %v407
    %1106 = vmatprep.subr.mxu0 0.0
    %1107 = vmatpush1.msra.mxu0 %v408
    %1108 = vmatprep.subr.mxu0 0.0
    %1109 = vmatpush1.msra.mxu0 %v409
    %1110 = vmatprep.subr.mxu0 0.0
    %1111 = vmatpush1.msra.mxu0 %v410
    %1112 = vmatprep.subr.mxu0 0.0
    %1113 = vmatpush1.msra.mxu0 %v411
    %1114 = vmatprep.subr.mxu0 0.0
    %1115 = vmatpush1.msra.mxu0 %v412
    %1116 = vmatprep.subr.mxu0 0.0
    %1117 = vmatpush1.msra.mxu0 %v413
    %1118 = vmatprep.subr.mxu0 0.0
    %1119 = vmatpush1.msra.mxu0 %v414
    %1120 = vmatprep.subr.mxu0 0.0
    %1121 = vmatpush1.msra.mxu0 %v415
    %1122 = vmatprep.subr.mxu0 0.0
    %1123 = vmatpush1.msra.mxu0 %v416
    %1124 = vmatprep.subr.mxu0 0.0
    %1125 = vmatpush1.msra.mxu0 %v417
    %1126 = vmatprep.subr.mxu0 0.0
    %1127 = vmatpush1.msra.mxu0 %v418
    %1128 = vmatprep.subr.mxu0 0.0
    %1129 = vmatpush1.msra.mxu0 %v419
    %1130 = vmatprep.subr.mxu0 0.0
    %1131 = vmatpush1.msra.mxu0 %v420
    %1132 = vmatprep.subr.mxu0 0.0
    %1133 = vmatpush1.msra.mxu0 %v421
    %1134 = vmatprep.subr.mxu0 0.0
    %1135 = vmatpush1.msra.mxu0 %v422
    %1136 = vmatprep.subr.mxu0 0.0
    %1137 = vmatpush1.msra.mxu0 %v423
    %1138 = vmatprep.subr.mxu0 0.0
    %1139 = vmatpush1.msra.mxu0 %v424
    %1140 = vmatprep.subr.mxu0 0.0
    %1141 = vmatpush1.msra.mxu0 %v425
    %1142 = vmatprep.subr.mxu0 0.0
    %1143 = vmatpush1.msra.mxu0 %v426
    %1144 = vmatprep.subr.mxu0 0.0
    %1145 = vmatpush1.msra.mxu0 %v427
    %1146 = vmatprep.subr.mxu0 0.0
    %1147 = vmatpush1.msra.mxu0 %v428
    %1148 = vmatprep.subr.mxu0 0.0
    %1149 = vmatpush1.msra.mxu0 %v429
    %1150 = vmatprep.subr.mxu0 0.0
    %1151 = vmatpush1.msra.mxu0 %v430
    %1152 = vmatprep.subr.mxu0 0.0
    %1153 = vmatpush1.msra.mxu0 %v431
    %1154 = vmatprep.subr.mxu0 0.0
    %1155 = vmatpush1.msra.mxu0 %v432
    %1156 = vmatprep.subr.mxu0 0.0
    %1157 = vmatpush1.msra.mxu0 %v433
    %1158 = vmatprep.subr.mxu0 0.0
    %1159 = vmatpush1.msra.mxu0 %v434
    %1160 = vmatprep.subr.mxu0 0.0
    %1161 = vmatpush1.msra.mxu0 %v435
    %1162 = vmatprep.subr.mxu0 0.0
    %1163 = vmatpush1.msra.mxu0 %v436
    %1164 = vmatprep.mubr.f32.mxu0 %v142
    %1165 = vmatmul.mubr.f32.gmra.mrb[0].mxu0 %v141
    %v1166 = vpop.f32.mrb[0].mxu0
    %v1167 = vadd.f32 %v1097, %v1166
    %v1168 = vpop.f32.mrb[0].mxu0
    %1169 = vdwg.mxu0
    %1170 = vmatprep.subr.mxu0 0.0
    %1171 = vmatpush1.msra.mxu0 %v437
    %1172 = vmatprep.subr.mxu0 0.0
    %1173 = vmatpush1.msra.mxu0 %v438
    %1174 = vmatprep.subr.mxu0 0.0
    %1175 = vmatpush1.msra.mxu0 %v439
    %1176 = vmatprep.subr.mxu0 0.0
    %1177 = vmatpush1.msra.mxu0 %v440
    %1178 = vmatprep.subr.mxu0 0.0
    %1179 = vmatpush1.msra.mxu0 %v441
    %1180 = vmatprep.subr.mxu0 0.0
    %1181 = vmatpush1.msra.mxu0 %v442
    %1182 = vmatprep.subr.mxu0 0.0
    %1183 = vmatpush1.msra.mxu0 %v443
    %1184 = vmatprep.subr.mxu0 0.0
    %1185 = vmatpush1.msra.mxu0 %v444
    %1186 = vmatprep.subr.mxu0 0.0
    %1187 = vmatpush1.msra.mxu0 %v445
    %1188 = vmatprep.subr.mxu0 0.0
    %1189 = vmatpush1.msra.mxu0 %v446
    %1190 = vmatprep.subr.mxu0 0.0
    %1191 = vmatpush1.msra.mxu0 %v447
    %1192 = vmatprep.subr.mxu0 0.0
    %1193 = vmatpush1.msra.mxu0 %v448
    %1194 = vmatprep.subr.mxu0 0.0
    %1195 = vmatpush1.msra.mxu0 %v449
    %1196 = vmatprep.subr.mxu0 0.0
    %1197 = vmatpush1.msra.mxu0 %v450
    %1198 = vmatprep.subr.mxu0 0.0
    %1199 = vmatpush1.msra.mxu0 %v451
    %1200 = vmatprep.subr.mxu0 0.0
    %1201 = vmatpush1.msra.mxu0 %v452
    %1202 = vmatprep.subr.mxu0 0.0
    %1203 = vmatpush1.msra.mxu0 %v453
    %1204 = vmatprep.subr.mxu0 0.0
    %1205 = vmatpush1.msra.mxu0 %v454
    %1206 = vmatprep.subr.mxu0 0.0
    %1207 = vmatpush1.msra.mxu0 %v455
    %1208 = vmatprep.subr.mxu0 0.0
    %1209 = vmatpush1.msra.mxu0 %v456
    %1210 = vmatprep.subr.mxu0 0.0
    %1211 = vmatpush1.msra.mxu0 %v457
    %1212 = vmatprep.subr.mxu0 0.0
    %1213 = vmatpush1.msra.mxu0 %v458
    %1214 = vmatprep.subr.mxu0 0.0
    %1215 = vmatpush1.msra.mxu0 %v459
    %1216 = vmatprep.subr.mxu0 0.0
    %1217 = vmatpush1.msra.mxu0 %v460
    %1218 = vmatprep.subr.mxu0 0.0
    %1219 = vmatpush1.msra.mxu0 %v461
    %1220 = vmatprep.subr.mxu0 0.0
    %1221 = vmatpush1.msra.mxu0 %v462
    %1222 = vmatprep.subr.mxu0 0.0
    %1223 = vmatpush1.msra.mxu0 %v463
    %1224 = vmatprep.subr.mxu0 0.0
    %1225 = vmatpush1.msra.mxu0 %v464
    %1226 = vmatprep.subr.mxu0 0.0
    %1227 = vmatpush1.msra.mxu0 %v465
    %1228 = vmatprep.subr.mxu0 0.0
    %1229 = vmatpush1.msra.mxu0 %v466
    %1230 = vmatprep.subr.mxu0 0.0
    %1231 = vmatpush1.msra.mxu0 %v467
    %1232 = vmatprep.subr.mxu0 0.0
    %1233 = vmatpush1.msra.mxu0 %v468
    %1234 = vmatprep.mubr.f32.mxu0 %v144
    %1235 = vmatmul.mubr.f32.gmra.mrb[0].mxu0 %v143
    %v1236 = vpop.f32.mrb[0].mxu0
    %v1237 = vadd.f32 %v1167, %v1236
    %v1238 = vpop.f32.mrb[0].mxu0
    %1239 = vdwg.mxu0
    %1240 = vmatprep.subr.mxu0 0.0
    %1241 = vmatpush1.msra.mxu0 %v469
    %1242 = vmatprep.subr.mxu0 0.0
    %1243 = vmatpush1.msra.mxu0 %v470
    %1244 = vmatprep.subr.mxu0 0.0
    %1245 = vmatpush1.msra.mxu0 %v471
    %1246 = vmatprep.subr.mxu0 0.0
    %1247 = vmatpush1.msra.mxu0 %v472
    %1248 = vmatprep.subr.mxu0 0.0
    %1249 = vmatpush1.msra.mxu0 %v473
    %1250 = vmatprep.subr.mxu0 0.0
    %1251 = vmatpush1.msra.mxu0 %v474
    %1252 = vmatprep.subr.mxu0 0.0
    %1253 = vmatpush1.msra.mxu0 %v475
    %1254 = vmatprep.subr.mxu0 0.0
    %1255 = vmatpush1.msra.mxu0 %v476
    %1256 = vmatprep.subr.mxu0 0.0
    %1257 = vmatpush1.msra.mxu0 %v477
    %1258 = vmatprep.subr.mxu0 0.0
    %1259 = vmatpush1.msra.mxu0 %v478
    %1260 = vmatprep.subr.mxu0 0.0
    %1261 = vmatpush1.msra.mxu0 %v479
    %1262 = vmatprep.subr.mxu0 0.0
    %1263 = vmatpush1.msra.mxu0 %v480
    %1264 = vmatprep.subr.mxu0 0.0
    %1265 = vmatpush1.msra.mxu0 %v481
    %1266 = vmatprep.subr.mxu0 0.0
    %1267 = vmatpush1.msra.mxu0 %v482
    %1268 = vmatprep.subr.mxu0 0.0
    %1269 = vmatpush1.msra.mxu0 %v483
    %1270 = vmatprep.subr.mxu0 0.0
    %1271 = vmatpush1.msra.mxu0 %v484
    %1272 = vmatprep.subr.mxu0 0.0
    %1273 = vmatpush1.msra.mxu0 %v485
    %1274 = vmatprep.subr.mxu0 0.0
    %1275 = vmatpush1.msra.mxu0 %v486
    %1276 = vmatprep.subr.mxu0 0.0
    %1277 = vmatpush1.msra.mxu0 %v487
    %1278 = vmatprep.subr.mxu0 0.0
    %1279 = vmatpush1.msra.mxu0 %v488
    %1280 = vmatprep.subr.mxu0 0.0
    %1281 = vmatpush1.msra.mxu0 %v489
    %1282 = vmatprep.subr.mxu0 0.0
    %1283 = vmatpush1.msra.mxu0 %v490
    %1284 = vmatprep.subr.mxu0 0.0
    %1285 = vmatpush1.msra.mxu0 %v491
    %1286 = vmatprep.subr.mxu0 0.0
    %1287 = vmatpush1.msra.mxu0 %v492
    %1288 = vmatprep.subr.mxu0 0.0
    %1289 = vmatpush1.msra.mxu0 %v493
    %1290 = vmatprep.subr.mxu0 0.0
    %1291 = vmatpush1.msra.mxu0 %v494
    %1292 = vmatprep.subr.mxu0 0.0
    %1293 = vmatpush1.msra.mxu0 %v495
    %1294 = vmatprep.subr.mxu0 0.0
    %1295 = vmatpush1.msra.mxu0 %v496
    %1296 = vmatprep.subr.mxu0 0.0
    %1297 = vmatpush1.msra.mxu0 %v497
    %1298 = vmatprep.subr.mxu0 0.0
    %1299 = vmatpush1.msra.mxu0 %v498
    %1300 = vmatprep.subr.mxu0 0.0
    %1301 = vmatpush1.msra.mxu0 %v499
    %1302 = vmatprep.subr.mxu0 0.0
    %1303 = vmatpush1.msra.mxu0 %v500
    %1304 = vmatprep.mubr.f32.mxu0 %v146
    %1305 = vmatmul.mubr.f32.gmra.mrb[0].mxu0 %v145
    %v1306 = vpop.f32.mrb[0].mxu0
    %v1307 = vadd.f32 %v1237, %v1306
    %v1308 = vpop.f32.mrb[0].mxu0
    %1309 = vdwg.mxu0
    %1310 = vmatprep.subr.mxu0 0.0
    %1311 = vmatpush1.msra.mxu0 %v501
    %1312 = vmatprep.subr.mxu0 0.0
    %1313 = vmatpush1.msra.mxu0 %v502
    %1314 = vmatprep.subr.mxu0 0.0
    %1315 = vmatpush1.msra.mxu0 %v503
    %1316 = vmatprep.subr.mxu0 0.0
    %1317 = vmatpush1.msra.mxu0 %v504
    %1318 = vmatprep.subr.mxu0 0.0
    %1319 = vmatpush1.msra.mxu0 %v505
    %1320 = vmatprep.subr.mxu0 0.0
    %1321 = vmatpush1.msra.mxu0 %v506
    %1322 = vmatprep.subr.mxu0 0.0
    %1323 = vmatpush1.msra.mxu0 %v507
    %1324 = vmatprep.subr.mxu0 0.0
    %1325 = vmatpush1.msra.mxu0 %v508
    %1326 = vmatprep.subr.mxu0 0.0
    %1327 = vmatpush1.msra.mxu0 %v509
    %1328 = vmatprep.subr.mxu0 0.0
    %1329 = vmatpush1.msra.mxu0 %v510
    %1330 = vmatprep.subr.mxu0 0.0
    %1331 = vmatpush1.msra.mxu0 %v511
    %1332 = vmatprep.subr.mxu0 0.0
    %1333 = vmatpush1.msra.mxu0 %v512
    %1334 = vmatprep.subr.mxu0 0.0
    %1335 = vmatpush1.msra.mxu0 %v513
    %1336 = vmatprep.subr.mxu0 0.0
    %1337 = vmatpush1.msra.mxu0 %v514
    %1338 = vmatprep.subr.mxu0 0.0
    %1339 = vmatpush1.msra.mxu0 %v515
    %1340 = vmatprep.subr.mxu0 0.0
    %1341 = vmatpush1.msra.mxu0 %v516
    %1342 = vmatprep.subr.mxu0 0.0
    %1343 = vmatpush1.msra.mxu0 %v517
    %1344 = vmatprep.subr.mxu0 0.0
    %1345 = vmatpush1.msra.mxu0 %v518
    %1346 = vmatprep.subr.mxu0 0.0
    %1347 = vmatpush1.msra.mxu0 %v519
    %1348 = vmatprep.subr.mxu0 0.0
    %1349 = vmatpush1.msra.mxu0 %v520
    %1350 = vmatprep.subr.mxu0 0.0
    %1351 = vmatpush1.msra.mxu0 %v521
    %1352 = vmatprep.subr.mxu0 0.0
    %1353 = vmatpush1.msra.mxu0 %v522
    %1354 = vmatprep.subr.mxu0 0.0
    %1355 = vmatpush1.msra.mxu0 %v523
    %1356 = vmatprep.subr.mxu0 0.0
    %1357 = vmatpush1.msra.mxu0 %v524
    %1358 = vmatprep.subr.mxu0 0.0
    %1359 = vmatpush1.msra.mxu0 %v525
    %1360 = vmatprep.subr.mxu0 0.0
    %1361 = vmatpush1.msra.mxu0 %v526
    %1362 = vmatprep.subr.mxu0 0.0
    %1363 = vmatpush1.msra.mxu0 %v527
    %1364 = vmatprep.subr.mxu0 0.0
    %1365 = vmatpush1.msra.mxu0 %v528
    %1366 = vmatprep.subr.mxu0 0.0
    %1367 = vmatpush1.msra.mxu0 %v529
    %1368 = vmatprep.subr.mxu0 0.0
    %1369 = vmatpush1.msra.mxu0 %v530
    %1370 = vmatprep.subr.mxu0 0.0
    %1371 = vmatpush1.msra.mxu0 %v531
    %1372 = vmatprep.subr.mxu0 0.0
    %1373 = vmatpush1.msra.mxu0 %v532
    %1374 = vmatprep.mubr.f32.mxu0 %v148
    %1375 = vmatmul.mubr.f32.gmra.mrb[0].mxu0 %v147
    %v1376 = vpop.f32.mrb[0].mxu0
    %v1377 = vadd.f32 %v1307, %v1376
    %v1378 = vpop.f32.mrb[0].mxu0
    %1379 = vdwg.mxu0
    %v1380 = vmax.f32 %v1377, 0.0
    %v1381 = vld [vmem:[%s2] sm:$0xff]
    %v1382 = vld [vmem:[%s2 + $0x8] sm:$0xff]
    %v1383 = vld [vmem:[%s2 + $0x10] sm:$0xff]
    %v1384 = vld [vmem:[%s2 + $0x18] sm:$0xff]
    %v1385 = vld [vmem:[%s2 + $0x20] sm:$0xff]
    %v1386 = vld [vmem:[%s2 + $0x28] sm:$0xff]
    %v1387 = vld [vmem:[%s2 + $0x30] sm:$0xff]
    %v1388 = vld [vmem:[%s2 + $0x38] sm:$0xff]
    %v1389 = vld [vmem:[%s2 + $0x40] sm:$0xff]
    %v1390 = vld [vmem:[%s2 + $0x48] sm:$0xff]
    %v1391 = vld [vmem:[%s2 + $0x50] sm:$0xff]
    %v1392 = vld [vmem:[%s2 + $0x58] sm:$0xff]
    %v1393 = vld [vmem:[%s2 + $0x60] sm:$0xff]
    %v1394 = vld [vmem:[%s2 + $0x68] sm:$0xff]
    %v1395 = vld [vmem:[%s2 + $0x70] sm:$0xff]
    %v1396 = vld [vmem:[%s2 + $0x78] sm:$0xff]
    %v1397 = vld [vmem:[#allocation13 + $0x1] sm:$0x1]
    %v1399 = vlaneseq
    %v1400 = vshrl.u32 %v1399, 7
    %v1401 = vsub.s32 0, %v1400
    %v1402 = vrot.slane %v1397, %v1401
    %1404 = vmatprep.subr.mxu0 0.0
    %1405 = vmatpush1.msra.mxu0 %v1381
    %1406 = vmatprep.subr.mxu0 0.0
    %1407 = vmatpush1.msra.mxu0 %v1382
    %1408 = vmatprep.subr.mxu0 0.0
    %1409 = vmatpush1.msra.mxu0 %v1383
    %1410 = vmatprep.subr.mxu0 0.0
    %1411 = vmatpush1.msra.mxu0 %v1384
    %1412 = vmatprep.subr.mxu0 0.0
    %1413 = vmatpush1.msra.mxu0 %v1385
    %1414 = vmatprep.subr.mxu0 0.0
    %1415 = vmatpush1.msra.mxu0 %v1386
    %1416 = vmatprep.subr.mxu0 0.0
    %1417 = vmatpush1.msra.mxu0 %v1387
    %1418 = vmatprep.subr.mxu0 0.0
    %1419 = vmatpush1.msra.mxu0 %v1388
    %1420 = vmatprep.subr.mxu0 0.0
    %1421 = vmatpush1.msra.mxu0 %v1389
    %1422 = vmatprep.subr.mxu0 0.0
    %1423 = vmatpush1.msra.mxu0 %v1390
    %1424 = vmatprep.subr.mxu0 0.0
    %1425 = vmatpush1.msra.mxu0 %v1391
    %1426 = vmatprep.subr.mxu0 0.0
    %1427 = vmatpush1.msra.mxu0 %v1392
    %1428 = vmatprep.subr.mxu0 0.0
    %1429 = vmatpush1.msra.mxu0 %v1393
    %1430 = vmatprep.subr.mxu0 0.0
    %1431 = vmatpush1.msra.mxu0 %v1394
    %1432 = vmatprep.subr.mxu0 0.0
    %1433 = vmatpush1.msra.mxu0 %v1395
    %1434 = vmatprep.subr.mxu0 0.0
    %1435 = vmatpush1.msra.mxu0 %v1396
    %1436 = vmatprep.subr.mxu0 0.0
    %1437 = vmatpush1.msra.mxu0 0.0
    %1438 = vmatprep.subr.mxu0 0.0
    %1439 = vmatpush1.msra.mxu0 0.0
    %1440 = vmatprep.subr.mxu0 0.0
    %1441 = vmatpush1.msra.mxu0 0.0
    %1442 = vmatprep.subr.mxu0 0.0
    %1443 = vmatpush1.msra.mxu0 0.0
    %1444 = vmatprep.subr.mxu0 0.0
    %1445 = vmatpush1.msra.mxu0 0.0
    %1446 = vmatprep.subr.mxu0 0.0
    %1447 = vmatpush1.msra.mxu0 0.0
    %1448 = vmatprep.subr.mxu0 0.0
    %1449 = vmatpush1.msra.mxu0 0.0
    %1450 = vmatprep.subr.mxu0 0.0
    %1451 = vmatpush1.msra.mxu0 0.0
    %1452 = vmatprep.subr.mxu0 0.0
    %1453 = vmatpush1.msra.mxu0 0.0
    %1454 = vmatprep.subr.mxu0 0.0
    %1455 = vmatpush1.msra.mxu0 0.0
    %1456 = vmatprep.subr.mxu0 0.0
    %1457 = vmatpush1.msra.mxu0 0.0
    %1458 = vmatprep.subr.mxu0 0.0
    %1459 = vmatpush1.msra.mxu0 0.0
    %1460 = vmatprep.subr.mxu0 0.0
    %1461 = vmatpush1.msra.mxu0 0.0
    %1462 = vmatprep.subr.mxu0 0.0
    %1463 = vmatpush1.msra.mxu0 0.0
    %1464 = vmatprep.subr.mxu0 0.0
    %1465 = vmatpush1.msra.mxu0 0.0
    %1466 = vmatprep.subr.mxu0 0.0
    %1467 = vmatpush1.msra.mxu0 0.0
    %1468 = vmatprep.mubr.f32.mxu0 0.0
    %1469 = vmatmul.mubr.f32.gmra.mrb[0].mxu0 %v1380
    %v1470 = vpop.f32.mrb[0].mxu0
    %v1471 = vadd.f32 %v1402, %v1470
    %v1472 = vpop.f32.mrb[0].mxu0
    %1473 = vdwg.mxu0
    %v1474 = vmax.f32 %v1471, 0.0
    %v1475 = vld [vmem:[%s3] sm:$0xff]
    %v1476 = vld [vmem:[%s3 + $0x8] sm:$0xff]
    %v1477 = vld [vmem:[%s3 + $0x10] sm:$0xff]
    %v1478 = vld [vmem:[%s3 + $0x18] sm:$0xff]
    %v1479 = vld [vmem:[%s3 + $0x20] sm:$0xff]
    %v1480 = vld [vmem:[%s3 + $0x28] sm:$0xff]
    %v1481 = vld [vmem:[%s3 + $0x30] sm:$0xff]
    %v1482 = vld [vmem:[%s3 + $0x38] sm:$0xff]
    %v1483 = vld [vmem:[#allocation13 + $0x2] sm:$0x1]
    %v1485 = vlaneseq
    %v1486 = vshrl.u32 %v1485, 7
    %v1487 = vsub.s32 0, %v1486
    %v1488 = vrot.slane %v1483, %v1487
    %vm1490 = vcmask 523264
    %v1492 = vsel %vm1490, %v1474, 0
    %1494 = vmatprep.subr.mxu0 0.0
    %1495 = vmatpush1.msra.mxu0 %v1475
    %1496 = vmatprep.subr.mxu0 0.0
    %1497 = vmatpush1.msra.mxu0 %v1476
    %1498 = vmatprep.subr.mxu0 0.0
    %1499 = vmatpush1.msra.mxu0 %v1477
    %1500 = vmatprep.subr.mxu0 0.0
    %1501 = vmatpush1.msra.mxu0 %v1478
    %1502 = vmatprep.subr.mxu0 0.0
    %1503 = vmatpush1.msra.mxu0 %v1479
    %1504 = vmatprep.subr.mxu0 0.0
    %1505 = vmatpush1.msra.mxu0 %v1480
    %1506 = vmatprep.subr.mxu0 0.0
    %1507 = vmatpush1.msra.mxu0 %v1481
    %1508 = vmatprep.subr.mxu0 0.0
    %1509 = vmatpush1.msra.mxu0 %v1482
    %1510 = vmatprep.subr.mxu0 0.0
    %1511 = vmatpush1.msra.mxu0 0.0
    %1512 = vmatprep.subr.mxu0 0.0
    %1513 = vmatpush1.msra.mxu0 0.0
    %1514 = vmatprep.subr.mxu0 0.0
    %1515 = vmatpush1.msra.mxu0 0.0
    %1516 = vmatprep.subr.mxu0 0.0
    %1517 = vmatpush1.msra.mxu0 0.0
    %1518 = vmatprep.subr.mxu0 0.0
    %1519 = vmatpush1.msra.mxu0 0.0
    %1520 = vmatprep.subr.mxu0 0.0
    %1521 = vmatpush1.msra.mxu0 0.0
    %1522 = vmatprep.subr.mxu0 0.0
    %1523 = vmatpush1.msra.mxu0 0.0
    %1524 = vmatprep.subr.mxu0 0.0
    %1525 = vmatpush1.msra.mxu0 0.0
    %1526 = vmatprep.subr.mxu0 0.0
    %1527 = vmatpush1.msra.mxu0 0.0
    %1528 = vmatprep.subr.mxu0 0.0
    %1529 = vmatpush1.msra.mxu0 0.0
    %1530 = vmatprep.subr.mxu0 0.0
    %1531 = vmatpush1.msra.mxu0 0.0
    %1532 = vmatprep.subr.mxu0 0.0
    %1533 = vmatpush1.msra.mxu0 0.0
    %1534 = vmatprep.subr.mxu0 0.0
    %1535 = vmatpush1.msra.mxu0 0.0
    %1536 = vmatprep.subr.mxu0 0.0
    %1537 = vmatpush1.msra.mxu0 0.0
    %1538 = vmatprep.subr.mxu0 0.0
    %1539 = vmatpush1.msra.mxu0 0.0
    %1540 = vmatprep.subr.mxu0 0.0
    %1541 = vmatpush1.msra.mxu0 0.0
    %1542 = vmatprep.subr.mxu0 0.0
    %1543 = vmatpush1.msra.mxu0 0.0
    %1544 = vmatprep.subr.mxu0 0.0
    %1545 = vmatpush1.msra.mxu0 0.0
    %1546 = vmatprep.subr.mxu0 0.0
    %1547 = vmatpush1.msra.mxu0 0.0
    %1548 = vmatprep.subr.mxu0 0.0
    %1549 = vmatpush1.msra.mxu0 0.0
    %1550 = vmatprep.subr.mxu0 0.0
    %1551 = vmatpush1.msra.mxu0 0.0
    %1552 = vmatprep.subr.mxu0 0.0
    %1553 = vmatpush1.msra.mxu0 0.0
    %1554 = vmatprep.subr.mxu0 0.0
    %1555 = vmatpush1.msra.mxu0 0.0
    %1556 = vmatprep.subr.mxu0 0.0
    %1557 = vmatpush1.msra.mxu0 0.0
    %1558 = vmatprep.mubr.f32.mxu0 0.0
    %1559 = vmatmul.mubr.f32.gmra.mrb[0].mxu0 %v1492
    %v1560 = vpop.f32.mrb[0].mxu0
    %v1561 = vadd.f32 %v1488, %v1560
    %v1562 = vpop.f32.mrb[0].mxu0
    %1563 = vdwg.mxu0
    %v1564 = vmax.f32 %v1561, 0.0
    %v1565 = vld [vmem:[%s4] sm:$0xff]
    %v1566 = vld [vmem:[%s4 + $0x8] sm:$0xf]
    %v1567 = vld [vmem:[#allocation13 + $0x3] sm:$0x1]
    %v1569 = vlaneseq
    %v1570 = vshrl.u32 %v1569, 7
    %v1571 = vsub.s32 0, %v1570
    %v1572 = vrot.slane %v1567, %v1571
    %vm1574 = vcmask 97280
    %v1576 = vsel %vm1574, %v1564, 0
    %vm1578 = vcmask 1043456
    %v1580 = vsel %vm1578, %v1566, 0
    %1582 = vmatprep.subr.mxu0 0.0
    %1583 = vmatpush1.msra.mxu0 %v1565
    %1584 = vmatprep.subr.mxu0 0.0
    %1585 = vmatpush1.msra.mxu0 %v1580
    %1586 = vmatprep.subr.mxu0 0.0
    %1587 = vmatpush1.msra.mxu0 0.0
    %1588 = vmatprep.subr.mxu0 0.0
    %1589 = vmatpush1.msra.mxu0 0.0
    %1590 = vmatprep.subr.mxu0 0.0
    %1591 = vmatpush1.msra.mxu0 0.0
    %1592 = vmatprep.subr.mxu0 0.0
    %1593 = vmatpush1.msra.mxu0 0.0
    %1594 = vmatprep.subr.mxu0 0.0
    %1595 = vmatpush1.msra.mxu0 0.0
    %1596 = vmatprep.subr.mxu0 0.0
    %1597 = vmatpush1.msra.mxu0 0.0
    %1598 = vmatprep.subr.mxu0 0.0
    %1599 = vmatpush1.msra.mxu0 0.0
    %1600 = vmatprep.subr.mxu0 0.0
    %1601 = vmatpush1.msra.mxu0 0.0
    %1602 = vmatprep.subr.mxu0 0.0
    %1603 = vmatpush1.msra.mxu0 0.0
    %1604 = vmatprep.subr.mxu0 0.0
    %1605 = vmatpush1.msra.mxu0 0.0
    %1606 = vmatprep.subr.mxu0 0.0
    %1607 = vmatpush1.msra.mxu0 0.0
    %1608 = vmatprep.subr.mxu0 0.0
    %1609 = vmatpush1.msra.mxu0 0.0
    %1610 = vmatprep.subr.mxu0 0.0
    %1611 = vmatpush1.msra.mxu0 0.0
    %1612 = vmatprep.subr.mxu0 0.0
    %1613 = vmatpush1.msra.mxu0 0.0
    %1614 = vmatprep.subr.mxu0 0.0
    %1615 = vmatpush1.msra.mxu0 0.0
    %1616 = vmatprep.subr.mxu0 0.0
    %1617 = vmatpush1.msra.mxu0 0.0
    %1618 = vmatprep.subr.mxu0 0.0
    %1619 = vmatpush1.msra.mxu0 0.0
    %1620 = vmatprep.subr.mxu0 0.0
    %1621 = vmatpush1.msra.mxu0 0.0
    %1622 = vmatprep.subr.mxu0 0.0
    %1623 = vmatpush1.msra.mxu0 0.0
    %1624 = vmatprep.subr.mxu0 0.0
    %1625 = vmatpush1.msra.mxu0 0.0
    %1626 = vmatprep.subr.mxu0 0.0
    %1627 = vmatpush1.msra.mxu0 0.0
    %1628 = vmatprep.subr.mxu0 0.0
    %1629 = vmatpush1.msra.mxu0 0.0
    %1630 = vmatprep.subr.mxu0 0.0
    %1631 = vmatpush1.msra.mxu0 0.0
    %1632 = vmatprep.subr.mxu0 0.0
    %1633 = vmatpush1.msra.mxu0 0.0
    %1634 = vmatprep.subr.mxu0 0.0
    %1635 = vmatpush1.msra.mxu0 0.0
    %1636 = vmatprep.subr.mxu0 0.0
    %1637 = vmatpush1.msra.mxu0 0.0
    %1638 = vmatprep.subr.mxu0 0.0
    %1639 = vmatpush1.msra.mxu0 0.0
    %1640 = vmatprep.subr.mxu0 0.0
    %1641 = vmatpush1.msra.mxu0 0.0
    %1642 = vmatprep.subr.mxu0 0.0
    %1643 = vmatpush1.msra.mxu0 0.0
    %1644 = vmatprep.subr.mxu0 0.0
    %1645 = vmatpush1.msra.mxu0 0.0
    %1646 = vmatprep.mubr.f32.mxu0 0.0
    %1647 = vmatmul.mubr.f32.gmra.mrb[0].mxu0 %v1576
    %v1648 = vpop.f32.mrb[0].mxu0
    %v1649 = vadd.f32 %v1572, %v1648
    %v1650 = vpop.f32.mrb[0].mxu0
    %1651 = vdwg.mxu0
    %v1652 = vld [vmem:[#allocation7] sm:$0x7]
    %v1653 = vld [vmem:[#allocation13 + $0x4] sm:$0x1]
    %v1655 = vlaneseq
    %v1656 = vshrl.u32 %v1655, 7
    %v1657 = vsub.s32 0, %v1656
    %v1658 = vrot.slane %v1653, %v1657
    %vm1660 = vcmask 23552
    %v1662 = vsel %vm1660, %v1649, 0
    %vm1664 = vcmask 1042432
    %v1666 = vsel %vm1664, %v1652, 0
    %1668 = vmatprep.subr.mxu0 0.0
    %1669 = vmatpush1.msra.mxu0 %v1666
    %1670 = vmatprep.subr.mxu0 0.0
    %1671 = vmatpush1.msra.mxu0 0.0
    %1672 = vmatprep.subr.mxu0 0.0
    %1673 = vmatpush1.msra.mxu0 0.0
    %1674 = vmatprep.subr.mxu0 0.0
    %1675 = vmatpush1.msra.mxu0 0.0
    %1676 = vmatprep.subr.mxu0 0.0
    %1677 = vmatpush1.msra.mxu0 0.0
    %1678 = vmatprep.subr.mxu0 0.0
    %1679 = vmatpush1.msra.mxu0 0.0
    %1680 = vmatprep.subr.mxu0 0.0
    %1681 = vmatpush1.msra.mxu0 0.0
    %1682 = vmatprep.subr.mxu0 0.0
    %1683 = vmatpush1.msra.mxu0 0.0
    %1684 = vmatprep.subr.mxu0 0.0
    %1685 = vmatpush1.msra.mxu0 0.0
    %1686 = vmatprep.subr.mxu0 0.0
    %1687 = vmatpush1.msra.mxu0 0.0
    %1688 = vmatprep.subr.mxu0 0.0
    %1689 = vmatpush1.msra.mxu0 0.0
    %1690 = vmatprep.subr.mxu0 0.0
    %1691 = vmatpush1.msra.mxu0 0.0
    %1692 = vmatprep.subr.mxu0 0.0
    %1693 = vmatpush1.msra.mxu0 0.0
    %1694 = vmatprep.subr.mxu0 0.0
    %1695 = vmatpush1.msra.mxu0 0.0
    %1696 = vmatprep.subr.mxu0 0.0
    %1697 = vmatpush1.msra.mxu0 0.0
    %1698 = vmatprep.subr.mxu0 0.0
    %1699 = vmatpush1.msra.mxu0 0.0
    %1700 = vmatprep.subr.mxu0 0.0
    %1701 = vmatpush1.msra.mxu0 0.0
    %1702 = vmatprep.subr.mxu0 0.0
    %1703 = vmatpush1.msra.mxu0 0.0
    %1704 = vmatprep.subr.mxu0 0.0
    %1705 = vmatpush1.msra.mxu0 0.0
    %1706 = vmatprep.subr.mxu0 0.0
    %1707 = vmatpush1.msra.mxu0 0.0
    %1708 = vmatprep.subr.mxu0 0.0
    %1709 = vmatpush1.msra.mxu0 0.0
    %1710 = vmatprep.subr.mxu0 0.0
    %1711 = vmatpush1.msra.mxu0 0.0
    %1712 = vmatprep.subr.mxu0 0.0
    %1713 = vmatpush1.msra.mxu0 0.0
    %1714 = vmatprep.subr.mxu0 0.0
    %1715 = vmatpush1.msra.mxu0 0.0
    %1716 = vmatprep.subr.mxu0 0.0
    %1717 = vmatpush1.msra.mxu0 0.0
    %1718 = vmatprep.subr.mxu0 0.0
    %1719 = vmatpush1.msra.mxu0 0.0
    %1720 = vmatprep.subr.mxu0 0.0
    %1721 = vmatpush1.msra.mxu0 0.0
    %1722 = vmatprep.subr.mxu0 0.0
    %1723 = vmatpush1.msra.mxu0 0.0
    %1724 = vmatprep.subr.mxu0 0.0
    %1725 = vmatpush1.msra.mxu0 0.0
    %1726 = vmatprep.subr.mxu0 0.0
    %1727 = vmatpush1.msra.mxu0 0.0
    %1728 = vmatprep.subr.mxu0 0.0
    %1729 = vmatpush1.msra.mxu0 0.0
    %1730 = vmatprep.subr.mxu0 0.0
    %1731 = vmatpush1.msra.mxu0 0.0
    %1732 = vmatprep.mubr.f32.mxu0 0.0
    %1733 = vmatmul.mubr.f32.gmra.mrb[0].mxu0 %v1662
    %v1734 = vpop.f32.mrb[0].mxu0
    %v1735 = vadd.f32 %v1658, %v1734
    %v1736 = vpop.f32.mrb[0].mxu0
    %1737 = vdwg.mxu0
    %v1738 = vmax.f32 %v1735, 0.0
    %v1739 = vld [vmem:[#allocation8] sm:$0xff]
    %v1740 = vld [vmem:[#allocation8 + $0x8] sm:$0xf]
    %v1741 = vld [vmem:[#allocation13 + $0x5] sm:$0x1]
    %v1743 = vlaneseq
    %v1744 = vshrl.u32 %v1743, 7
    %v1745 = vsub.s32 0, %v1744
    %v1746 = vrot.slane %v1741, %v1745
    %v1749 = vsel %vm1574, %v1738, 0
    %v1752 = vsel %vm1578, %v1740, 0
    %1754 = vmatprep.subr.mxu0 0.0
    %1755 = vmatpush1.msra.mxu0 %v1739
    %1756 = vmatprep.subr.mxu0 0.0
    %1757 = vmatpush1.msra.mxu0 %v1752
    %1758 = vmatprep.subr.mxu0 0.0
    %1759 = vmatpush1.msra.mxu0 0.0
    %1760 = vmatprep.subr.mxu0 0.0
    %1761 = vmatpush1.msra.mxu0 0.0
    %1762 = vmatprep.subr.mxu0 0.0
    %1763 = vmatpush1.msra.mxu0 0.0
    %1764 = vmatprep.subr.mxu0 0.0
    %1765 = vmatpush1.msra.mxu0 0.0
    %1766 = vmatprep.subr.mxu0 0.0
    %1767 = vmatpush1.msra.mxu0 0.0
    %1768 = vmatprep.subr.mxu0 0.0
    %1769 = vmatpush1.msra.mxu0 0.0
    %1770 = vmatprep.subr.mxu0 0.0
    %1771 = vmatpush1.msra.mxu0 0.0
    %1772 = vmatprep.subr.mxu0 0.0
    %1773 = vmatpush1.msra.mxu0 0.0
    %1774 = vmatprep.subr.mxu0 0.0
    %1775 = vmatpush1.msra.mxu0 0.0
    %1776 = vmatprep.subr.mxu0 0.0
    %1777 = vmatpush1.msra.mxu0 0.0
    %1778 = vmatprep.subr.mxu0 0.0
    %1779 = vmatpush1.msra.mxu0 0.0
    %1780 = vmatprep.subr.mxu0 0.0
    %1781 = vmatpush1.msra.mxu0 0.0
    %1782 = vmatprep.subr.mxu0 0.0
    %1783 = vmatpush1.msra.mxu0 0.0
    %1784 = vmatprep.subr.mxu0 0.0
    %1785 = vmatpush1.msra.mxu0 0.0
    %1786 = vmatprep.subr.mxu0 0.0
    %1787 = vmatpush1.msra.mxu0 0.0
    %1788 = vmatprep.subr.mxu0 0.0
    %1789 = vmatpush1.msra.mxu0 0.0
    %1790 = vmatprep.subr.mxu0 0.0
    %1791 = vmatpush1.msra.mxu0 0.0
    %1792 = vmatprep.subr.mxu0 0.0
    %1793 = vmatpush1.msra.mxu0 0.0
    %1794 = vmatprep.subr.mxu0 0.0
    %1795 = vmatpush1.msra.mxu0 0.0
    %1796 = vmatprep.subr.mxu0 0.0
    %1797 = vmatpush1.msra.mxu0 0.0
    %1798 = vmatprep.subr.mxu0 0.0
    %1799 = vmatpush1.msra.mxu0 0.0
    %1800 = vmatprep.subr.mxu0 0.0
    %1801 = vmatpush1.msra.mxu0 0.0
    %1802 = vmatprep.subr.mxu0 0.0
    %1803 = vmatpush1.msra.mxu0 0.0
    %1804 = vmatprep.subr.mxu0 0.0
    %1805 = vmatpush1.msra.mxu0 0.0
    %1806 = vmatprep.subr.mxu0 0.0
    %1807 = vmatpush1.msra.mxu0 0.0
    %1808 = vmatprep.subr.mxu0 0.0
    %1809 = vmatpush1.msra.mxu0 0.0
    %1810 = vmatprep.subr.mxu0 0.0
    %1811 = vmatpush1.msra.mxu0 0.0
    %1812 = vmatprep.subr.mxu0 0.0
    %1813 = vmatpush1.msra.mxu0 0.0
    %1814 = vmatprep.subr.mxu0 0.0
    %1815 = vmatpush1.msra.mxu0 0.0
    %1816 = vmatprep.subr.mxu0 0.0
    %1817 = vmatpush1.msra.mxu0 0.0
    %1818 = vmatprep.mubr.f32.mxu0 0.0
    %1819 = vmatmul.mubr.f32.gmra.mrb[0].mxu0 %v1749
    %v1820 = vpop.f32.mrb[0].mxu0
    %v1821 = vadd.f32 %v1746, %v1820
    %v1822 = vpop.f32.mrb[0].mxu0
    %1823 = vdwg.mxu0
    %v1824 = vmax.f32 %v1821, 0.0
    %v1825 = vld [vmem:[#allocation10] sm:$0xff]
    %v1826 = vld [vmem:[#allocation10 + $0x8] sm:$0xff]
    %v1827 = vld [vmem:[#allocation10 + $0x10] sm:$0xff]
    %v1828 = vld [vmem:[#allocation10 + $0x18] sm:$0xff]
    %v1829 = vld [vmem:[#allocation10 + $0x20] sm:$0xff]
    %v1830 = vld [vmem:[#allocation10 + $0x28] sm:$0xff]
    %v1831 = vld [vmem:[#allocation10 + $0x30] sm:$0xff]
    %v1832 = vld [vmem:[#allocation10 + $0x38] sm:$0xff]
    %v1833 = vld [vmem:[#allocation13 + $0x6] sm:$0x1]
    %v1835 = vlaneseq
    %v1836 = vshrl.u32 %v1835, 7
    %v1837 = vsub.s32 0, %v1836
    %v1838 = vrot.slane %v1833, %v1837
    %v1841 = vsel %vm1490, %v1824, 0
    %1843 = vmatprep.subr.mxu0 0.0
    %1844 = vmatpush1.msra.mxu0 %v1825
    %1845 = vmatprep.subr.mxu0 0.0
    %1846 = vmatpush1.msra.mxu0 %v1826
    %1847 = vmatprep.subr.mxu0 0.0
    %1848 = vmatpush1.msra.mxu0 %v1827
    %1849 = vmatprep.subr.mxu0 0.0
    %1850 = vmatpush1.msra.mxu0 %v1828
    %1851 = vmatprep.subr.mxu0 0.0
    %1852 = vmatpush1.msra.mxu0 %v1829
    %1853 = vmatprep.subr.mxu0 0.0
    %1854 = vmatpush1.msra.mxu0 %v1830
    %1855 = vmatprep.subr.mxu0 0.0
    %1856 = vmatpush1.msra.mxu0 %v1831
    %1857 = vmatprep.subr.mxu0 0.0
    %1858 = vmatpush1.msra.mxu0 %v1832
    %1859 = vmatprep.subr.mxu0 0.0
    %1860 = vmatpush1.msra.mxu0 0.0
    %1861 = vmatprep.subr.mxu0 0.0
    %1862 = vmatpush1.msra.mxu0 0.0
    %1863 = vmatprep.subr.mxu0 0.0
    %1864 = vmatpush1.msra.mxu0 0.0
    %1865 = vmatprep.subr.mxu0 0.0
    %1866 = vmatpush1.msra.mxu0 0.0
    %1867 = vmatprep.subr.mxu0 0.0
    %1868 = vmatpush1.msra.mxu0 0.0
    %1869 = vmatprep.subr.mxu0 0.0
    %1870 = vmatpush1.msra.mxu0 0.0
    %1871 = vmatprep.subr.mxu0 0.0
    %1872 = vmatpush1.msra.mxu0 0.0
    %1873 = vmatprep.subr.mxu0 0.0
    %1874 = vmatpush1.msra.mxu0 0.0
    %1875 = vmatprep.subr.mxu0 0.0
    %1876 = vmatpush1.msra.mxu0 0.0
    %1877 = vmatprep.subr.mxu0 0.0
    %1878 = vmatpush1.msra.mxu0 0.0
    %1879 = vmatprep.subr.mxu0 0.0
    %1880 = vmatpush1.msra.mxu0 0.0
    %1881 = vmatprep.subr.mxu0 0.0
    %1882 = vmatpush1.msra.mxu0 0.0
    %1883 = vmatprep.subr.mxu0 0.0
    %1884 = vmatpush1.msra.mxu0 0.0
    %1885 = vmatprep.subr.mxu0 0.0
    %1886 = vmatpush1.msra.mxu0 0.0
    %1887 = vmatprep.subr.mxu0 0.0
    %1888 = vmatpush1.msra.mxu0 0.0
    %1889 = vmatprep.subr.mxu0 0.0
    %1890 = vmatpush1.msra.mxu0 0.0
    %1891 = vmatprep.subr.mxu0 0.0
    %1892 = vmatpush1.msra.mxu0 0.0
    %1893 = vmatprep.subr.mxu0 0.0
    %1894 = vmatpush1.msra.mxu0 0.0
    %1895 = vmatprep.subr.mxu0 0.0
    %1896 = vmatpush1.msra.mxu0 0.0
    %1897 = vmatprep.subr.mxu0 0.0
    %1898 = vmatpush1.msra.mxu0 0.0
    %1899 = vmatprep.subr.mxu0 0.0
    %1900 = vmatpush1.msra.mxu0 0.0
    %1901 = vmatprep.subr.mxu0 0.0
    %1902 = vmatpush1.msra.mxu0 0.0
    %1903 = vmatprep.subr.mxu0 0.0
    %1904 = vmatpush1.msra.mxu0 0.0
    %1905 = vmatprep.subr.mxu0 0.0
    %1906 = vmatpush1.msra.mxu0 0.0
    %1907 = vmatprep.mubr.f32.mxu0 0.0
    %1908 = vmatmul.mubr.f32.gmra.mrb[0].mxu0 %v1841
    %v1909 = vpop.f32.mrb[0].mxu0
    %v1910 = vadd.f32 %v1838, %v1909
    %v1911 = vpop.f32.mrb[0].mxu0
    %1912 = vdwg.mxu0
    %v1913 = vmax.f32 %v1910, 0.0
    %v1914 = vld [vmem:[#allocation11] sm:$0xff]
    %v1915 = vld [vmem:[#allocation11 + $0x8] sm:$0xff]
    %v1916 = vld [vmem:[#allocation11 + $0x10] sm:$0xff]
    %v1917 = vld [vmem:[#allocation11 + $0x18] sm:$0xff]
    %v1918 = vld [vmem:[#allocation11 + $0x20] sm:$0xff]
    %v1919 = vld [vmem:[#allocation11 + $0x28] sm:$0xff]
    %v1920 = vld [vmem:[#allocation11 + $0xc0] sm:$0xff]
    %v1921 = vld [vmem:[#allocation11 + $0xc8] sm:$0xff]
    %v1922 = vld [vmem:[#allocation11 + $0xd0] sm:$0xff]
    %v1923 = vld [vmem:[#allocation11 + $0xd8] sm:$0xff]
    %v1924 = vld [vmem:[#allocation11 + $0xe0] sm:$0xff]
    %v1925 = vld [vmem:[#allocation11 + $0xe8] sm:$0xff]
    %v1926 = vld [vmem:[#allocation11 + $0x180] sm:$0xff]
    %v1927 = vld [vmem:[#allocation11 + $0x188] sm:$0xff]
    %v1928 = vld [vmem:[#allocation11 + $0x190] sm:$0xff]
    %v1929 = vld [vmem:[#allocation11 + $0x198] sm:$0xff]
    %v1930 = vld [vmem:[#allocation11 + $0x1a0] sm:$0xff]
    %v1931 = vld [vmem:[#allocation11 + $0x1a8] sm:$0xff]
    %v1932 = vld [vmem:[#allocation11 + $0x240] sm:$0xff]
    %v1933 = vld [vmem:[#allocation11 + $0x248] sm:$0xff]
    %v1934 = vld [vmem:[#allocation11 + $0x250] sm:$0xff]
    %v1935 = vld [vmem:[#allocation11 + $0x258] sm:$0xff]
    %v1936 = vld [vmem:[#allocation11 + $0x260] sm:$0xff]
    %v1937 = vld [vmem:[#allocation11 + $0x268] sm:$0xff]
    %v1938 = vld [vmem:[#allocation11 + $0x300] sm:$0xff]
    %v1939 = vld [vmem:[#allocation11 + $0x308] sm:$0xff]
    %v1940 = vld [vmem:[#allocation11 + $0x310] sm:$0xff]
    %v1941 = vld [vmem:[#allocation11 + $0x318] sm:$0xff]
    %v1942 = vld [vmem:[#allocation11 + $0x320] sm:$0xff]
    %v1943 = vld [vmem:[#allocation11 + $0x328] sm:$0xff]
    %v1944 = vld [vmem:[#allocation11 + $0x3c0] sm:$0xff]
    %v1945 = vld [vmem:[#allocation11 + $0x3c8] sm:$0xff]
    %v1946 = vld [vmem:[#allocation11 + $0x3d0] sm:$0xff]
    %v1947 = vld [vmem:[#allocation11 + $0x3d8] sm:$0xff]
    %v1948 = vld [vmem:[#allocation11 + $0x3e0] sm:$0xff]
    %v1949 = vld [vmem:[#allocation11 + $0x3e8] sm:$0xff]
    %v1950 = vld [vmem:[#allocation11 + $0x480] sm:$0xff]
    %v1951 = vld [vmem:[#allocation11 + $0x488] sm:$0xff]
    %v1952 = vld [vmem:[#allocation11 + $0x490] sm:$0xff]
    %v1953 = vld [vmem:[#allocation11 + $0x498] sm:$0xff]
    %v1954 = vld [vmem:[#allocation11 + $0x4a0] sm:$0xff]
    %v1955 = vld [vmem:[#allocation11 + $0x4a8] sm:$0xff]
    %v1956 = vld [vmem:[#allocation11 + $0x540] sm:$0xff]
    %v1957 = vld [vmem:[#allocation11 + $0x548] sm:$0xff]
    %v1958 = vld [vmem:[#allocation11 + $0x550] sm:$0xff]
    %v1959 = vld [vmem:[#allocation11 + $0x558] sm:$0xff]
    %v1960 = vld [vmem:[#allocation11 + $0x560] sm:$0xff]
    %v1961 = vld [vmem:[#allocation11 + $0x568] sm:$0xff]
    %v1962 = vld [vmem:[#allocation11 + $0x600] sm:$0xff]
    %v1963 = vld [vmem:[#allocation11 + $0x608] sm:$0xff]
    %v1964 = vld [vmem:[#allocation11 + $0x610] sm:$0xff]
    %v1965 = vld [vmem:[#allocation11 + $0x618] sm:$0xff]
    %v1966 = vld [vmem:[#allocation11 + $0x620] sm:$0xff]
    %v1967 = vld [vmem:[#allocation11 + $0x628] sm:$0xff]
    %v1968 = vld [vmem:[#allocation11 + $0x6c0] sm:$0xff]
    %v1969 = vld [vmem:[#allocation11 + $0x6c8] sm:$0xff]
    %v1970 = vld [vmem:[#allocation11 + $0x6d0] sm:$0xff]
    %v1971 = vld [vmem:[#allocation11 + $0x6d8] sm:$0xff]
    %v1972 = vld [vmem:[#allocation11 + $0x6e0] sm:$0xff]
    %v1973 = vld [vmem:[#allocation11 + $0x6e8] sm:$0xff]
    %v1974 = vld [vmem:[#allocation11 + $0x780] sm:$0xff]
    %v1975 = vld [vmem:[#allocation11 + $0x788] sm:$0xff]
    %v1976 = vld [vmem:[#allocation11 + $0x790] sm:$0xff]
    %v1977 = vld [vmem:[#allocation11 + $0x798] sm:$0xff]
    %v1978 = vld [vmem:[#allocation11 + $0x7a0] sm:$0xff]
    %v1979 = vld [vmem:[#allocation11 + $0x7a8] sm:$0xff]
    %v1980 = vld [vmem:[#allocation11 + $0x840] sm:$0xff]
    %v1981 = vld [vmem:[#allocation11 + $0x848] sm:$0xff]
    %v1982 = vld [vmem:[#allocation11 + $0x850] sm:$0xff]
    %v1983 = vld [vmem:[#allocation11 + $0x858] sm:$0xff]
    %v1984 = vld [vmem:[#allocation11 + $0x860] sm:$0xff]
    %v1985 = vld [vmem:[#allocation11 + $0x868] sm:$0xff]
    %v1986 = vld [vmem:[#allocation11 + $0x900] sm:$0xff]
    %v1987 = vld [vmem:[#allocation11 + $0x908] sm:$0xff]
    %v1988 = vld [vmem:[#allocation11 + $0x910] sm:$0xff]
    %v1989 = vld [vmem:[#allocation11 + $0x918] sm:$0xff]
    %v1990 = vld [vmem:[#allocation11 + $0x920] sm:$0xff]
    %v1991 = vld [vmem:[#allocation11 + $0x928] sm:$0xff]
    %v1992 = vld [vmem:[#allocation11 + $0x9c0] sm:$0xff]
    %v1993 = vld [vmem:[#allocation11 + $0x9c8] sm:$0xff]
    %v1994 = vld [vmem:[#allocation11 + $0x9d0] sm:$0xff]
    %v1995 = vld [vmem:[#allocation11 + $0x9d8] sm:$0xff]
    %v1996 = vld [vmem:[#allocation11 + $0x9e0] sm:$0xff]
    %v1997 = vld [vmem:[#allocation11 + $0x9e8] sm:$0xff]
    %v1998 = vld [vmem:[#allocation11 + $0xa80] sm:$0xff]
    %v1999 = vld [vmem:[#allocation11 + $0xa88] sm:$0xff]
    %v2000 = vld [vmem:[#allocation11 + $0xa90] sm:$0xff]
    %v2001 = vld [vmem:[#allocation11 + $0xa98] sm:$0xff]
    %v2002 = vld [vmem:[#allocation11 + $0xaa0] sm:$0xff]
    %v2003 = vld [vmem:[#allocation11 + $0xaa8] sm:$0xff]
    %v2004 = vld [vmem:[#allocation11 + $0xb40] sm:$0xff]
    %v2005 = vld [vmem:[#allocation11 + $0xb48] sm:$0xff]
    %v2006 = vld [vmem:[#allocation11 + $0xb50] sm:$0xff]
    %v2007 = vld [vmem:[#allocation11 + $0xb58] sm:$0xff]
    %v2008 = vld [vmem:[#allocation11 + $0xb60] sm:$0xff]
    %v2009 = vld [vmem:[#allocation11 + $0xb68] sm:$0xff]
    %v2010 = vld [vmem:[#allocation13 + $0x7] sm:$0x3f]
    %v2012 = vlaneseq
    %v2013 = vshrl.u32 %v2012, 7
    %v2014 = vsub.s32 0, %v2013
    %v2015 = vrot.slane %v2010, %v2014
    %v2016 = vlaneseq
    %v2017 = vshrl.u32 %v2016, 7
    %v2018 = vsub.s32 1, %v2017
    %v2019 = vrot.slane %v2010, %v2018
    %v2020 = vlaneseq
    %v2021 = vshrl.u32 %v2020, 7
    %v2022 = vsub.s32 2, %v2021
    %v2023 = vrot.slane %v2010, %v2022
    %v2024 = vlaneseq
    %v2025 = vshrl.u32 %v2024, 7
    %v2026 = vsub.s32 3, %v2025
    %v2027 = vrot.slane %v2010, %v2026
    %v2028 = vlaneseq
    %v2029 = vshrl.u32 %v2028, 7
    %v2030 = vsub.s32 4, %v2029
    %v2031 = vrot.slane %v2010, %v2030
    %v2032 = vlaneseq
    %v2033 = vshrl.u32 %v2032, 7
    %v2034 = vsub.s32 5, %v2033
    %v2035 = vrot.slane %v2010, %v2034
    %2042 = vmatprep.subr.mxu0 %v1915
    %2043 = vmatpush1.msra.mxu0 %v1914
    %2044 = vmatprep.subr.mxu0 %v1921
    %2045 = vmatpush1.msra.mxu0 %v1920
    %2046 = vmatprep.subr.mxu0 %v1927
    %2047 = vmatpush1.msra.mxu0 %v1926
    %2048 = vmatprep.subr.mxu0 %v1933
    %2049 = vmatpush1.msra.mxu0 %v1932
    %2050 = vmatprep.subr.mxu0 %v1939
    %2051 = vmatpush1.msra.mxu0 %v1938
    %2052 = vmatprep.subr.mxu0 %v1945
    %2053 = vmatpush1.msra.mxu0 %v1944
    %2054 = vmatprep.subr.mxu0 %v1951
    %2055 = vmatpush1.msra.mxu0 %v1950
    %2056 = vmatprep.subr.mxu0 %v1957
    %2057 = vmatpush1.msra.mxu0 %v1956
    %2058 = vmatprep.subr.mxu0 %v1963
    %2059 = vmatpush1.msra.mxu0 %v1962
    %2060 = vmatprep.subr.mxu0 %v1969
    %2061 = vmatpush1.msra.mxu0 %v1968
    %2062 = vmatprep.subr.mxu0 %v1975
    %2063 = vmatpush1.msra.mxu0 %v1974
    %2064 = vmatprep.subr.mxu0 %v1981
    %2065 = vmatpush1.msra.mxu0 %v1980
    %2066 = vmatprep.subr.mxu0 %v1987
    %2067 = vmatpush1.msra.mxu0 %v1986
    %2068 = vmatprep.subr.mxu0 %v1993
    %2069 = vmatpush1.msra.mxu0 %v1992
    %2070 = vmatprep.subr.mxu0 %v1999
    %2071 = vmatpush1.msra.mxu0 %v1998
    %2072 = vmatprep.subr.mxu0 %v2005
    %2073 = vmatpush1.msra.mxu0 %v2004
    %2074 = vmatprep.subr.mxu0 0.0
    %2075 = vmatpush1.msra.mxu0 0.0
    %2076 = vmatprep.subr.mxu0 0.0
    %2077 = vmatpush1.msra.mxu0 0.0
    %2078 = vmatprep.subr.mxu0 0.0
    %2079 = vmatpush1.msra.mxu0 0.0
    %2080 = vmatprep.subr.mxu0 0.0
    %2081 = vmatpush1.msra.mxu0 0.0
    %2082 = vmatprep.subr.mxu0 0.0
    %2083 = vmatpush1.msra.mxu0 0.0
    %2084 = vmatprep.subr.mxu0 0.0
    %2085 = vmatpush1.msra.mxu0 0.0
    %2086 = vmatprep.subr.mxu0 0.0
    %2087 = vmatpush1.msra.mxu0 0.0
    %2088 = vmatprep.subr.mxu0 0.0
    %2089 = vmatpush1.msra.mxu0 0.0
    %2090 = vmatprep.subr.mxu0 0.0
    %2091 = vmatpush1.msra.mxu0 0.0
    %2092 = vmatprep.subr.mxu0 0.0
    %2093 = vmatpush1.msra.mxu0 0.0
    %2094 = vmatprep.subr.mxu0 0.0
    %2095 = vmatpush1.msra.mxu0 0.0
    %2096 = vmatprep.subr.mxu0 0.0
    %2097 = vmatpush1.msra.mxu0 0.0
    %2098 = vmatprep.subr.mxu0 0.0
    %2099 = vmatpush1.msra.mxu0 0.0
    %2100 = vmatprep.subr.mxu0 0.0
    %2101 = vmatpush1.msra.mxu0 0.0
    %2102 = vmatprep.subr.mxu0 0.0
    %2103 = vmatpush1.msra.mxu0 0.0
    %2104 = vmatprep.subr.mxu0 0.0
    %2105 = vmatpush1.msra.mxu0 0.0
    %2106 = vmatprep.mubr.f32.mxu0 0.0
    %2107 = vmatmul.mubr.f32.gmra.mrb[0].mxu0 %v1913
    %v2108 = vpop.f32.mrb[0].mxu0
    %v2109 = vadd.f32 %v2015, %v2108
    %v2110 = vpop.f32.mrb[0].mxu0
    %v2111 = vadd.f32 %v2019, %v2110
    %2112 = vdwg.mxu0
    %2113 = vmatprep.subr.mxu0 %v1917
    %2114 = vmatpush1.msra.mxu0 %v1916
    %2115 = vmatprep.subr.mxu0 %v1923
    %2116 = vmatpush1.msra.mxu0 %v1922
    %2117 = vmatprep.subr.mxu0 %v1929
    %2118 = vmatpush1.msra.mxu0 %v1928
    %2119 = vmatprep.subr.mxu0 %v1935
    %2120 = vmatpush1.msra.mxu0 %v1934
    %2121 = vmatprep.subr.mxu0 %v1941
    %2122 = vmatpush1.msra.mxu0 %v1940
    %2123 = vmatprep.subr.mxu0 %v1947
    %2124 = vmatpush1.msra.mxu0 %v1946
    %2125 = vmatprep.subr.mxu0 %v1953
    %2126 = vmatpush1.msra.mxu0 %v1952
    %2127 = vmatprep.subr.mxu0 %v1959
    %2128 = vmatpush1.msra.mxu0 %v1958
    %2129 = vmatprep.subr.mxu0 %v1965
    %2130 = vmatpush1.msra.mxu0 %v1964
    %2131 = vmatprep.subr.mxu0 %v1971
    %2132 = vmatpush1.msra.mxu0 %v1970
    %2133 = vmatprep.subr.mxu0 %v1977
    %2134 = vmatpush1.msra.mxu0 %v1976
    %2135 = vmatprep.subr.mxu0 %v1983
    %2136 = vmatpush1.msra.mxu0 %v1982
    %2137 = vmatprep.subr.mxu0 %v1989
    %2138 = vmatpush1.msra.mxu0 %v1988
    %2139 = vmatprep.subr.mxu0 %v1995
    %2140 = vmatpush1.msra.mxu0 %v1994
    %2141 = vmatprep.subr.mxu0 %v2001
    %2142 = vmatpush1.msra.mxu0 %v2000
    %2143 = vmatprep.subr.mxu0 %v2007
    %2144 = vmatpush1.msra.mxu0 %v2006
    %2145 = vmatprep.subr.mxu0 0.0
    %2146 = vmatpush1.msra.mxu0 0.0
    %2147 = vmatprep.subr.mxu0 0.0
    %2148 = vmatpush1.msra.mxu0 0.0
    %2149 = vmatprep.subr.mxu0 0.0
    %2150 = vmatpush1.msra.mxu0 0.0
    %2151 = vmatprep.subr.mxu0 0.0
    %2152 = vmatpush1.msra.mxu0 0.0
    %2153 = vmatprep.subr.mxu0 0.0
    %2154 = vmatpush1.msra.mxu0 0.0
    %2155 = vmatprep.subr.mxu0 0.0
    %2156 = vmatpush1.msra.mxu0 0.0
    %2157 = vmatprep.subr.mxu0 0.0
    %2158 = vmatpush1.msra.mxu0 0.0
    %2159 = vmatprep.subr.mxu0 0.0
    %2160 = vmatpush1.msra.mxu0 0.0
    %2161 = vmatprep.subr.mxu0 0.0
    %2162 = vmatpush1.msra.mxu0 0.0
    %2163 = vmatprep.subr.mxu0 0.0
    %2164 = vmatpush1.msra.mxu0 0.0
    %2165 = vmatprep.subr.mxu0 0.0
    %2166 = vmatpush1.msra.mxu0 0.0
    %2167 = vmatprep.subr.mxu0 0.0
    %2168 = vmatpush1.msra.mxu0 0.0
    %2169 = vmatprep.subr.mxu0 0.0
    %2170 = vmatpush1.msra.mxu0 0.0
    %2171 = vmatprep.subr.mxu0 0.0
    %2172 = vmatpush1.msra.mxu0 0.0
    %2173 = vmatprep.subr.mxu0 0.0
    %2174 = vmatpush1.msra.mxu0 0.0
    %2175 = vmatprep.subr.mxu0 0.0
    %2176 = vmatpush1.msra.mxu0 0.0
    %2177 = vmatprep.mubr.f32.mxu0 0.0
    %2178 = vmatmul.mubr.f32.gmra.mrb[0].mxu0 %v1913
    %v2179 = vpop.f32.mrb[0].mxu0
    %v2180 = vadd.f32 %v2023, %v2179
    %v2181 = vpop.f32.mrb[0].mxu0
    %v2182 = vadd.f32 %v2027, %v2181
    %2183 = vdwg.mxu0
    %2184 = vmatprep.subr.mxu0 %v1919
    %2185 = vmatpush1.msra.mxu0 %v1918
    %2186 = vmatprep.subr.mxu0 %v1925
    %2187 = vmatpush1.msra.mxu0 %v1924
    %2188 = vmatprep.subr.mxu0 %v1931
    %2189 = vmatpush1.msra.mxu0 %v1930
    %2190 = vmatprep.subr.mxu0 %v1937
    %2191 = vmatpush1.msra.mxu0 %v1936
    %2192 = vmatprep.subr.mxu0 %v1943
    %2193 = vmatpush1.msra.mxu0 %v1942
    %2194 = vmatprep.subr.mxu0 %v1949
    %2195 = vmatpush1.msra.mxu0 %v1948
    %2196 = vmatprep.subr.mxu0 %v1955
    %2197 = vmatpush1.msra.mxu0 %v1954
    %2198 = vmatprep.subr.mxu0 %v1961
    %2199 = vmatpush1.msra.mxu0 %v1960
    %2200 = vmatprep.subr.mxu0 %v1967
    %2201 = vmatpush1.msra.mxu0 %v1966
    %2202 = vmatprep.subr.mxu0 %v1973
    %2203 = vmatpush1.msra.mxu0 %v1972
    %2204 = vmatprep.subr.mxu0 %v1979
    %2205 = vmatpush1.msra.mxu0 %v1978
    %2206 = vmatprep.subr.mxu0 %v1985
    %2207 = vmatpush1.msra.mxu0 %v1984
    %2208 = vmatprep.subr.mxu0 %v1991
    %2209 = vmatpush1.msra.mxu0 %v1990
    %2210 = vmatprep.subr.mxu0 %v1997
    %2211 = vmatpush1.msra.mxu0 %v1996
    %2212 = vmatprep.subr.mxu0 %v2003
    %2213 = vmatpush1.msra.mxu0 %v2002
    %2214 = vmatprep.subr.mxu0 %v2009
    %2215 = vmatpush1.msra.mxu0 %v2008
    %2216 = vmatprep.subr.mxu0 0.0
    %2217 = vmatpush1.msra.mxu0 0.0
    %2218 = vmatprep.subr.mxu0 0.0
    %2219 = vmatpush1.msra.mxu0 0.0
    %2220 = vmatprep.subr.mxu0 0.0
    %2221 = vmatpush1.msra.mxu0 0.0
    %2222 = vmatprep.subr.mxu0 0.0
    %2223 = vmatpush1.msra.mxu0 0.0
    %2224 = vmatprep.subr.mxu0 0.0
    %2225 = vmatpush1.msra.mxu0 0.0
    %2226 = vmatprep.subr.mxu0 0.0
    %2227 = vmatpush1.msra.mxu0 0.0
    %2228 = vmatprep.subr.mxu0 0.0
    %2229 = vmatpush1.msra.mxu0 0.0
    %2230 = vmatprep.subr.mxu0 0.0
    %2231 = vmatpush1.msra.mxu0 0.0
    %2232 = vmatprep.subr.mxu0 0.0
    %2233 = vmatpush1.msra.mxu0 0.0
    %2234 = vmatprep.subr.mxu0 0.0
    %2235 = vmatpush1.msra.mxu0 0.0
    %2236 = vmatprep.subr.mxu0 0.0
    %2237 = vmatpush1.msra.mxu0 0.0
    %2238 = vmatprep.subr.mxu0 0.0
    %2239 = vmatpush1.msra.mxu0 0.0
    %2240 = vmatprep.subr.mxu0 0.0
    %2241 = vmatpush1.msra.mxu0 0.0
    %2242 = vmatprep.subr.mxu0 0.0
    %2243 = vmatpush1.msra.mxu0 0.0
    %2244 = vmatprep.subr.mxu0 0.0
    %2245 = vmatpush1.msra.mxu0 0.0
    %2246 = vmatprep.subr.mxu0 0.0
    %2247 = vmatpush1.msra.mxu0 0.0
    %2248 = vmatprep.mubr.f32.mxu0 0.0
    %2249 = vmatmul.mubr.f32.gmra.mrb[0].mxu0 %v1913
    %v2250 = vpop.f32.mrb[0].mxu0
    %v2251 = vadd.f32 %v2031, %v2250
    %v2252 = vpop.f32.mrb[0].mxu0
    %v2253 = vadd.f32 %v2035, %v2252
    %2254 = vdwg.mxu0
    %v2255 = vtanh.pop %v2109
    %v2256 = vtanh.pop %v2111
    %v2257 = vtanh.pop %v2180
    %v2258 = vtanh.pop %v2182
    %v2259 = vtanh.pop %v2251
    %v2260 = vtanh.pop %v2253
    %2261 = vst [vmem:[#allocation14] sm:$0xff] %v2255
    %2262 = vst [vmem:[#allocation14 + $0x8] sm:$0xff] %v2256
    %2263 = vst [vmem:[#allocation14 + $0x10] sm:$0xff] %v2257
    %2264 = vst [vmem:[#allocation14 + $0x18] sm:$0xff] %v2258
    %2265 = vst [vmem:[#allocation14 + $0x20] sm:$0xff] %v2259
    %2266 = vst [vmem:[#allocation14 + $0x28] sm:$0xff] %v2260
    %v2267 = vld [vmem:[#allocation11 + $0x30] sm:$0xff]
    %v2268 = vld [vmem:[#allocation11 + $0x38] sm:$0xff]
    %v2269 = vld [vmem:[#allocation11 + $0x40] sm:$0xff]
    %v2270 = vld [vmem:[#allocation11 + $0x48] sm:$0xff]
    %v2271 = vld [vmem:[#allocation11 + $0x50] sm:$0xff]
    %v2272 = vld [vmem:[#allocation11 + $0x58] sm:$0xff]
    %v2273 = vld [vmem:[#allocation11 + $0xf0] sm:$0xff]
    %v2274 = vld [vmem:[#allocation11 + $0xf8] sm:$0xff]
    %v2275 = vld [vmem:[#allocation11 + $0x100] sm:$0xff]
    %v2276 = vld [vmem:[#allocation11 + $0x108] sm:$0xff]
    %v2277 = vld [vmem:[#allocation11 + $0x110] sm:$0xff]
    %v2278 = vld [vmem:[#allocation11 + $0x118] sm:$0xff]
    %v2279 = vld [vmem:[#allocation11 + $0x1b0] sm:$0xff]
    %v2280 = vld [vmem:[#allocation11 + $0x1b8] sm:$0xff]
    %v2281 = vld [vmem:[#allocation11 + $0x1c0] sm:$0xff]
    %v2282 = vld [vmem:[#allocation11 + $0x1c8] sm:$0xff]
    %v2283 = vld [vmem:[#allocation11 + $0x1d0] sm:$0xff]
    %v2284 = vld [vmem:[#allocation11 + $0x1d8] sm:$0xff]
    %v2285 = vld [vmem:[#allocation11 + $0x270] sm:$0xff]
    %v2286 = vld [vmem:[#allocation11 + $0x278] sm:$0xff]
    %v2287 = vld [vmem:[#allocation11 + $0x280] sm:$0xff]
    %v2288 = vld [vmem:[#allocation11 + $0x288] sm:$0xff]
    %v2289 = vld [vmem:[#allocation11 + $0x290] sm:$0xff]
    %v2290 = vld [vmem:[#allocation11 + $0x298] sm:$0xff]
    %v2291 = vld [vmem:[#allocation11 + $0x330] sm:$0xff]
    %v2292 = vld [vmem:[#allocation11 + $0x338] sm:$0xff]
    %v2293 = vld [vmem:[#allocation11 + $0x340] sm:$0xff]
    %v2294 = vld [vmem:[#allocation11 + $0x348] sm:$0xff]
    %v2295 = vld [vmem:[#allocation11 + $0x350] sm:$0xff]
    %v2296 = vld [vmem:[#allocation11 + $0x358] sm:$0xff]
    %v2297 = vld [vmem:[#allocation11 + $0x3f0] sm:$0xff]
    %v2298 = vld [vmem:[#allocation11 + $0x3f8] sm:$0xff]
    %v2299 = vld [vmem:[#allocation11 + $0x400] sm:$0xff]
    %v2300 = vld [vmem:[#allocation11 + $0x408] sm:$0xff]
    %v2301 = vld [vmem:[#allocation11 + $0x410] sm:$0xff]
    %v2302 = vld [vmem:[#allocation11 + $0x418] sm:$0xff]
    %v2303 = vld [vmem:[#allocation11 + $0x4b0] sm:$0xff]
    %v2304 = vld [vmem:[#allocation11 + $0x4b8] sm:$0xff]
    %v2305 = vld [vmem:[#allocation11 + $0x4c0] sm:$0xff]
    %v2306 = vld [vmem:[#allocation11 + $0x4c8] sm:$0xff]
    %v2307 = vld [vmem:[#allocation11 + $0x4d0] sm:$0xff]
    %v2308 = vld [vmem:[#allocation11 + $0x4d8] sm:$0xff]
    %v2309 = vld [vmem:[#allocation11 + $0x570] sm:$0xff]
    %v2310 = vld [vmem:[#allocation11 + $0x578] sm:$0xff]
    %v2311 = vld [vmem:[#allocation11 + $0x580] sm:$0xff]
    %v2312 = vld [vmem:[#allocation11 + $0x588] sm:$0xff]
    %v2313 = vld [vmem:[#allocation11 + $0x590] sm:$0xff]
    %v2314 = vld [vmem:[#allocation11 + $0x598] sm:$0xff]
    %v2315 = vld [vmem:[#allocation11 + $0x630] sm:$0xff]
    %v2316 = vld [vmem:[#allocation11 + $0x638] sm:$0xff]
    %v2317 = vld [vmem:[#allocation11 + $0x640] sm:$0xff]
    %v2318 = vld [vmem:[#allocation11 + $0x648] sm:$0xff]
    %v2319 = vld [vmem:[#allocation11 + $0x650] sm:$0xff]
    %v2320 = vld [vmem:[#allocation11 + $0x658] sm:$0xff]
    %v2321 = vld [vmem:[#allocation11 + $0x6f0] sm:$0xff]
    %v2322 = vld [vmem:[#allocation11 + $0x6f8] sm:$0xff]
    %v2323 = vld [vmem:[#allocation11 + $0x700] sm:$0xff]
    %v2324 = vld [vmem:[#allocation11 + $0x708] sm:$0xff]
    %v2325 = vld [vmem:[#allocation11 + $0x710] sm:$0xff]
    %v2326 = vld [vmem:[#allocation11 + $0x718] sm:$0xff]
    %v2327 = vld [vmem:[#allocation11 + $0x7b0] sm:$0xff]
    %v2328 = vld [vmem:[#allocation11 + $0x7b8] sm:$0xff]
    %v2329 = vld [vmem:[#allocation11 + $0x7c0] sm:$0xff]
    %v2330 = vld [vmem:[#allocation11 + $0x7c8] sm:$0xff]
    %v2331 = vld [vmem:[#allocation11 + $0x7d0] sm:$0xff]
    %v2332 = vld [vmem:[#allocation11 + $0x7d8] sm:$0xff]
    %v2333 = vld [vmem:[#allocation11 + $0x870] sm:$0xff]
    %v2334 = vld [vmem:[#allocation11 + $0x878] sm:$0xff]
    %v2335 = vld [vmem:[#allocation11 + $0x880] sm:$0xff]
    %v2336 = vld [vmem:[#allocation11 + $0x888] sm:$0xff]
    %v2337 = vld [vmem:[#allocation11 + $0x890] sm:$0xff]
    %v2338 = vld [vmem:[#allocation11 + $0x898] sm:$0xff]
    %v2339 = vld [vmem:[#allocation11 + $0x930] sm:$0xff]
    %v2340 = vld [vmem:[#allocation11 + $0x938] sm:$0xff]
    %v2341 = vld [vmem:[#allocation11 + $0x940] sm:$0xff]
    %v2342 = vld [vmem:[#allocation11 + $0x948] sm:$0xff]
    %v2343 = vld [vmem:[#allocation11 + $0x950] sm:$0xff]
    %v2344 = vld [vmem:[#allocation11 + $0x958] sm:$0xff]
    %v2345 = vld [vmem:[#allocation11 + $0x9f0] sm:$0xff]
    %v2346 = vld [vmem:[#allocation11 + $0x9f8] sm:$0xff]
    %v2347 = vld [vmem:[#allocation11 + $0xa00] sm:$0xff]
    %v2348 = vld [vmem:[#allocation11 + $0xa08] sm:$0xff]
    %v2349 = vld [vmem:[#allocation11 + $0xa10] sm:$0xff]
    %v2350 = vld [vmem:[#allocation11 + $0xa18] sm:$0xff]
    %v2351 = vld [vmem:[#allocation11 + $0xab0] sm:$0xff]
    %v2352 = vld [vmem:[#allocation11 + $0xab8] sm:$0xff]
    %v2353 = vld [vmem:[#allocation11 + $0xac0] sm:$0xff]
    %v2354 = vld [vmem:[#allocation11 + $0xac8] sm:$0xff]
    %v2355 = vld [vmem:[#allocation11 + $0xad0] sm:$0xff]
    %v2356 = vld [vmem:[#allocation11 + $0xad8] sm:$0xff]
    %v2357 = vld [vmem:[#allocation11 + $0xb70] sm:$0xff]
    %v2358 = vld [vmem:[#allocation11 + $0xb78] sm:$0xff]
    %v2359 = vld [vmem:[#allocation11 + $0xb80] sm:$0xff]
    %v2360 = vld [vmem:[#allocation11 + $0xb88] sm:$0xff]
    %v2361 = vld [vmem:[#allocation11 + $0xb90] sm:$0xff]
    %v2362 = vld [vmem:[#allocation11 + $0xb98] sm:$0xff]
    %v2363 = vld [vmem:[#allocation13 + $0xd] sm:$0x3f]
    %v2365 = vlaneseq
    %v2366 = vshrl.u32 %v2365, 7
    %v2367 = vsub.s32 0, %v2366
    %v2368 = vrot.slane %v2363, %v2367
    %v2369 = vlaneseq
    %v2370 = vshrl.u32 %v2369, 7
    %v2371 = vsub.s32 1, %v2370
    %v2372 = vrot.slane %v2363, %v2371
    %v2373 = vlaneseq
    %v2374 = vshrl.u32 %v2373, 7
    %v2375 = vsub.s32 2, %v2374
    %v2376 = vrot.slane %v2363, %v2375
    %v2377 = vlaneseq
    %v2378 = vshrl.u32 %v2377, 7
    %v2379 = vsub.s32 3, %v2378
    %v2380 = vrot.slane %v2363, %v2379
    %v2381 = vlaneseq
    %v2382 = vshrl.u32 %v2381, 7
    %v2383 = vsub.s32 4, %v2382
    %v2384 = vrot.slane %v2363, %v2383
    %v2385 = vlaneseq
    %v2386 = vshrl.u32 %v2385, 7
    %v2387 = vsub.s32 5, %v2386
    %v2388 = vrot.slane %v2363, %v2387
    %2395 = vmatprep.subr.mxu0 %v2268
    %2396 = vmatpush1.msra.mxu0 %v2267
    %2397 = vmatprep.subr.mxu0 %v2274
    %2398 = vmatpush1.msra.mxu0 %v2273
    %2399 = vmatprep.subr.mxu0 %v2280
    %2400 = vmatpush1.msra.mxu0 %v2279
    %2401 = vmatprep.subr.mxu0 %v2286
    %2402 = vmatpush1.msra.mxu0 %v2285
    %2403 = vmatprep.subr.mxu0 %v2292
    %2404 = vmatpush1.msra.mxu0 %v2291
    %2405 = vmatprep.subr.mxu0 %v2298
    %2406 = vmatpush1.msra.mxu0 %v2297
    %2407 = vmatprep.subr.mxu0 %v2304
    %2408 = vmatpush1.msra.mxu0 %v2303
    %2409 = vmatprep.subr.mxu0 %v2310
    %2410 = vmatpush1.msra.mxu0 %v2309
    %2411 = vmatprep.subr.mxu0 %v2316
    %2412 = vmatpush1.msra.mxu0 %v2315
    %2413 = vmatprep.subr.mxu0 %v2322
    %2414 = vmatpush1.msra.mxu0 %v2321
    %2415 = vmatprep.subr.mxu0 %v2328
    %2416 = vmatpush1.msra.mxu0 %v2327
    %2417 = vmatprep.subr.mxu0 %v2334
    %2418 = vmatpush1.msra.mxu0 %v2333
    %2419 = vmatprep.subr.mxu0 %v2340
    %2420 = vmatpush1.msra.mxu0 %v2339
    %2421 = vmatprep.subr.mxu0 %v2346
    %2422 = vmatpush1.msra.mxu0 %v2345
    %2423 = vmatprep.subr.mxu0 %v2352
    %2424 = vmatpush1.msra.mxu0 %v2351
    %2425 = vmatprep.subr.mxu0 %v2358
    %2426 = vmatpush1.msra.mxu0 %v2357
    %2427 = vmatprep.subr.mxu0 0.0
    %2428 = vmatpush1.msra.mxu0 0.0
    %2429 = vmatprep.subr.mxu0 0.0
    %2430 = vmatpush1.msra.mxu0 0.0
    %2431 = vmatprep.subr.mxu0 0.0
    %2432 = vmatpush1.msra.mxu0 0.0
    %2433 = vmatprep.subr.mxu0 0.0
    %2434 = vmatpush1.msra.mxu0 0.0
    %2435 = vmatprep.subr.mxu0 0.0
    %2436 = vmatpush1.msra.mxu0 0.0
    %2437 = vmatprep.subr.mxu0 0.0
    %2438 = vmatpush1.msra.mxu0 0.0
    %2439 = vmatprep.subr.mxu0 0.0
    %2440 = vmatpush1.msra.mxu0 0.0
    %2441 = vmatprep.subr.mxu0 0.0
    %2442 = vmatpush1.msra.mxu0 0.0
    %2443 = vmatprep.subr.mxu0 0.0
    %2444 = vmatpush1.msra.mxu0 0.0
    %2445 = vmatprep.subr.mxu0 0.0
    %2446 = vmatpush1.msra.mxu0 0.0
    %2447 = vmatprep.subr.mxu0 0.0
    %2448 = vmatpush1.msra.mxu0 0.0
    %2449 = vmatprep.subr.mxu0 0.0
    %2450 = vmatpush1.msra.mxu0 0.0
    %2451 = vmatprep.subr.mxu0 0.0
    %2452 = vmatpush1.msra.mxu0 0.0
    %2453 = vmatprep.subr.mxu0 0.0
    %2454 = vmatpush1.msra.mxu0 0.0
    %2455 = vmatprep.subr.mxu0 0.0
    %2456 = vmatpush1.msra.mxu0 0.0
    %2457 = vmatprep.subr.mxu0 0.0
    %2458 = vmatpush1.msra.mxu0 0.0
    %2459 = vmatprep.mubr.f32.mxu0 0.0
    %2460 = vmatmul.mubr.f32.gmra.mrb[0].mxu0 %v1913
    %v2461 = vpop.f32.mrb[0].mxu0
    %v2462 = vadd.f32 %v2368, %v2461
    %v2463 = vpop.f32.mrb[0].mxu0
    %v2464 = vadd.f32 %v2372, %v2463
    %2465 = vdwg.mxu0
    %2466 = vmatprep.subr.mxu0 %v2270
    %2467 = vmatpush1.msra.mxu0 %v2269
    %2468 = vmatprep.subr.mxu0 %v2276
    %2469 = vmatpush1.msra.mxu0 %v2275
    %2470 = vmatprep.subr.mxu0 %v2282
    %2471 = vmatpush1.msra.mxu0 %v2281
    %2472 = vmatprep.subr.mxu0 %v2288
    %2473 = vmatpush1.msra.mxu0 %v2287
    %2474 = vmatprep.subr.mxu0 %v2294
    %2475 = vmatpush1.msra.mxu0 %v2293
    %2476 = vmatprep.subr.mxu0 %v2300
    %2477 = vmatpush1.msra.mxu0 %v2299
    %2478 = vmatprep.subr.mxu0 %v2306
    %2479 = vmatpush1.msra.mxu0 %v2305
    %2480 = vmatprep.subr.mxu0 %v2312
    %2481 = vmatpush1.msra.mxu0 %v2311
    %2482 = vmatprep.subr.mxu0 %v2318
    %2483 = vmatpush1.msra.mxu0 %v2317
    %2484 = vmatprep.subr.mxu0 %v2324
    %2485 = vmatpush1.msra.mxu0 %v2323
    %2486 = vmatprep.subr.mxu0 %v2330
    %2487 = vmatpush1.msra.mxu0 %v2329
    %2488 = vmatprep.subr.mxu0 %v2336
    %2489 = vmatpush1.msra.mxu0 %v2335
    %2490 = vmatprep.subr.mxu0 %v2342
    %2491 = vmatpush1.msra.mxu0 %v2341
    %2492 = vmatprep.subr.mxu0 %v2348
    %2493 = vmatpush1.msra.mxu0 %v2347
    %2494 = vmatprep.subr.mxu0 %v2354
    %2495 = vmatpush1.msra.mxu0 %v2353
    %2496 = vmatprep.subr.mxu0 %v2360
    %2497 = vmatpush1.msra.mxu0 %v2359
    %2498 = vmatprep.subr.mxu0 0.0
    %2499 = vmatpush1.msra.mxu0 0.0
    %2500 = vmatprep.subr.mxu0 0.0
    %2501 = vmatpush1.msra.mxu0 0.0
    %2502 = vmatprep.subr.mxu0 0.0
    %2503 = vmatpush1.msra.mxu0 0.0
    %2504 = vmatprep.subr.mxu0 0.0
    %2505 = vmatpush1.msra.mxu0 0.0
    %2506 = vmatprep.subr.mxu0 0.0
    %2507 = vmatpush1.msra.mxu0 0.0
    %2508 = vmatprep.subr.mxu0 0.0
    %2509 = vmatpush1.msra.mxu0 0.0
    %2510 = vmatprep.subr.mxu0 0.0
    %2511 = vmatpush1.msra.mxu0 0.0
    %2512 = vmatprep.subr.mxu0 0.0
    %2513 = vmatpush1.msra.mxu0 0.0
    %2514 = vmatprep.subr.mxu0 0.0
    %2515 = vmatpush1.msra.mxu0 0.0
    %2516 = vmatprep.subr.mxu0 0.0
    %2517 = vmatpush1.msra.mxu0 0.0
    %2518 = vmatprep.subr.mxu0 0.0
    %2519 = vmatpush1.msra.mxu0 0.0
    %2520 = vmatprep.subr.mxu0 0.0
    %2521 = vmatpush1.msra.mxu0 0.0
    %2522 = vmatprep.subr.mxu0 0.0
    %2523 = vmatpush1.msra.mxu0 0.0
    %2524 = vmatprep.subr.mxu0 0.0
    %2525 = vmatpush1.msra.mxu0 0.0
    %2526 = vmatprep.subr.mxu0 0.0
    %2527 = vmatpush1.msra.mxu0 0.0
    %2528 = vmatprep.subr.mxu0 0.0
    %2529 = vmatpush1.msra.mxu0 0.0
    %2530 = vmatprep.mubr.f32.mxu0 0.0
    %2531 = vmatmul.mubr.f32.gmra.mrb[0].mxu0 %v1913
    %v2532 = vpop.f32.mrb[0].mxu0
    %v2533 = vadd.f32 %v2376, %v2532
    %v2534 = vpop.f32.mrb[0].mxu0
    %v2535 = vadd.f32 %v2380, %v2534
    %2536 = vdwg.mxu0
    %2537 = vmatprep.subr.mxu0 %v2272
    %2538 = vmatpush1.msra.mxu0 %v2271
    %2539 = vmatprep.subr.mxu0 %v2278
    %2540 = vmatpush1.msra.mxu0 %v2277
    %2541 = vmatprep.subr.mxu0 %v2284
    %2542 = vmatpush1.msra.mxu0 %v2283
    %2543 = vmatprep.subr.mxu0 %v2290
    %2544 = vmatpush1.msra.mxu0 %v2289
    %2545 = vmatprep.subr.mxu0 %v2296
    %2546 = vmatpush1.msra.mxu0 %v2295
    %2547 = vmatprep.subr.mxu0 %v2302
    %2548 = vmatpush1.msra.mxu0 %v2301
    %2549 = vmatprep.subr.mxu0 %v2308
    %2550 = vmatpush1.msra.mxu0 %v2307
    %2551 = vmatprep.subr.mxu0 %v2314
    %2552 = vmatpush1.msra.mxu0 %v2313
    %2553 = vmatprep.subr.mxu0 %v2320
    %2554 = vmatpush1.msra.mxu0 %v2319
    %2555 = vmatprep.subr.mxu0 %v2326
    %2556 = vmatpush1.msra.mxu0 %v2325
    %2557 = vmatprep.subr.mxu0 %v2332
    %2558 = vmatpush1.msra.mxu0 %v2331
    %2559 = vmatprep.subr.mxu0 %v2338
    %2560 = vmatpush1.msra.mxu0 %v2337
    %2561 = vmatprep.subr.mxu0 %v2344
    %2562 = vmatpush1.msra.mxu0 %v2343
    %2563 = vmatprep.subr.mxu0 %v2350
    %2564 = vmatpush1.msra.mxu0 %v2349
    %2565 = vmatprep.subr.mxu0 %v2356
    %2566 = vmatpush1.msra.mxu0 %v2355
    %2567 = vmatprep.subr.mxu0 %v2362
    %2568 = vmatpush1.msra.mxu0 %v2361
    %2569 = vmatprep.subr.mxu0 0.0
    %2570 = vmatpush1.msra.mxu0 0.0
    %2571 = vmatprep.subr.mxu0 0.0
    %2572 = vmatpush1.msra.mxu0 0.0
    %2573 = vmatprep.subr.mxu0 0.0
    %2574 = vmatpush1.msra.mxu0 0.0
    %2575 = vmatprep.subr.mxu0 0.0
    %2576 = vmatpush1.msra.mxu0 0.0
    %2577 = vmatprep.subr.mxu0 0.0
    %2578 = vmatpush1.msra.mxu0 0.0
    %2579 = vmatprep.subr.mxu0 0.0
    %2580 = vmatpush1.msra.mxu0 0.0
    %2581 = vmatprep.subr.mxu0 0.0
    %2582 = vmatpush1.msra.mxu0 0.0
    %2583 = vmatprep.subr.mxu0 0.0
    %2584 = vmatpush1.msra.mxu0 0.0
    %2585 = vmatprep.subr.mxu0 0.0
    %2586 = vmatpush1.msra.mxu0 0.0
    %2587 = vmatprep.subr.mxu0 0.0
    %2588 = vmatpush1.msra.mxu0 0.0
    %2589 = vmatprep.subr.mxu0 0.0
    %2590 = vmatpush1.msra.mxu0 0.0
    %2591 = vmatprep.subr.mxu0 0.0
    %2592 = vmatpush1.msra.mxu0 0.0
    %2593 = vmatprep.subr.mxu0 0.0
    %2594 = vmatpush1.msra.mxu0 0.0
    %2595 = vmatprep.subr.mxu0 0.0
    %2596 = vmatpush1.msra.mxu0 0.0
    %2597 = vmatprep.subr.mxu0 0.0
    %2598 = vmatpush1.msra.mxu0 0.0
    %2599 = vmatprep.subr.mxu0 0.0
    %2600 = vmatpush1.msra.mxu0 0.0
    %2601 = vmatprep.mubr.f32.mxu0 0.0
    %2602 = vmatmul.mubr.f32.gmra.mrb[0].mxu0 %v1913
    %v2603 = vpop.f32.mrb[0].mxu0
    %v2604 = vadd.f32 %v2384, %v2603
    %v2605 = vpop.f32.mrb[0].mxu0
    %v2606 = vadd.f32 %v2388, %v2605
    %2607 = vdwg.mxu0
    %v2608 = vtanh.pop %v2462
    %v2609 = vtanh.pop %v2464
    %v2610 = vtanh.pop %v2533
    %v2611 = vtanh.pop %v2535
    %v2612 = vtanh.pop %v2604
    %v2613 = vtanh.pop %v2606
    %2614 = vst [vmem:[#allocation14 + $0x30] sm:$0xff] %v2608
    %2615 = vst [vmem:[#allocation14 + $0x38] sm:$0xff] %v2609
    %2616 = vst [vmem:[#allocation14 + $0x40] sm:$0xff] %v2610
    %2617 = vst [vmem:[#allocation14 + $0x48] sm:$0xff] %v2611
    %2618 = vst [vmem:[#allocation14 + $0x50] sm:$0xff] %v2612
    %2619 = vst [vmem:[#allocation14 + $0x58] sm:$0xff] %v2613
    %v2620 = vld [vmem:[#allocation11 + $0x60] sm:$0xff]
    %v2621 = vld [vmem:[#allocation11 + $0x68] sm:$0xff]
    %v2622 = vld [vmem:[#allocation11 + $0x70] sm:$0xff]
    %v2623 = vld [vmem:[#allocation11 + $0x78] sm:$0xff]
    %v2624 = vld [vmem:[#allocation11 + $0x80] sm:$0xff]
    %v2625 = vld [vmem:[#allocation11 + $0x88] sm:$0xff]
    %v2626 = vld [vmem:[#allocation11 + $0x120] sm:$0xff]
    %v2627 = vld [vmem:[#allocation11 + $0x128] sm:$0xff]
    %v2628 = vld [vmem:[#allocation11 + $0x130] sm:$0xff]
    %v2629 = vld [vmem:[#allocation11 + $0x138] sm:$0xff]
    %v2630 = vld [vmem:[#allocation11 + $0x140] sm:$0xff]
    %v2631 = vld [vmem:[#allocation11 + $0x148] sm:$0xff]
    %v2632 = vld [vmem:[#allocation11 + $0x1e0] sm:$0xff]
    %v2633 = vld [vmem:[#allocation11 + $0x1e8] sm:$0xff]
    %v2634 = vld [vmem:[#allocation11 + $0x1f0] sm:$0xff]
    %v2635 = vld [vmem:[#allocation11 + $0x1f8] sm:$0xff]
    %v2636 = vld [vmem:[#allocation11 + $0x200] sm:$0xff]
    %v2637 = vld [vmem:[#allocation11 + $0x208] sm:$0xff]
    %v2638 = vld [vmem:[#allocation11 + $0x2a0] sm:$0xff]
    %v2639 = vld [vmem:[#allocation11 + $0x2a8] sm:$0xff]
    %v2640 = vld [vmem:[#allocation11 + $0x2b0] sm:$0xff]
    %v2641 = vld [vmem:[#allocation11 + $0x2b8] sm:$0xff]
    %v2642 = vld [vmem:[#allocation11 + $0x2c0] sm:$0xff]
    %v2643 = vld [vmem:[#allocation11 + $0x2c8] sm:$0xff]
    %v2644 = vld [vmem:[#allocation11 + $0x360] sm:$0xff]
    %v2645 = vld [vmem:[#allocation11 + $0x368] sm:$0xff]
    %v2646 = vld [vmem:[#allocation11 + $0x370] sm:$0xff]
    %v2647 = vld [vmem:[#allocation11 + $0x378] sm:$0xff]
    %v2648 = vld [vmem:[#allocation11 + $0x380] sm:$0xff]
    %v2649 = vld [vmem:[#allocation11 + $0x388] sm:$0xff]
    %v2650 = vld [vmem:[#allocation11 + $0x420] sm:$0xff]
    %v2651 = vld [vmem:[#allocation11 + $0x428] sm:$0xff]
    %v2652 = vld [vmem:[#allocation11 + $0x430] sm:$0xff]
    %v2653 = vld [vmem:[#allocation11 + $0x438] sm:$0xff]
    %v2654 = vld [vmem:[#allocation11 + $0x440] sm:$0xff]
    %v2655 = vld [vmem:[#allocation11 + $0x448] sm:$0xff]
    %v2656 = vld [vmem:[#allocation11 + $0x4e0] sm:$0xff]
    %v2657 = vld [vmem:[#allocation11 + $0x4e8] sm:$0xff]
    %v2658 = vld [vmem:[#allocation11 + $0x4f0] sm:$0xff]
    %v2659 = vld [vmem:[#allocation11 + $0x4f8] sm:$0xff]
    %v2660 = vld [vmem:[#allocation11 + $0x500] sm:$0xff]
    %v2661 = vld [vmem:[#allocation11 + $0x508] sm:$0xff]
    %v2662 = vld [vmem:[#allocation11 + $0x5a0] sm:$0xff]
    %v2663 = vld [vmem:[#allocation11 + $0x5a8] sm:$0xff]
    %v2664 = vld [vmem:[#allocation11 + $0x5b0] sm:$0xff]
    %v2665 = vld [vmem:[#allocation11 + $0x5b8] sm:$0xff]
    %v2666 = vld [vmem:[#allocation11 + $0x5c0] sm:$0xff]
    %v2667 = vld [vmem:[#allocation11 + $0x5c8] sm:$0xff]
    %v2668 = vld [vmem:[#allocation11 + $0x660] sm:$0xff]
    %v2669 = vld [vmem:[#allocation11 + $0x668] sm:$0xff]
    %v2670 = vld [vmem:[#allocation11 + $0x670] sm:$0xff]
    %v2671 = vld [vmem:[#allocation11 + $0x678] sm:$0xff]
    %v2672 = vld [vmem:[#allocation11 + $0x680] sm:$0xff]
    %v2673 = vld [vmem:[#allocation11 + $0x688] sm:$0xff]
    %v2674 = vld [vmem:[#allocation11 + $0x720] sm:$0xff]
    %v2675 = vld [vmem:[#allocation11 + $0x728] sm:$0xff]
    %v2676 = vld [vmem:[#allocation11 + $0x730] sm:$0xff]
    %v2677 = vld [vmem:[#allocation11 + $0x738] sm:$0xff]
    %v2678 = vld [vmem:[#allocation11 + $0x740] sm:$0xff]
    %v2679 = vld [vmem:[#allocation11 + $0x748] sm:$0xff]
    %v2680 = vld [vmem:[#allocation11 + $0x7e0] sm:$0xff]
    %v2681 = vld [vmem:[#allocation11 + $0x7e8] sm:$0xff]
    %v2682 = vld [vmem:[#allocation11 + $0x7f0] sm:$0xff]
    %v2683 = vld [vmem:[#allocation11 + $0x7f8] sm:$0xff]
    %v2684 = vld [vmem:[#allocation11 + $0x800] sm:$0xff]
    %v2685 = vld [vmem:[#allocation11 + $0x808] sm:$0xff]
    %v2686 = vld [vmem:[#allocation11 + $0x8a0] sm:$0xff]
    %v2687 = vld [vmem:[#allocation11 + $0x8a8] sm:$0xff]
    %v2688 = vld [vmem:[#allocation11 + $0x8b0] sm:$0xff]
    %v2689 = vld [vmem:[#allocation11 + $0x8b8] sm:$0xff]
    %v2690 = vld [vmem:[#allocation11 + $0x8c0] sm:$0xff]
    %v2691 = vld [vmem:[#allocation11 + $0x8c8] sm:$0xff]
    %v2692 = vld [vmem:[#allocation11 + $0x960] sm:$0xff]
    %v2693 = vld [vmem:[#allocation11 + $0x968] sm:$0xff]
    %v2694 = vld [vmem:[#allocation11 + $0x970] sm:$0xff]
    %v2695 = vld [vmem:[#allocation11 + $0x978] sm:$0xff]
    %v2696 = vld [vmem:[#allocation11 + $0x980] sm:$0xff]
    %v2697 = vld [vmem:[#allocation11 + $0x988] sm:$0xff]
    %v2698 = vld [vmem:[#allocation11 + $0xa20] sm:$0xff]
    %v2699 = vld [vmem:[#allocation11 + $0xa28] sm:$0xff]
    %v2700 = vld [vmem:[#allocation11 + $0xa30] sm:$0xff]
    %v2701 = vld [vmem:[#allocation11 + $0xa38] sm:$0xff]
    %v2702 = vld [vmem:[#allocation11 + $0xa40] sm:$0xff]
    %v2703 = vld [vmem:[#allocation11 + $0xa48] sm:$0xff]
    %v2704 = vld [vmem:[#allocation11 + $0xae0] sm:$0xff]
    %v2705 = vld [vmem:[#allocation11 + $0xae8] sm:$0xff]
    %v2706 = vld [vmem:[#allocation11 + $0xaf0] sm:$0xff]
    %v2707 = vld [vmem:[#allocation11 + $0xaf8] sm:$0xff]
    %v2708 = vld [vmem:[#allocation11 + $0xb00] sm:$0xff]
    %v2709 = vld [vmem:[#allocation11 + $0xb08] sm:$0xff]
    %v2710 = vld [vmem:[#allocation11 + $0xba0] sm:$0xff]
    %v2711 = vld [vmem:[#allocation11 + $0xba8] sm:$0xff]
    %v2712 = vld [vmem:[#allocation11 + $0xbb0] sm:$0xff]
    %v2713 = vld [vmem:[#allocation11 + $0xbb8] sm:$0xff]
    %v2714 = vld [vmem:[#allocation11 + $0xbc0] sm:$0xff]
    %v2715 = vld [vmem:[#allocation11 + $0xbc8] sm:$0xff]
    %v2716 = vld [vmem:[#allocation13 + $0x13] sm:$0x3f]
    %v2718 = vlaneseq
    %v2719 = vshrl.u32 %v2718, 7
    %v2720 = vsub.s32 0, %v2719
    %v2721 = vrot.slane %v2716, %v2720
    %v2722 = vlaneseq
    %v2723 = vshrl.u32 %v2722, 7
    %v2724 = vsub.s32 1, %v2723
    %v2725 = vrot.slane %v2716, %v2724
    %v2726 = vlaneseq
    %v2727 = vshrl.u32 %v2726, 7
    %v2728 = vsub.s32 2, %v2727
    %v2729 = vrot.slane %v2716, %v2728
    %v2730 = vlaneseq
    %v2731 = vshrl.u32 %v2730, 7
    %v2732 = vsub.s32 3, %v2731
    %v2733 = vrot.slane %v2716, %v2732
    %v2734 = vlaneseq
    %v2735 = vshrl.u32 %v2734, 7
    %v2736 = vsub.s32 4, %v2735
    %v2737 = vrot.slane %v2716, %v2736
    %v2738 = vlaneseq
    %v2739 = vshrl.u32 %v2738, 7
    %v2740 = vsub.s32 5, %v2739
    %v2741 = vrot.slane %v2716, %v2740
    %2748 = vmatprep.subr.mxu0 %v2621
    %2749 = vmatpush1.msra.mxu0 %v2620
    %2750 = vmatprep.subr.mxu0 %v2627
    %2751 = vmatpush1.msra.mxu0 %v2626
    %2752 = vmatprep.subr.mxu0 %v2633
    %2753 = vmatpush1.msra.mxu0 %v2632
    %2754 = vmatprep.subr.mxu0 %v2639
    %2755 = vmatpush1.msra.mxu0 %v2638
    %2756 = vmatprep.subr.mxu0 %v2645
    %2757 = vmatpush1.msra.mxu0 %v2644
    %2758 = vmatprep.subr.mxu0 %v2651
    %2759 = vmatpush1.msra.mxu0 %v2650
    %2760 = vmatprep.subr.mxu0 %v2657
    %2761 = vmatpush1.msra.mxu0 %v2656
    %2762 = vmatprep.subr.mxu0 %v2663
    %2763 = vmatpush1.msra.mxu0 %v2662
    %2764 = vmatprep.subr.mxu0 %v2669
    %2765 = vmatpush1.msra.mxu0 %v2668
    %2766 = vmatprep.subr.mxu0 %v2675
    %2767 = vmatpush1.msra.mxu0 %v2674
    %2768 = vmatprep.subr.mxu0 %v2681
    %2769 = vmatpush1.msra.mxu0 %v2680
    %2770 = vmatprep.subr.mxu0 %v2687
    %2771 = vmatpush1.msra.mxu0 %v2686
    %2772 = vmatprep.subr.mxu0 %v2693
    %2773 = vmatpush1.msra.mxu0 %v2692
    %2774 = vmatprep.subr.mxu0 %v2699
    %2775 = vmatpush1.msra.mxu0 %v2698
    %2776 = vmatprep.subr.mxu0 %v2705
    %2777 = vmatpush1.msra.mxu0 %v2704
    %2778 = vmatprep.subr.mxu0 %v2711
    %2779 = vmatpush1.msra.mxu0 %v2710
    %2780 = vmatprep.subr.mxu0 0.0
    %2781 = vmatpush1.msra.mxu0 0.0
    %2782 = vmatprep.subr.mxu0 0.0
    %2783 = vmatpush1.msra.mxu0 0.0
    %2784 = vmatprep.subr.mxu0 0.0
    %2785 = vmatpush1.msra.mxu0 0.0
    %2786 = vmatprep.subr.mxu0 0.0
    %2787 = vmatpush1.msra.mxu0 0.0
    %2788 = vmatprep.subr.mxu0 0.0
    %2789 = vmatpush1.msra.mxu0 0.0
    %2790 = vmatprep.subr.mxu0 0.0
    %2791 = vmatpush1.msra.mxu0 0.0
    %2792 = vmatprep.subr.mxu0 0.0
    %2793 = vmatpush1.msra.mxu0 0.0
    %2794 = vmatprep.subr.mxu0 0.0
    %2795 = vmatpush1.msra.mxu0 0.0
    %2796 = vmatprep.subr.mxu0 0.0
    %2797 = vmatpush1.msra.mxu0 0.0
    %2798 = vmatprep.subr.mxu0 0.0
    %2799 = vmatpush1.msra.mxu0 0.0
    %2800 = vmatprep.subr.mxu0 0.0
    %2801 = vmatpush1.msra.mxu0 0.0
    %2802 = vmatprep.subr.mxu0 0.0
    %2803 = vmatpush1.msra.mxu0 0.0
    %2804 = vmatprep.subr.mxu0 0.0
    %2805 = vmatpush1.msra.mxu0 0.0
    %2806 = vmatprep.subr.mxu0 0.0
    %2807 = vmatpush1.msra.mxu0 0.0
    %2808 = vmatprep.subr.mxu0 0.0
    %2809 = vmatpush1.msra.mxu0 0.0
    %2810 = vmatprep.subr.mxu0 0.0
    %2811 = vmatpush1.msra.mxu0 0.0
    %2812 = vmatprep.mubr.f32.mxu0 0.0
    %2813 = vmatmul.mubr.f32.gmra.mrb[0].mxu0 %v1913
    %v2814 = vpop.f32.mrb[0].mxu0
    %v2815 = vadd.f32 %v2721, %v2814
    %v2816 = vpop.f32.mrb[0].mxu0
    %v2817 = vadd.f32 %v2725, %v2816
    %2818 = vdwg.mxu0
    %2819 = vmatprep.subr.mxu0 %v2623
    %2820 = vmatpush1.msra.mxu0 %v2622
    %2821 = vmatprep.subr.mxu0 %v2629
    %2822 = vmatpush1.msra.mxu0 %v2628
    %2823 = vmatprep.subr.mxu0 %v2635
    %2824 = vmatpush1.msra.mxu0 %v2634
    %2825 = vmatprep.subr.mxu0 %v2641
    %2826 = vmatpush1.msra.mxu0 %v2640
    %2827 = vmatprep.subr.mxu0 %v2647
    %2828 = vmatpush1.msra.mxu0 %v2646
    %2829 = vmatprep.subr.mxu0 %v2653
    %2830 = vmatpush1.msra.mxu0 %v2652
    %2831 = vmatprep.subr.mxu0 %v2659
    %2832 = vmatpush1.msra.mxu0 %v2658
    %2833 = vmatprep.subr.mxu0 %v2665
    %2834 = vmatpush1.msra.mxu0 %v2664
    %2835 = vmatprep.subr.mxu0 %v2671
    %2836 = vmatpush1.msra.mxu0 %v2670
    %2837 = vmatprep.subr.mxu0 %v2677
    %2838 = vmatpush1.msra.mxu0 %v2676
    %2839 = vmatprep.subr.mxu0 %v2683
    %2840 = vmatpush1.msra.mxu0 %v2682
    %2841 = vmatprep.subr.mxu0 %v2689
    %2842 = vmatpush1.msra.mxu0 %v2688
    %2843 = vmatprep.subr.mxu0 %v2695
    %2844 = vmatpush1.msra.mxu0 %v2694
    %2845 = vmatprep.subr.mxu0 %v2701
    %2846 = vmatpush1.msra.mxu0 %v2700
    %2847 = vmatprep.subr.mxu0 %v2707
    %2848 = vmatpush1.msra.mxu0 %v2706
    %2849 = vmatprep.subr.mxu0 %v2713
    %2850 = vmatpush1.msra.mxu0 %v2712
    %2851 = vmatprep.subr.mxu0 0.0
    %2852 = vmatpush1.msra.mxu0 0.0
    %2853 = vmatprep.subr.mxu0 0.0
    %2854 = vmatpush1.msra.mxu0 0.0
    %2855 = vmatprep.subr.mxu0 0.0
    %2856 = vmatpush1.msra.mxu0 0.0
    %2857 = vmatprep.subr.mxu0 0.0
    %2858 = vmatpush1.msra.mxu0 0.0
    %2859 = vmatprep.subr.mxu0 0.0
    %2860 = vmatpush1.msra.mxu0 0.0
    %2861 = vmatprep.subr.mxu0 0.0
    %2862 = vmatpush1.msra.mxu0 0.0
    %2863 = vmatprep.subr.mxu0 0.0
    %2864 = vmatpush1.msra.mxu0 0.0
    %2865 = vmatprep.subr.mxu0 0.0
    %2866 = vmatpush1.msra.mxu0 0.0
    %2867 = vmatprep.subr.mxu0 0.0
    %2868 = vmatpush1.msra.mxu0 0.0
    %2869 = vmatprep.subr.mxu0 0.0
    %2870 = vmatpush1.msra.mxu0 0.0
    %2871 = vmatprep.subr.mxu0 0.0
    %2872 = vmatpush1.msra.mxu0 0.0
    %2873 = vmatprep.subr.mxu0 0.0
    %2874 = vmatpush1.msra.mxu0 0.0
    %2875 = vmatprep.subr.mxu0 0.0
    %2876 = vmatpush1.msra.mxu0 0.0
    %2877 = vmatprep.subr.mxu0 0.0
    %2878 = vmatpush1.msra.mxu0 0.0
    %2879 = vmatprep.subr.mxu0 0.0
    %2880 = vmatpush1.msra.mxu0 0.0
    %2881 = vmatprep.subr.mxu0 0.0
    %2882 = vmatpush1.msra.mxu0 0.0
    %2883 = vmatprep.mubr.f32.mxu0 0.0
    %2884 = vmatmul.mubr.f32.gmra.mrb[0].mxu0 %v1913
    %v2885 = vpop.f32.mrb[0].mxu0
    %v2886 = vadd.f32 %v2729, %v2885
    %v2887 = vpop.f32.mrb[0].mxu0
    %v2888 = vadd.f32 %v2733, %v2887
    %2889 = vdwg.mxu0
    %2890 = vmatprep.subr.mxu0 %v2625
    %2891 = vmatpush1.msra.mxu0 %v2624
    %2892 = vmatprep.subr.mxu0 %v2631
    %2893 = vmatpush1.msra.mxu0 %v2630
    %2894 = vmatprep.subr.mxu0 %v2637
    %2895 = vmatpush1.msra.mxu0 %v2636
    %2896 = vmatprep.subr.mxu0 %v2643
    %2897 = vmatpush1.msra.mxu0 %v2642
    %2898 = vmatprep.subr.mxu0 %v2649
    %2899 = vmatpush1.msra.mxu0 %v2648
    %2900 = vmatprep.subr.mxu0 %v2655
    %2901 = vmatpush1.msra.mxu0 %v2654
    %2902 = vmatprep.subr.mxu0 %v2661
    %2903 = vmatpush1.msra.mxu0 %v2660
    %2904 = vmatprep.subr.mxu0 %v2667
    %2905 = vmatpush1.msra.mxu0 %v2666
    %2906 = vmatprep.subr.mxu0 %v2673
    %2907 = vmatpush1.msra.mxu0 %v2672
    %2908 = vmatprep.subr.mxu0 %v2679
    %2909 = vmatpush1.msra.mxu0 %v2678
    %2910 = vmatprep.subr.mxu0 %v2685
    %2911 = vmatpush1.msra.mxu0 %v2684
    %2912 = vmatprep.subr.mxu0 %v2691
    %2913 = vmatpush1.msra.mxu0 %v2690
    %2914 = vmatprep.subr.mxu0 %v2697
    %2915 = vmatpush1.msra.mxu0 %v2696
    %2916 = vmatprep.subr.mxu0 %v2703
    %2917 = vmatpush1.msra.mxu0 %v2702
    %2918 = vmatprep.subr.mxu0 %v2709
    %2919 = vmatpush1.msra.mxu0 %v2708
    %2920 = vmatprep.subr.mxu0 %v2715
    %2921 = vmatpush1.msra.mxu0 %v2714
    %2922 = vmatprep.subr.mxu0 0.0
    %2923 = vmatpush1.msra.mxu0 0.0
    %2924 = vmatprep.subr.mxu0 0.0
    %2925 = vmatpush1.msra.mxu0 0.0
    %2926 = vmatprep.subr.mxu0 0.0
    %2927 = vmatpush1.msra.mxu0 0.0
    %2928 = vmatprep.subr.mxu0 0.0
    %2929 = vmatpush1.msra.mxu0 0.0
    %2930 = vmatprep.subr.mxu0 0.0
    %2931 = vmatpush1.msra.mxu0 0.0
    %2932 = vmatprep.subr.mxu0 0.0
    %2933 = vmatpush1.msra.mxu0 0.0
    %2934 = vmatprep.subr.mxu0 0.0
    %2935 = vmatpush1.msra.mxu0 0.0
    %2936 = vmatprep.subr.mxu0 0.0
    %2937 = vmatpush1.msra.mxu0 0.0
    %2938 = vmatprep.subr.mxu0 0.0
    %2939 = vmatpush1.msra.mxu0 0.0
    %2940 = vmatprep.subr.mxu0 0.0
    %2941 = vmatpush1.msra.mxu0 0.0
    %2942 = vmatprep.subr.mxu0 0.0
    %2943 = vmatpush1.msra.mxu0 0.0
    %2944 = vmatprep.subr.mxu0 0.0
    %2945 = vmatpush1.msra.mxu0 0.0
    %2946 = vmatprep.subr.mxu0 0.0
    %2947 = vmatpush1.msra.mxu0 0.0
    %2948 = vmatprep.subr.mxu0 0.0
    %2949 = vmatpush1.msra.mxu0 0.0
    %2950 = vmatprep.subr.mxu0 0.0
    %2951 = vmatpush1.msra.mxu0 0.0
    %2952 = vmatprep.subr.mxu0 0.0
    %2953 = vmatpush1.msra.mxu0 0.0
    %2954 = vmatprep.mubr.f32.mxu0 0.0
    %2955 = vmatmul.mubr.f32.gmra.mrb[0].mxu0 %v1913
    %v2956 = vpop.f32.mrb[0].mxu0
    %v2957 = vadd.f32 %v2737, %v2956
    %v2958 = vpop.f32.mrb[0].mxu0
    %v2959 = vadd.f32 %v2741, %v2958
    %2960 = vdwg.mxu0
    %v2961 = vtanh.pop %v2815
    %v2962 = vtanh.pop %v2817
    %v2963 = vtanh.pop %v2886
    %v2964 = vtanh.pop %v2888
    %v2965 = vtanh.pop %v2957
    %v2966 = vtanh.pop %v2959
    %2967 = vst [vmem:[#allocation14 + $0x60] sm:$0xff] %v2961
    %2968 = vst [vmem:[#allocation14 + $0x68] sm:$0xff] %v2962
    %2969 = vst [vmem:[#allocation14 + $0x70] sm:$0xff] %v2963
    %2970 = vst [vmem:[#allocation14 + $0x78] sm:$0xff] %v2964
    %2971 = vst [vmem:[#allocation14 + $0x80] sm:$0xff] %v2965
    %2972 = vst [vmem:[#allocation14 + $0x88] sm:$0xff] %v2966
    %v2973 = vld [vmem:[#allocation11 + $0x90] sm:$0xff]
    %v2974 = vld [vmem:[#allocation11 + $0x98] sm:$0xff]
    %v2975 = vld [vmem:[#allocation11 + $0xa0] sm:$0xff]
    %v2976 = vld [vmem:[#allocation11 + $0xa8] sm:$0xff]
    %v2977 = vld [vmem:[#allocation11 + $0xb0] sm:$0xff]
    %v2978 = vld [vmem:[#allocation11 + $0xb8] sm:$0xff]
    %v2979 = vld [vmem:[#allocation11 + $0x150] sm:$0xff]
    %v2980 = vld [vmem:[#allocation11 + $0x158] sm:$0xff]
    %v2981 = vld [vmem:[#allocation11 + $0x160] sm:$0xff]
    %v2982 = vld [vmem:[#allocation11 + $0x168] sm:$0xff]
    %v2983 = vld [vmem:[#allocation11 + $0x170] sm:$0xff]
    %v2984 = vld [vmem:[#allocation11 + $0x178] sm:$0xff]
    %v2985 = vld [vmem:[#allocation11 + $0x210] sm:$0xff]
    %v2986 = vld [vmem:[#allocation11 + $0x218] sm:$0xff]
    %v2987 = vld [vmem:[#allocation11 + $0x220] sm:$0xff]
    %v2988 = vld [vmem:[#allocation11 + $0x228] sm:$0xff]
    %v2989 = vld [vmem:[#allocation11 + $0x230] sm:$0xff]
    %v2990 = vld [vmem:[#allocation11 + $0x238] sm:$0xff]
    %v2991 = vld [vmem:[#allocation11 + $0x2d0] sm:$0xff]
    %v2992 = vld [vmem:[#allocation11 + $0x2d8] sm:$0xff]
    %v2993 = vld [vmem:[#allocation11 + $0x2e0] sm:$0xff]
    %v2994 = vld [vmem:[#allocation11 + $0x2e8] sm:$0xff]
    %v2995 = vld [vmem:[#allocation11 + $0x2f0] sm:$0xff]
    %v2996 = vld [vmem:[#allocation11 + $0x2f8] sm:$0xff]
    %v2997 = vld [vmem:[#allocation11 + $0x390] sm:$0xff]
    %v2998 = vld [vmem:[#allocation11 + $0x398] sm:$0xff]
    %v2999 = vld [vmem:[#allocation11 + $0x3a0] sm:$0xff]
    %v3000 = vld [vmem:[#allocation11 + $0x3a8] sm:$0xff]
    %v3001 = vld [vmem:[#allocation11 + $0x3b0] sm:$0xff]
    %v3002 = vld [vmem:[#allocation11 + $0x3b8] sm:$0xff]
    %v3003 = vld [vmem:[#allocation11 + $0x450] sm:$0xff]
    %v3004 = vld [vmem:[#allocation11 + $0x458] sm:$0xff]
    %v3005 = vld [vmem:[#allocation11 + $0x460] sm:$0xff]
    %v3006 = vld [vmem:[#allocation11 + $0x468] sm:$0xff]
    %v3007 = vld [vmem:[#allocation11 + $0x470] sm:$0xff]
    %v3008 = vld [vmem:[#allocation11 + $0x478] sm:$0xff]
    %v3009 = vld [vmem:[#allocation11 + $0x510] sm:$0xff]
    %v3010 = vld [vmem:[#allocation11 + $0x518] sm:$0xff]
    %v3011 = vld [vmem:[#allocation11 + $0x520] sm:$0xff]
    %v3012 = vld [vmem:[#allocation11 + $0x528] sm:$0xff]
    %v3013 = vld [vmem:[#allocation11 + $0x530] sm:$0xff]
    %v3014 = vld [vmem:[#allocation11 + $0x538] sm:$0xff]
    %v3015 = vld [vmem:[#allocation11 + $0x5d0] sm:$0xff]
    %v3016 = vld [vmem:[#allocation11 + $0x5d8] sm:$0xff]
    %v3017 = vld [vmem:[#allocation11 + $0x5e0] sm:$0xff]
    %v3018 = vld [vmem:[#allocation11 + $0x5e8] sm:$0xff]
    %v3019 = vld [vmem:[#allocation11 + $0x5f0] sm:$0xff]
    %v3020 = vld [vmem:[#allocation11 + $0x5f8] sm:$0xff]
    %v3021 = vld [vmem:[#allocation11 + $0x690] sm:$0xff]
    %v3022 = vld [vmem:[#allocation11 + $0x698] sm:$0xff]
    %v3023 = vld [vmem:[#allocation11 + $0x6a0] sm:$0xff]
    %v3024 = vld [vmem:[#allocation11 + $0x6a8] sm:$0xff]
    %v3025 = vld [vmem:[#allocation11 + $0x6b0] sm:$0xff]
    %v3026 = vld [vmem:[#allocation11 + $0x6b8] sm:$0xff]
    %v3027 = vld [vmem:[#allocation11 + $0x750] sm:$0xff]
    %v3028 = vld [vmem:[#allocation11 + $0x758] sm:$0xff]
    %v3029 = vld [vmem:[#allocation11 + $0x760] sm:$0xff]
    %v3030 = vld [vmem:[#allocation11 + $0x768] sm:$0xff]
    %v3031 = vld [vmem:[#allocation11 + $0x770] sm:$0xff]
    %v3032 = vld [vmem:[#allocation11 + $0x778] sm:$0xff]
    %v3033 = vld [vmem:[#allocation11 + $0x810] sm:$0xff]
    %v3034 = vld [vmem:[#allocation11 + $0x818] sm:$0xff]
    %v3035 = vld [vmem:[#allocation11 + $0x820] sm:$0xff]
    %v3036 = vld [vmem:[#allocation11 + $0x828] sm:$0xff]
    %v3037 = vld [vmem:[#allocation11 + $0x830] sm:$0xff]
    %v3038 = vld [vmem:[#allocation11 + $0x838] sm:$0xff]
    %v3039 = vld [vmem:[#allocation11 + $0x8d0] sm:$0xff]
    %v3040 = vld [vmem:[#allocation11 + $0x8d8] sm:$0xff]
    %v3041 = vld [vmem:[#allocation11 + $0x8e0] sm:$0xff]
    %v3042 = vld [vmem:[#allocation11 + $0x8e8] sm:$0xff]
    %v3043 = vld [vmem:[#allocation11 + $0x8f0] sm:$0xff]
    %v3044 = vld [vmem:[#allocation11 + $0x8f8] sm:$0xff]
    %v3045 = vld [vmem:[#allocation11 + $0x990] sm:$0xff]
    %v3046 = vld [vmem:[#allocation11 + $0x998] sm:$0xff]
    %v3047 = vld [vmem:[#allocation11 + $0x9a0] sm:$0xff]
    %v3048 = vld [vmem:[#allocation11 + $0x9a8] sm:$0xff]
    %v3049 = vld [vmem:[#allocation11 + $0x9b0] sm:$0xff]
    %v3050 = vld [vmem:[#allocation11 + $0x9b8] sm:$0xff]
    %v3051 = vld [vmem:[#allocation11 + $0xa50] sm:$0xff]
    %v3052 = vld [vmem:[#allocation11 + $0xa58] sm:$0xff]
    %v3053 = vld [vmem:[#allocation11 + $0xa60] sm:$0xff]
    %v3054 = vld [vmem:[#allocation11 + $0xa68] sm:$0xff]
    %v3055 = vld [vmem:[#allocation11 + $0xa70] sm:$0xff]
    %v3056 = vld [vmem:[#allocation11 + $0xa78] sm:$0xff]
    %v3057 = vld [vmem:[#allocation11 + $0xb10] sm:$0xff]
    %v3058 = vld [vmem:[#allocation11 + $0xb18] sm:$0xff]
    %v3059 = vld [vmem:[#allocation11 + $0xb20] sm:$0xff]
    %v3060 = vld [vmem:[#allocation11 + $0xb28] sm:$0xff]
    %v3061 = vld [vmem:[#allocation11 + $0xb30] sm:$0xff]
    %v3062 = vld [vmem:[#allocation11 + $0xb38] sm:$0xff]
    %v3063 = vld [vmem:[#allocation11 + $0xbd0] sm:$0xff]
    %v3064 = vld [vmem:[#allocation11 + $0xbd8] sm:$0xff]
    %v3065 = vld [vmem:[#allocation11 + $0xbe0] sm:$0xff]
    %v3066 = vld [vmem:[#allocation11 + $0xbe8] sm:$0xff]
    %v3067 = vld [vmem:[#allocation11 + $0xbf0] sm:$0xff]
    %v3068 = vld [vmem:[#allocation11 + $0xbf8] sm:$0xff]
    %v3069 = vld [vmem:[#allocation13 + $0x19] sm:$0x3f]
    %v3071 = vlaneseq
    %v3072 = vshrl.u32 %v3071, 7
    %v3073 = vsub.s32 0, %v3072
    %v3074 = vrot.slane %v3069, %v3073
    %v3075 = vlaneseq
    %v3076 = vshrl.u32 %v3075, 7
    %v3077 = vsub.s32 1, %v3076
    %v3078 = vrot.slane %v3069, %v3077
    %v3079 = vlaneseq
    %v3080 = vshrl.u32 %v3079, 7
    %v3081 = vsub.s32 2, %v3080
    %v3082 = vrot.slane %v3069, %v3081
    %v3083 = vlaneseq
    %v3084 = vshrl.u32 %v3083, 7
    %v3085 = vsub.s32 3, %v3084
    %v3086 = vrot.slane %v3069, %v3085
    %v3087 = vlaneseq
    %v3088 = vshrl.u32 %v3087, 7
    %v3089 = vsub.s32 4, %v3088
    %v3090 = vrot.slane %v3069, %v3089
    %v3091 = vlaneseq
    %v3092 = vshrl.u32 %v3091, 7
    %v3093 = vsub.s32 5, %v3092
    %v3094 = vrot.slane %v3069, %v3093
    %3101 = vmatprep.subr.mxu0 %v2974
    %3102 = vmatpush1.msra.mxu0 %v2973
    %3103 = vmatprep.subr.mxu0 %v2980
    %3104 = vmatpush1.msra.mxu0 %v2979
    %3105 = vmatprep.subr.mxu0 %v2986
    %3106 = vmatpush1.msra.mxu0 %v2985
    %3107 = vmatprep.subr.mxu0 %v2992
    %3108 = vmatpush1.msra.mxu0 %v2991
    %3109 = vmatprep.subr.mxu0 %v2998
    %3110 = vmatpush1.msra.mxu0 %v2997
    %3111 = vmatprep.subr.mxu0 %v3004
    %3112 = vmatpush1.msra.mxu0 %v3003
    %3113 = vmatprep.subr.mxu0 %v3010
    %3114 = vmatpush1.msra.mxu0 %v3009
    %3115 = vmatprep.subr.mxu0 %v3016
    %3116 = vmatpush1.msra.mxu0 %v3015
    %3117 = vmatprep.subr.mxu0 %v3022
    %3118 = vmatpush1.msra.mxu0 %v3021
    %3119 = vmatprep.subr.mxu0 %v3028
    %3120 = vmatpush1.msra.mxu0 %v3027
    %3121 = vmatprep.subr.mxu0 %v3034
    %3122 = vmatpush1.msra.mxu0 %v3033
    %3123 = vmatprep.subr.mxu0 %v3040
    %3124 = vmatpush1.msra.mxu0 %v3039
    %3125 = vmatprep.subr.mxu0 %v3046
    %3126 = vmatpush1.msra.mxu0 %v3045
    %3127 = vmatprep.subr.mxu0 %v3052
    %3128 = vmatpush1.msra.mxu0 %v3051
    %3129 = vmatprep.subr.mxu0 %v3058
    %3130 = vmatpush1.msra.mxu0 %v3057
    %3131 = vmatprep.subr.mxu0 %v3064
    %3132 = vmatpush1.msra.mxu0 %v3063
    %3133 = vmatprep.subr.mxu0 0.0
    %3134 = vmatpush1.msra.mxu0 0.0
    %3135 = vmatprep.subr.mxu0 0.0
    %3136 = vmatpush1.msra.mxu0 0.0
    %3137 = vmatprep.subr.mxu0 0.0
    %3138 = vmatpush1.msra.mxu0 0.0
    %3139 = vmatprep.subr.mxu0 0.0
    %3140 = vmatpush1.msra.mxu0 0.0
    %3141 = vmatprep.subr.mxu0 0.0
    %3142 = vmatpush1.msra.mxu0 0.0
    %3143 = vmatprep.subr.mxu0 0.0
    %3144 = vmatpush1.msra.mxu0 0.0
    %3145 = vmatprep.subr.mxu0 0.0
    %3146 = vmatpush1.msra.mxu0 0.0
    %3147 = vmatprep.subr.mxu0 0.0
    %3148 = vmatpush1.msra.mxu0 0.0
    %3149 = vmatprep.subr.mxu0 0.0
    %3150 = vmatpush1.msra.mxu0 0.0
    %3151 = vmatprep.subr.mxu0 0.0
    %3152 = vmatpush1.msra.mxu0 0.0
    %3153 = vmatprep.subr.mxu0 0.0
    %3154 = vmatpush1.msra.mxu0 0.0
    %3155 = vmatprep.subr.mxu0 0.0
    %3156 = vmatpush1.msra.mxu0 0.0
    %3157 = vmatprep.subr.mxu0 0.0
    %3158 = vmatpush1.msra.mxu0 0.0
    %3159 = vmatprep.subr.mxu0 0.0
    %3160 = vmatpush1.msra.mxu0 0.0
    %3161 = vmatprep.subr.mxu0 0.0
    %3162 = vmatpush1.msra.mxu0 0.0
    %3163 = vmatprep.subr.mxu0 0.0
    %3164 = vmatpush1.msra.mxu0 0.0
    %3165 = vmatprep.mubr.f32.mxu0 0.0
    %3166 = vmatmul.mubr.f32.gmra.mrb[0].mxu0 %v1913
    %v3167 = vpop.f32.mrb[0].mxu0
    %v3168 = vadd.f32 %v3074, %v3167
    %v3169 = vpop.f32.mrb[0].mxu0
    %v3170 = vadd.f32 %v3078, %v3169
    %3171 = vdwg.mxu0
    %3172 = vmatprep.subr.mxu0 %v2976
    %3173 = vmatpush1.msra.mxu0 %v2975
    %3174 = vmatprep.subr.mxu0 %v2982
    %3175 = vmatpush1.msra.mxu0 %v2981
    %3176 = vmatprep.subr.mxu0 %v2988
    %3177 = vmatpush1.msra.mxu0 %v2987
    %3178 = vmatprep.subr.mxu0 %v2994
    %3179 = vmatpush1.msra.mxu0 %v2993
    %3180 = vmatprep.subr.mxu0 %v3000
    %3181 = vmatpush1.msra.mxu0 %v2999
    %3182 = vmatprep.subr.mxu0 %v3006
    %3183 = vmatpush1.msra.mxu0 %v3005
    %3184 = vmatprep.subr.mxu0 %v3012
    %3185 = vmatpush1.msra.mxu0 %v3011
    %3186 = vmatprep.subr.mxu0 %v3018
    %3187 = vmatpush1.msra.mxu0 %v3017
    %3188 = vmatprep.subr.mxu0 %v3024
    %3189 = vmatpush1.msra.mxu0 %v3023
    %3190 = vmatprep.subr.mxu0 %v3030
    %3191 = vmatpush1.msra.mxu0 %v3029
    %3192 = vmatprep.subr.mxu0 %v3036
    %3193 = vmatpush1.msra.mxu0 %v3035
    %3194 = vmatprep.subr.mxu0 %v3042
    %3195 = vmatpush1.msra.mxu0 %v3041
    %3196 = vmatprep.subr.mxu0 %v3048
    %3197 = vmatpush1.msra.mxu0 %v3047
    %3198 = vmatprep.subr.mxu0 %v3054
    %3199 = vmatpush1.msra.mxu0 %v3053
    %3200 = vmatprep.subr.mxu0 %v3060
    %3201 = vmatpush1.msra.mxu0 %v3059
    %3202 = vmatprep.subr.mxu0 %v3066
    %3203 = vmatpush1.msra.mxu0 %v3065
    %3204 = vmatprep.subr.mxu0 0.0
    %3205 = vmatpush1.msra.mxu0 0.0
    %3206 = vmatprep.subr.mxu0 0.0
    %3207 = vmatpush1.msra.mxu0 0.0
    %3208 = vmatprep.subr.mxu0 0.0
    %3209 = vmatpush1.msra.mxu0 0.0
    %3210 = vmatprep.subr.mxu0 0.0
    %3211 = vmatpush1.msra.mxu0 0.0
    %3212 = vmatprep.subr.mxu0 0.0
    %3213 = vmatpush1.msra.mxu0 0.0
    %3214 = vmatprep.subr.mxu0 0.0
    %3215 = vmatpush1.msra.mxu0 0.0
    %3216 = vmatprep.subr.mxu0 0.0
    %3217 = vmatpush1.msra.mxu0 0.0
    %3218 = vmatprep.subr.mxu0 0.0
    %3219 = vmatpush1.msra.mxu0 0.0
    %3220 = vmatprep.subr.mxu0 0.0
    %3221 = vmatpush1.msra.mxu0 0.0
    %3222 = vmatprep.subr.mxu0 0.0
    %3223 = vmatpush1.msra.mxu0 0.0
    %3224 = vmatprep.subr.mxu0 0.0
    %3225 = vmatpush1.msra.mxu0 0.0
    %3226 = vmatprep.subr.mxu0 0.0
    %3227 = vmatpush1.msra.mxu0 0.0
    %3228 = vmatprep.subr.mxu0 0.0
    %3229 = vmatpush1.msra.mxu0 0.0
    %3230 = vmatprep.subr.mxu0 0.0
    %3231 = vmatpush1.msra.mxu0 0.0
    %3232 = vmatprep.subr.mxu0 0.0
    %3233 = vmatpush1.msra.mxu0 0.0
    %3234 = vmatprep.subr.mxu0 0.0
    %3235 = vmatpush1.msra.mxu0 0.0
    %3236 = vmatprep.mubr.f32.mxu0 0.0
    %3237 = vmatmul.mubr.f32.gmra.mrb[0].mxu0 %v1913
    %v3238 = vpop.f32.mrb[0].mxu0
    %v3239 = vadd.f32 %v3082, %v3238
    %v3240 = vpop.f32.mrb[0].mxu0
    %v3241 = vadd.f32 %v3086, %v3240
    %3242 = vdwg.mxu0
    %3243 = vmatprep.subr.mxu0 %v2978
    %3244 = vmatpush1.msra.mxu0 %v2977
    %3245 = vmatprep.subr.mxu0 %v2984
    %3246 = vmatpush1.msra.mxu0 %v2983
    %3247 = vmatprep.subr.mxu0 %v2990
    %3248 = vmatpush1.msra.mxu0 %v2989
    %3249 = vmatprep.subr.mxu0 %v2996
    %3250 = vmatpush1.msra.mxu0 %v2995
    %3251 = vmatprep.subr.mxu0 %v3002
    %3252 = vmatpush1.msra.mxu0 %v3001
    %3253 = vmatprep.subr.mxu0 %v3008
    %3254 = vmatpush1.msra.mxu0 %v3007
    %3255 = vmatprep.subr.mxu0 %v3014
    %3256 = vmatpush1.msra.mxu0 %v3013
    %3257 = vmatprep.subr.mxu0 %v3020
    %3258 = vmatpush1.msra.mxu0 %v3019
    %3259 = vmatprep.subr.mxu0 %v3026
    %3260 = vmatpush1.msra.mxu0 %v3025
    %3261 = vmatprep.subr.mxu0 %v3032
    %3262 = vmatpush1.msra.mxu0 %v3031
    %3263 = vmatprep.subr.mxu0 %v3038
    %3264 = vmatpush1.msra.mxu0 %v3037
    %3265 = vmatprep.subr.mxu0 %v3044
    %3266 = vmatpush1.msra.mxu0 %v3043
    %3267 = vmatprep.subr.mxu0 %v3050
    %3268 = vmatpush1.msra.mxu0 %v3049
    %3269 = vmatprep.subr.mxu0 %v3056
    %3270 = vmatpush1.msra.mxu0 %v3055
    %3271 = vmatprep.subr.mxu0 %v3062
    %3272 = vmatpush1.msra.mxu0 %v3061
    %3273 = vmatprep.subr.mxu0 %v3068
    %3274 = vmatpush1.msra.mxu0 %v3067
    %3275 = vmatprep.subr.mxu0 0.0
    %3276 = vmatpush1.msra.mxu0 0.0
    %3277 = vmatprep.subr.mxu0 0.0
    %3278 = vmatpush1.msra.mxu0 0.0
    %3279 = vmatprep.subr.mxu0 0.0
    %3280 = vmatpush1.msra.mxu0 0.0
    %3281 = vmatprep.subr.mxu0 0.0
    %3282 = vmatpush1.msra.mxu0 0.0
    %3283 = vmatprep.subr.mxu0 0.0
    %3284 = vmatpush1.msra.mxu0 0.0
    %3285 = vmatprep.subr.mxu0 0.0
    %3286 = vmatpush1.msra.mxu0 0.0
    %3287 = vmatprep.subr.mxu0 0.0
    %3288 = vmatpush1.msra.mxu0 0.0
    %3289 = vmatprep.subr.mxu0 0.0
    %3290 = vmatpush1.msra.mxu0 0.0
    %3291 = vmatprep.subr.mxu0 0.0
    %3292 = vmatpush1.msra.mxu0 0.0
    %3293 = vmatprep.subr.mxu0 0.0
    %3294 = vmatpush1.msra.mxu0 0.0
    %3295 = vmatprep.subr.mxu0 0.0
    %3296 = vmatpush1.msra.mxu0 0.0
    %3297 = vmatprep.subr.mxu0 0.0
    %3298 = vmatpush1.msra.mxu0 0.0
    %3299 = vmatprep.subr.mxu0 0.0
    %3300 = vmatpush1.msra.mxu0 0.0
    %3301 = vmatprep.subr.mxu0 0.0
    %3302 = vmatpush1.msra.mxu0 0.0
    %3303 = vmatprep.subr.mxu0 0.0
    %3304 = vmatpush1.msra.mxu0 0.0
    %3305 = vmatprep.subr.mxu0 0.0
    %3306 = vmatpush1.msra.mxu0 0.0
    %3307 = vmatprep.mubr.f32.mxu0 0.0
    %3308 = vmatmul.mubr.f32.gmra.mrb[0].mxu0 %v1913
    %v3309 = vpop.f32.mrb[0].mxu0
    %v3310 = vadd.f32 %v3090, %v3309
    %v3311 = vpop.f32.mrb[0].mxu0
    %v3312 = vadd.f32 %v3094, %v3311
    %3313 = vdwg.mxu0
    %v3314 = vtanh.pop %v3168
    %v3315 = vtanh.pop %v3170
    %v3316 = vtanh.pop %v3239
    %v3317 = vtanh.pop %v3241
    %v3318 = vtanh.pop %v3310
    %v3319 = vtanh.pop %v3312
    %3320 = vst [vmem:[#allocation14 + $0x90] sm:$0xff] %v3314
    %3321 = vst [vmem:[#allocation14 + $0x98] sm:$0xff] %v3315
    %3322 = vst [vmem:[#allocation14 + $0xa0] sm:$0xff] %v3316
    %3323 = vst [vmem:[#allocation14 + $0xa8] sm:$0xff] %v3317
    %3324 = vst [vmem:[#allocation14 + $0xb0] sm:$0xff] %v3318
    %3325 = vst [vmem:[#allocation14 + $0xb8] sm:$0xff] %v3319
    // Predicated region
    $region70: #{tpu_custom_call.1} parent=1 // pred_check
      _
    $region71: #{tpu_custom_call.1} parent=1 // pred_check_branch
      %3327 = sbr.rel (0) target = $region73
    $region72: #{tpu_custom_call.1} parent=1 // pred_region
      %s3329 = ssub.s32 3072, 3072
      %3330 = vsyncadd [#allocation4], %s3329
      %s3332 = sshll.u32 [#allocation14], 4
      %s3333 = int_to_ptr.vmem [resolvable:$true] %s3332
      %3335 = dma.vmem_to_hbm [thread:$0]  %s3333, 3072, %s10, [#allocation4]
    $region73: #{tpu_custom_call.1} parent=1 // pred_fallthru
      _
    // Predicated region
    $region74: #{tpu_custom_call.1} parent=1 // pred_check
      _
    $region75: #{tpu_custom_call.1} parent=1 // pred_check_branch
      %3337 = sbr.rel (0) target = $region77
    $region76: #{tpu_custom_call.1} parent=1 // pred_region
      %3338 = dma.done [#allocation4], 3072
    $region77: #{tpu_custom_call.1} parent=1 // pred_fallthru
      _
    %3339 = vsyncpa [#allocation3], 1
    %3340 = vsyncpa [#allocation6], 1
    %3341 = vsyncpa [#allocation9], 1
    %3342 = vsyncpa [#allocation12], 1
    %3343 = vsyncpa [#allocation4], 1

</llo_original>
